<compile_context>
chip_gen: v5e
topology: v5e:2x2
jax: 0.10.0
libtpu: 0.0.40
codegen_flags: <defaults>
</compile_context>

<pallas_src>
import functools
import numpy as np
import jax
import jax.numpy as jnp
from jax.experimental import pallas as pl
from jax.experimental.pallas import tpu as pltpu


# -------------------------- host-side linear operators --------------------------

def _pool_matrix(out_size, in_size):
    """AdaptiveAvgPool1d-style matrix, PyTorch index semantics."""
    P = np.zeros((out_size, in_size), np.float32)
    for i in range(out_size):
        s = (i * in_size) // out_size
        e = -((-(i + 1) * in_size) // out_size)  # ceil((i+1)*in/out)
        P[i, s:e] = 1.0 / float(e - s)
    return P


def _upsample_matrix(out_size, in_size):
    """Bilinear (1-D) interpolation matrix with align_corners=True."""
    U = np.zeros((out_size, in_size), np.float32)
    if in_size == 1:
        U[:, 0] = 1.0
        return U
    # NOTE: out_size == 1 would divide by zero; not hit by this module's usage.
    for i in range(out_size):
        src = i * (in_size - 1) / (out_size - 1)
        i0 = min(int(np.floor(src)), in_size - 1)
        i1 = min(i0 + 1, in_size - 1)
        frac = src - i0
        U[i, i0] += 1.0 - frac
        U[i, i1] += frac
    return U


# -------------------------------- Pallas kernel --------------------------------

def _psp_fused_kernel(x_ref, p2_ref, w1_ref, s_scale_ref, s_shift_ref, u_ref,
                      w3_ref, b_scale_ref, b_shift_ref, o_ref, pad_ref,
                      *, H, W, S, BB, Cout):
    # x_ref:          (1, H*W, C)        bf16  input features (NHWC, spatially flat)
    # p2_ref:         (S*BB, H*W)        bf16  stacked adaptive-avg-pool operators
    #                                          (rows beyond b*b per stage are zero)
    # w1_ref:         (S, C, Cout)       bf16  per-stage 1x1 conv weights
    # s_scale/shift:  (S, Cout)          f32   folded eval-mode BatchNorm per stage
    # u_ref:          (S, H*W, BB)       bf16  stacked bilinear (align_corners=True)
    #                                          upsample operators (cols >= b*b zero)
    # w3_ref:         (9, Ct, Cout)      bf16  3x3 conv weights (tap = 3*kh + kw)
    # b_scale/shift:  (1, Cout)          f32   folded eval-mode BatchNorm (bottleneck)
    # o_ref:          (1, H, W, Cout)    f32   module output (NHWC)
    # pad_ref:        ((H+3)*(W+2), Ct)  bf16  VMEM scratch: zero-halo'd concat slab
    Wp = W + 2
    x = x_ref[0]                                                        # (HW, C) bf16

    # All bins pooled in ONE MXU call: (S*BB, HW) @ (HW, C) -> f32 acc.
    pooled = jnp.dot(p2_ref[...], x,
                     preferred_element_type=jnp.float32).astype(jnp.bfloat16)

    sc = s_scale_ref[...]                                               # (S, Cout) f32
    sh = s_shift_ref[...]

    parts = [x]                                                         # identity branch
    for s in range(S):                                                  # static unroll
        ps = pooled[s * BB:(s + 1) * BB]                                # (BB, C)
        ys = jnp.dot(ps, w1_ref[s], preferred_element_type=jnp.float32)  # 1x1 conv
        ys = jnp.maximum(ys * sc[s:s + 1, :] + sh[s:s + 1, :], 0.0)     # BN + ReLU (f32)
        up = jnp.dot(u_ref[s], ys.astype(jnp.bfloat16),
                     preferred_element_type=jnp.float32)                # (HW, Cout)
        parts.append(up.astype(jnp.bfloat16))

    slab = jnp.concatenate(parts, axis=-1)                              # (HW, C+S*Cout)

    # Zero-halo'd, row-major-flattened padded slab in VMEM scratch (never hits HBM):
    # 1 top pad row, 1 left/right pad col, 2 bottom pad rows (the extra row keeps
    # every flat tap slice below in bounds).
    pad_ref[...] = jnp.zeros(pad_ref.shape, pad_ref.dtype)
    for r in range(H):                                                  # static unroll
        dst = (r + 1) * Wp + 1
        pad_ref[dst:dst + W, :] = slab[r * W:(r + 1) * W, :]

    # Bottleneck 3x3 conv: 9 taps, each a *contiguous* static slice of the flat
    # padded slab -> plain (H*Wp, Ct) @ (Ct, Cout) MXU matmul per tap.
    # Wrap-around columns only pollute the 2 discarded output columns per row.
    acc = jnp.zeros((H * Wp, Cout), jnp.float32)
    for kh in range(3):
        for kw in range(3):
            off = kh * Wp + kw
            patch = pad_ref[off:off + H * Wp, :]
            acc = acc + jnp.dot(patch, w3_ref[3 * kh + kw],
                                preferred_element_type=jnp.float32)

    y = jnp.maximum(acc * b_scale_ref[...] + b_shift_ref[...], 0.0)     # BN + ReLU (f32)
    # TODO(synk): Dropout2d(0.1) is identity in eval mode; training-mode dropout omitted.
    y = y.reshape(H, Wp, Cout)[:, :W, :]                                # drop wrap cols
    o_ref[0] = y.astype(o_ref.dtype)


# -------------------------------- parameter init --------------------------------

def init_psp_params(key, in_channels, bin_sizes):
    out_channels = in_channels // len(bin_sizes)
    eps = 1e-5
    keys = jax.random.split(key, len(bin_sizes) + 1)

    def bn_fold(cout, offset):
        gamma = 1.0 + 0.01 * (jnp.arange(cout, dtype=jnp.float32) + offset)
        beta = 0.02 * (jnp.arange(cout, dtype=jnp.float32) - offset)
        # eval-mode BN with running_mean=0, running_var=1
        scale = gamma / jnp.sqrt(1.0 + eps)
        shift = beta
        return scale, shift

    stages = []
    for i, _b in enumerate(bin_sizes):
        w = jax.random.normal(keys[i], (in_channels, out_channels), jnp.float32) * 0.1
        scale, shift = bn_fold(out_channels, float(i))
        stages.append(dict(w=w, scale=scale, shift=shift))

    ct = in_channels + out_channels * len(bin_sizes)
    w3 = jax.random.normal(keys[-1], (3, 3, ct, out_channels), jnp.float32) * 0.05
    scale, shift = bn_fold(out_channels, 10.0)
    return dict(stages=stages, bottleneck=dict(w=w3, scale=scale, shift=shift))


# -------------------------------- PSP forward --------------------------------

def psp_forward(features_nchw, params, bin_sizes):
    N, C, H, W = features_nchw.shape
    S = len(bin_sizes)
    Cout = C // S
    Ct = C + S * Cout
    HW = H * W
    BB = -(-max(b * b for b in bin_sizes) // 8) * 8   # max bin^2 rounded up to 8

    x = jnp.transpose(features_nchw, (0, 2, 3, 1)).reshape(N, HW, C)    # NCHW -> (N,HW,C)
    x = x.astype(jnp.bfloat16)

    # Deterministic host-built pool / upsample operators, stacked over stages.
    p2 = np.zeros((S * BB, HW), np.float32)
    u = np.zeros((S, HW, BB), np.float32)
    for s, b in enumerate(bin_sizes):
        p2[s * BB:s * BB + b * b] = np.kron(_pool_matrix(b, H), _pool_matrix(b, W))
        u[s, :, :b * b] = np.kron(_upsample_matrix(H, b), _upsample_matrix(W, b))
    p2 = jnp.asarray(p2, jnp.bfloat16)
    u = jnp.asarray(u, jnp.bfloat16)

    w1 = jnp.stack([sp["w"] for sp in params["stages"]]).astype(jnp.bfloat16)  # (S,C,Cout)
    s_scale = jnp.stack([sp["scale"] for sp in params["stages"]])              # (S,Cout) f32
    s_shift = jnp.stack([sp["shift"] for sp in params["stages"]])

    bp = params["bottleneck"]
    w3 = bp["w"].reshape(9, Ct, Cout).astype(jnp.bfloat16)                     # tap=3*kh+kw
    b_scale = bp["scale"].reshape(1, Cout)
    b_shift = bp["shift"].reshape(1, Cout)

    out = pl.pallas_call(
        functools.partial(_psp_fused_kernel, H=H, W=W, S=S, BB=BB, Cout=Cout),
        out_shape=jax.ShapeDtypeStruct((N, H, W, Cout), jnp.float32),
        grid=(N,),
        in_specs=[
            pl.BlockSpec((1, HW, C), lambda n: (n, 0, 0)),
            pl.BlockSpec((S * BB, HW), lambda n: (0, 0)),
            pl.BlockSpec((S, C, Cout), lambda n: (0, 0, 0)),
            pl.BlockSpec((S, Cout), lambda n: (0, 0)),
            pl.BlockSpec((S, Cout), lambda n: (0, 0)),
            pl.BlockSpec((S, HW, BB), lambda n: (0, 0, 0)),
            pl.BlockSpec((9, Ct, Cout), lambda n: (0, 0, 0)),
            pl.BlockSpec((1, Cout), lambda n: (0, 0)),
            pl.BlockSpec((1, Cout), lambda n: (0, 0)),
        ],
        out_specs=pl.BlockSpec((1, H, W, Cout), lambda n: (n, 0, 0, 0)),
        scratch_shapes=[pltpu.VMEM(((H + 3) * (W + 2), Ct), jnp.bfloat16)],
        compiler_params=pltpu.CompilerParams(
            dimension_semantics=("parallel",),
            vmem_limit_bytes=64 * 1024 * 1024),
    )(x, p2, w1, s_scale, s_shift, u, w3, b_scale, b_shift)

    return jnp.transpose(out, (0, 3, 1, 2))            # NHWC -> NCHW


# ------------------------------ numpy reference ------------------------------

def _bf16(a):
    """Round to bf16 then back (mirrors the kernel's bf16 operand rounding)."""
    return np.asarray(
        jnp.asarray(np.asarray(a), jnp.bfloat16).astype(jnp.float32)).astype(np.float64)


def psp_reference(features_nchw, params, bin_sizes):
    """Pure numpy (f64 accumulation) reference of the PyTorch module forward."""
    x = np.asarray(features_nchw, np.float64)
    N, C, H, W = x.shape
    S = len(bin_sizes)
    Cout = C // S
    HW = H * W
    xf = _bf16(np.transpose(x, (0, 2, 3, 1)).reshape(N, HW, C))
    parts = [xf]
    for s, b in enumerate(bin_sizes):
        P = _bf16(np.kron(_pool_matrix(b, H), _pool_matrix(b, W)))           # (b*b, HW)
        U = _bf16(np.kron(_upsample_matrix(H, b), _upsample_matrix(W, b)))   # (HW, b*b)
        w = _bf16(np.asarray(params["stages"][s]["w"]))                      # (C, Cout)
        sc = np.asarray(params["stages"][s]["scale"], np.float64)
        sh = np.asarray(params["stages"][s]["shift"], np.float64)
        pooled = _bf16(np.einsum("pi,nic->npc", P, xf))
        ys = _bf16(np.maximum(np.einsum("npc,co->npo", pooled, w) * sc + sh, 0.0))
        parts.append(_bf16(np.einsum("ip,npo->nio", U, ys)))
    slab = np.concatenate(parts, axis=-1).reshape(N, H, W, -1)
    Ct = slab.shape[-1]
    w3 = _bf16(np.asarray(params["bottleneck"]["w"]))                        # (3,3,Ct,Cout)
    bsc = np.asarray(params["bottleneck"]["scale"], np.float64)
    bsh = np.asarray(params["bottleneck"]["shift"], np.float64)
    pad = np.zeros((N, H + 2, W + 2, Ct))
    pad[:, 1:H + 1, 1:W + 1, :] = slab
    out = np.zeros((N, H, W, Cout))
    for kh in range(3):
        for kw in range(3):
            out += np.einsum("nhwc,co->nhwo",
                             pad[:, kh:kh + H, kw:kw + W, :], w3[kh, kw])
    out = np.maximum(out * bsc + bsh, 0.0)
    return np.transpose(out, (0, 3, 1, 2))


# ------------------------------------ main ------------------------------------

if __name__ == "__main__":
    key = jax.random.PRNGKey(0)
    kx, kp = jax.random.split(key)

    in_channels = 8
    bin_sizes = (1, 2, 3, 6)
    N, H, W = 2, 16, 16

    x = jax.random.normal(kx, (N, in_channels, H, W), jnp.float32)
    params = init_psp_params(kp, in_channels, bin_sizes)

    out = jax.block_until_ready(psp_forward(x, params, bin_sizes))

    assert out.shape == (N, in_channels // len(bin_sizes), H, W), out.shape
    assert bool(jnp.all(jnp.isfinite(out)))

    ref = psp_reference(np.asarray(x), params, bin_sizes)
    err = float(np.max(np.abs(np.asarray(out, np.float64) - ref)))
    assert err < 5e-2, f"max abs error vs reference: {err}"

    print("KERNEL_OK")
</pallas_src>

<mosaic_0001>
module attributes {stable_mosaic.version = 11 : i64} {
  func.func @_psp_fused_kernel(%arg0: i32, %arg1: memref<1x256x8xbf16, #tpu.memory_space<vmem>>, %arg2: memref<160x256xbf16, #tpu.memory_space<vmem>>, %arg3: memref<4x8x2xbf16, #tpu.memory_space<vmem>>, %arg4: memref<4x2xf32, #tpu.memory_space<vmem>>, %arg5: memref<4x2xf32, #tpu.memory_space<vmem>>, %arg6: memref<4x256x40xbf16, #tpu.memory_space<vmem>>, %arg7: memref<9x16x2xbf16, #tpu.memory_space<vmem>>, %arg8: memref<1x2xf32, #tpu.memory_space<vmem>>, %arg9: memref<1x2xf32, #tpu.memory_space<vmem>>, %arg10: memref<1x16x16x2xf32, #tpu.memory_space<vmem>>, %arg11: memref<342x16xbf16, #tpu.memory_space<vmem>>) attributes {dimension_semantics = [#tpu.dimension_semantics<parallel>], iteration_bounds = array<i64: 2>, scalar_prefetch = 0 : i64, scratch_operands = 1 : i64, tpu.core_type = #tpu.core_type<tc>, window_params = [{transform_indices = @transform_0, window_bounds = array<i64: 1, 256, 8>}, {pipeline_mode = #tpu.pipeline_mode<synchronous>, transform_indices = @transform_1, window_bounds = array<i64: 160, 256>}, {pipeline_mode = #tpu.pipeline_mode<synchronous>, transform_indices = @transform_2, window_bounds = array<i64: 4, 8, 2>}, {pipeline_mode = #tpu.pipeline_mode<synchronous>, transform_indices = @transform_3, window_bounds = array<i64: 4, 2>}, {pipeline_mode = #tpu.pipeline_mode<synchronous>, transform_indices = @transform_4, window_bounds = array<i64: 4, 2>}, {pipeline_mode = #tpu.pipeline_mode<synchronous>, transform_indices = @transform_5, window_bounds = array<i64: 4, 256, 40>}, {pipeline_mode = #tpu.pipeline_mode<synchronous>, transform_indices = @transform_6, window_bounds = array<i64: 9, 16, 2>}, {pipeline_mode = #tpu.pipeline_mode<synchronous>, transform_indices = @transform_7, window_bounds = array<i64: 1, 2>}, {pipeline_mode = #tpu.pipeline_mode<synchronous>, transform_indices = @transform_8, window_bounds = array<i64: 1, 2>}, {transform_indices = @transform_9, window_bounds = array<i64: 1, 16, 16, 2>}]} {
    %c0 = arith.constant 0 : index
    %c0_0 = arith.constant 0 : index
    %c0_1 = arith.constant 0 : index
    %0 = vector.load %arg1[%c0, %c0_0, %c0_1] : memref<1x256x8xbf16, #tpu.memory_space<vmem>>, vector<1x256x8xbf16>
    %1 = vector.shape_cast %0 : vector<1x256x8xbf16> to vector<256x8xbf16>
    %c0_2 = arith.constant 0 : index
    %c0_3 = arith.constant 0 : index
    %2 = vector.load %arg2[%c0_2, %c0_3] : memref<160x256xbf16, #tpu.memory_space<vmem>>, vector<160x256xbf16>
    %cst = arith.constant dense<0.000000e+00> : vector<160x8xf32>
    %3 = tpu.matmul %2, %1, %cst {dimension_numbers = #tpu.dot_dimension_numbers<[1], [0], [0], [1], [0, 0, 1, 1], [], []>} : vector<160x256xbf16>, vector<256x8xbf16>, vector<160x8xf32> -> vector<160x8xf32>
    %4 = arith.truncf %3 : vector<160x8xf32> to vector<160x8xbf16>
    %c0_4 = arith.constant 0 : index
    %c0_5 = arith.constant 0 : index
    %5 = vector.load %arg4[%c0_4, %c0_5] : memref<4x2xf32, #tpu.memory_space<vmem>>, vector<4x2xf32>
    %c0_6 = arith.constant 0 : index
    %c0_7 = arith.constant 0 : index
    %6 = vector.load %arg5[%c0_6, %c0_7] : memref<4x2xf32, #tpu.memory_space<vmem>>, vector<4x2xf32>
    %7 = vector.extract_strided_slice %4 {offsets = [0, 0], sizes = [40, 8], strides = [1, 1]} : vector<160x8xbf16> to vector<40x8xbf16>
    %c0_8 = arith.constant 0 : index
    %c0_9 = arith.constant 0 : index
    %c0_10 = arith.constant 0 : index
    %8 = vector.load %arg3[%c0_8, %c0_9, %c0_10] : memref<4x8x2xbf16, #tpu.memory_space<vmem>>, vector<1x8x2xbf16>
    %9 = vector.shape_cast %8 : vector<1x8x2xbf16> to vector<8x2xbf16>
    %cst_11 = arith.constant dense<0.000000e+00> : vector<40x2xf32>
    %10 = tpu.matmul %7, %9, %cst_11 {dimension_numbers = #tpu.dot_dimension_numbers<[1], [0], [0], [1], [0, 0, 1, 1], [], []>} : vector<40x8xbf16>, vector<8x2xbf16>, vector<40x2xf32> -> vector<40x2xf32>
    %11 = vector.extract_strided_slice %5 {offsets = [0, 0], sizes = [1, 2], strides = [1, 1]} : vector<4x2xf32> to vector<1x2xf32>
    %12 = vector.broadcast %11 : vector<1x2xf32> to vector<40x2xf32>
    %13 = arith.mulf %10, %12 : vector<40x2xf32>
    %14 = vector.extract_strided_slice %6 {offsets = [0, 0], sizes = [1, 2], strides = [1, 1]} : vector<4x2xf32> to vector<1x2xf32>
    %15 = vector.broadcast %14 : vector<1x2xf32> to vector<40x2xf32>
    %16 = arith.addf %13, %15 : vector<40x2xf32>
    %cst_12 = arith.constant 0.000000e+00 : f32
    %17 = vector.broadcast %cst_12 : f32 to vector<40x2xf32>
    %18 = arith.maximumf %16, %17 : vector<40x2xf32>
    %c0_13 = arith.constant 0 : index
    %c0_14 = arith.constant 0 : index
    %c0_15 = arith.constant 0 : index
    %19 = vector.load %arg6[%c0_13, %c0_14, %c0_15] : memref<4x256x40xbf16, #tpu.memory_space<vmem>>, vector<1x256x40xbf16>
    %20 = vector.shape_cast %19 : vector<1x256x40xbf16> to vector<256x40xbf16>
    %21 = arith.truncf %18 : vector<40x2xf32> to vector<40x2xbf16>
    %cst_16 = arith.constant dense<0.000000e+00> : vector<256x2xf32>
    %22 = tpu.matmul %20, %21, %cst_16 {dimension_numbers = #tpu.dot_dimension_numbers<[1], [0], [0], [1], [0, 0, 1, 1], [], []>} : vector<256x40xbf16>, vector<40x2xbf16>, vector<256x2xf32> -> vector<256x2xf32>
    %23 = arith.truncf %22 : vector<256x2xf32> to vector<256x2xbf16>
    %24 = vector.extract_strided_slice %4 {offsets = [40, 0], sizes = [40, 8], strides = [1, 1]} : vector<160x8xbf16> to vector<40x8xbf16>
    %c1 = arith.constant 1 : index
    %c0_17 = arith.constant 0 : index
    %c0_18 = arith.constant 0 : index
    %25 = vector.load %arg3[%c1, %c0_17, %c0_18] : memref<4x8x2xbf16, #tpu.memory_space<vmem>>, vector<1x8x2xbf16>
    %26 = vector.shape_cast %25 : vector<1x8x2xbf16> to vector<8x2xbf16>
    %cst_19 = arith.constant dense<0.000000e+00> : vector<40x2xf32>
    %27 = tpu.matmul %24, %26, %cst_19 {dimension_numbers = #tpu.dot_dimension_numbers<[1], [0], [0], [1], [0, 0, 1, 1], [], []>} : vector<40x8xbf16>, vector<8x2xbf16>, vector<40x2xf32> -> vector<40x2xf32>
    %28 = vector.extract_strided_slice %5 {offsets = [1, 0], sizes = [1, 2], strides = [1, 1]} : vector<4x2xf32> to vector<1x2xf32>
    %29 = vector.broadcast %28 : vector<1x2xf32> to vector<40x2xf32>
    %30 = arith.mulf %27, %29 : vector<40x2xf32>
    %31 = vector.extract_strided_slice %6 {offsets = [1, 0], sizes = [1, 2], strides = [1, 1]} : vector<4x2xf32> to vector<1x2xf32>
    %32 = vector.broadcast %31 : vector<1x2xf32> to vector<40x2xf32>
    %33 = arith.addf %30, %32 : vector<40x2xf32>
    %cst_20 = arith.constant 0.000000e+00 : f32
    %34 = vector.broadcast %cst_20 : f32 to vector<40x2xf32>
    %35 = arith.maximumf %33, %34 : vector<40x2xf32>
    %c1_21 = arith.constant 1 : index
    %c0_22 = arith.constant 0 : index
    %c0_23 = arith.constant 0 : index
    %36 = vector.load %arg6[%c1_21, %c0_22, %c0_23] : memref<4x256x40xbf16, #tpu.memory_space<vmem>>, vector<1x256x40xbf16>
    %37 = vector.shape_cast %36 : vector<1x256x40xbf16> to vector<256x40xbf16>
    %38 = arith.truncf %35 : vector<40x2xf32> to vector<40x2xbf16>
    %cst_24 = arith.constant dense<0.000000e+00> : vector<256x2xf32>
    %39 = tpu.matmul %37, %38, %cst_24 {dimension_numbers = #tpu.dot_dimension_numbers<[1], [0], [0], [1], [0, 0, 1, 1], [], []>} : vector<256x40xbf16>, vector<40x2xbf16>, vector<256x2xf32> -> vector<256x2xf32>
    %40 = arith.truncf %39 : vector<256x2xf32> to vector<256x2xbf16>
    %41 = vector.extract_strided_slice %4 {offsets = [80, 0], sizes = [40, 8], strides = [1, 1]} : vector<160x8xbf16> to vector<40x8xbf16>
    %c2 = arith.constant 2 : index
    %c0_25 = arith.constant 0 : index
    %c0_26 = arith.constant 0 : index
    %42 = vector.load %arg3[%c2, %c0_25, %c0_26] : memref<4x8x2xbf16, #tpu.memory_space<vmem>>, vector<1x8x2xbf16>
    %43 = vector.shape_cast %42 : vector<1x8x2xbf16> to vector<8x2xbf16>
    %cst_27 = arith.constant dense<0.000000e+00> : vector<40x2xf32>
    %44 = tpu.matmul %41, %43, %cst_27 {dimension_numbers = #tpu.dot_dimension_numbers<[1], [0], [0], [1], [0, 0, 1, 1], [], []>} : vector<40x8xbf16>, vector<8x2xbf16>, vector<40x2xf32> -> vector<40x2xf32>
    %45 = vector.extract_strided_slice %5 {offsets = [2, 0], sizes = [1, 2], strides = [1, 1]} : vector<4x2xf32> to vector<1x2xf32>
    %46 = vector.broadcast %45 : vector<1x2xf32> to vector<40x2xf32>
    %47 = arith.mulf %44, %46 : vector<40x2xf32>
    %48 = vector.extract_strided_slice %6 {offsets = [2, 0], sizes = [1, 2], strides = [1, 1]} : vector<4x2xf32> to vector<1x2xf32>
    %49 = vector.broadcast %48 : vector<1x2xf32> to vector<40x2xf32>
    %50 = arith.addf %47, %49 : vector<40x2xf32>
    %cst_28 = arith.constant 0.000000e+00 : f32
    %51 = vector.broadcast %cst_28 : f32 to vector<40x2xf32>
    %52 = arith.maximumf %50, %51 : vector<40x2xf32>
    %c2_29 = arith.constant 2 : index
    %c0_30 = arith.constant 0 : index
    %c0_31 = arith.constant 0 : index
    %53 = vector.load %arg6[%c2_29, %c0_30, %c0_31] : memref<4x256x40xbf16, #tpu.memory_space<vmem>>, vector<1x256x40xbf16>
    %54 = vector.shape_cast %53 : vector<1x256x40xbf16> to vector<256x40xbf16>
    %55 = arith.truncf %52 : vector<40x2xf32> to vector<40x2xbf16>
    %cst_32 = arith.constant dense<0.000000e+00> : vector<256x2xf32>
    %56 = tpu.matmul %54, %55, %cst_32 {dimension_numbers = #tpu.dot_dimension_numbers<[1], [0], [0], [1], [0, 0, 1, 1], [], []>} : vector<256x40xbf16>, vector<40x2xbf16>, vector<256x2xf32> -> vector<256x2xf32>
    %57 = arith.truncf %56 : vector<256x2xf32> to vector<256x2xbf16>
    %58 = vector.extract_strided_slice %4 {offsets = [120, 0], sizes = [40, 8], strides = [1, 1]} : vector<160x8xbf16> to vector<40x8xbf16>
    %c3 = arith.constant 3 : index
    %c0_33 = arith.constant 0 : index
    %c0_34 = arith.constant 0 : index
    %59 = vector.load %arg3[%c3, %c0_33, %c0_34] : memref<4x8x2xbf16, #tpu.memory_space<vmem>>, vector<1x8x2xbf16>
    %60 = vector.shape_cast %59 : vector<1x8x2xbf16> to vector<8x2xbf16>
    %cst_35 = arith.constant dense<0.000000e+00> : vector<40x2xf32>
    %61 = tpu.matmul %58, %60, %cst_35 {dimension_numbers = #tpu.dot_dimension_numbers<[1], [0], [0], [1], [0, 0, 1, 1], [], []>} : vector<40x8xbf16>, vector<8x2xbf16>, vector<40x2xf32> -> vector<40x2xf32>
    %62 = vector.extract_strided_slice %5 {offsets = [3, 0], sizes = [1, 2], strides = [1, 1]} : vector<4x2xf32> to vector<1x2xf32>
    %63 = vector.broadcast %62 : vector<1x2xf32> to vector<40x2xf32>
    %64 = arith.mulf %61, %63 : vector<40x2xf32>
    %65 = vector.extract_strided_slice %6 {offsets = [3, 0], sizes = [1, 2], strides = [1, 1]} : vector<4x2xf32> to vector<1x2xf32>
    %66 = vector.broadcast %65 : vector<1x2xf32> to vector<40x2xf32>
    %67 = arith.addf %64, %66 : vector<40x2xf32>
    %cst_36 = arith.constant 0.000000e+00 : f32
    %68 = vector.broadcast %cst_36 : f32 to vector<40x2xf32>
    %69 = arith.maximumf %67, %68 : vector<40x2xf32>
    %c3_37 = arith.constant 3 : index
    %c0_38 = arith.constant 0 : index
    %c0_39 = arith.constant 0 : index
    %70 = vector.load %arg6[%c3_37, %c0_38, %c0_39] : memref<4x256x40xbf16, #tpu.memory_space<vmem>>, vector<1x256x40xbf16>
    %71 = vector.shape_cast %70 : vector<1x256x40xbf16> to vector<256x40xbf16>
    %72 = arith.truncf %69 : vector<40x2xf32> to vector<40x2xbf16>
    %cst_40 = arith.constant dense<0.000000e+00> : vector<256x2xf32>
    %73 = tpu.matmul %71, %72, %cst_40 {dimension_numbers = #tpu.dot_dimension_numbers<[1], [0], [0], [1], [0, 0, 1, 1], [], []>} : vector<256x40xbf16>, vector<40x2xbf16>, vector<256x2xf32> -> vector<256x2xf32>
    %74 = arith.truncf %73 : vector<256x2xf32> to vector<256x2xbf16>
    %75 = tpu.concatenate %1, %23, %40, %57, %74 in 1 : vector<256x8xbf16>, vector<256x2xbf16>, vector<256x2xbf16>, vector<256x2xbf16>, vector<256x2xbf16> -> vector<256x16xbf16>
    %cst_41 = arith.constant 0.000000e+00 : bf16
    %76 = vector.broadcast %cst_41 : bf16 to vector<342x16xbf16>
    %c0_42 = arith.constant 0 : index
    %c0_43 = arith.constant 0 : index
    %77 = vector.load %arg11[%c0_42, %c0_43] : memref<342x16xbf16, #tpu.memory_space<vmem>>, vector<342x16xbf16>
    tpu.vector_store %arg11[%c0_42, %c0_43], %76 {strides = array<i32>} : memref<342x16xbf16, #tpu.memory_space<vmem>>, vector<342x16xbf16>,
    %78 = vector.extract_strided_slice %75 {offsets = [0, 0], sizes = [16, 16], strides = [1, 1]} : vector<256x16xbf16> to vector<16x16xbf16>
    %c19 = arith.constant 19 : index
    %c0_44 = arith.constant 0 : index
    %79 = vector.load %arg11[%c19, %c0_44] : memref<342x16xbf16, #tpu.memory_space<vmem>>, vector<16x16xbf16>
    tpu.vector_store %arg11[%c19, %c0_44], %78 {strides = array<i32>} : memref<342x16xbf16, #tpu.memory_space<vmem>>, vector<16x16xbf16>,
    %80 = vector.extract_strided_slice %75 {offsets = [16, 0], sizes = [16, 16], strides = [1, 1]} : vector<256x16xbf16> to vector<16x16xbf16>
    %c37 = arith.constant 37 : index
    %c0_45 = arith.constant 0 : index
    %81 = vector.load %arg11[%c37, %c0_45] : memref<342x16xbf16, #tpu.memory_space<vmem>>, vector<16x16xbf16>
    tpu.vector_store %arg11[%c37, %c0_45], %80 {strides = array<i32>} : memref<342x16xbf16, #tpu.memory_space<vmem>>, vector<16x16xbf16>,
    %82 = vector.extract_strided_slice %75 {offsets = [32, 0], sizes = [16, 16], strides = [1, 1]} : vector<256x16xbf16> to vector<16x16xbf16>
    %c55 = arith.constant 55 : index
    %c0_46 = arith.constant 0 : index
    %83 = vector.load %arg11[%c55, %c0_46] : memref<342x16xbf16, #tpu.memory_space<vmem>>, vector<16x16xbf16>
    tpu.vector_store %arg11[%c55, %c0_46], %82 {strides = array<i32>} : memref<342x16xbf16, #tpu.memory_space<vmem>>, vector<16x16xbf16>,
    %84 = vector.extract_strided_slice %75 {offsets = [48, 0], sizes = [16, 16], strides = [1, 1]} : vector<256x16xbf16> to vector<16x16xbf16>
    %c73 = arith.constant 73 : index
    %c0_47 = arith.constant 0 : index
    %85 = vector.load %arg11[%c73, %c0_47] : memref<342x16xbf16, #tpu.memory_space<vmem>>, vector<16x16xbf16>
    tpu.vector_store %arg11[%c73, %c0_47], %84 {strides = array<i32>} : memref<342x16xbf16, #tpu.memory_space<vmem>>, vector<16x16xbf16>,
    %86 = vector.extract_strided_slice %75 {offsets = [64, 0], sizes = [16, 16], strides = [1, 1]} : vector<256x16xbf16> to vector<16x16xbf16>
    %c91 = arith.constant 91 : index
    %c0_48 = arith.constant 0 : index
    %87 = vector.load %arg11[%c91, %c0_48] : memref<342x16xbf16, #tpu.memory_space<vmem>>, vector<16x16xbf16>
    tpu.vector_store %arg11[%c91, %c0_48], %86 {strides = array<i32>} : memref<342x16xbf16, #tpu.memory_space<vmem>>, vector<16x16xbf16>,
    %88 = vector.extract_strided_slice %75 {offsets = [80, 0], sizes = [16, 16], strides = [1, 1]} : vector<256x16xbf16> to vector<16x16xbf16>
    %c109 = arith.constant 109 : index
    %c0_49 = arith.constant 0 : index
    %89 = vector.load %arg11[%c109, %c0_49] : memref<342x16xbf16, #tpu.memory_space<vmem>>, vector<16x16xbf16>
    tpu.vector_store %arg11[%c109, %c0_49], %88 {strides = array<i32>} : memref<342x16xbf16, #tpu.memory_space<vmem>>, vector<16x16xbf16>,
    %90 = vector.extract_strided_slice %75 {offsets = [96, 0], sizes = [16, 16], strides = [1, 1]} : vector<256x16xbf16> to vector<16x16xbf16>
    %c127 = arith.constant 127 : index
    %c0_50 = arith.constant 0 : index
    %91 = vector.load %arg11[%c127, %c0_50] : memref<342x16xbf16, #tpu.memory_space<vmem>>, vector<16x16xbf16>
    tpu.vector_store %arg11[%c127, %c0_50], %90 {strides = array<i32>} : memref<342x16xbf16, #tpu.memory_space<vmem>>, vector<16x16xbf16>,
    %92 = vector.extract_strided_slice %75 {offsets = [112, 0], sizes = [16, 16], strides = [1, 1]} : vector<256x16xbf16> to vector<16x16xbf16>
    %c145 = arith.constant 145 : index
    %c0_51 = arith.constant 0 : index
    %93 = vector.load %arg11[%c145, %c0_51] : memref<342x16xbf16, #tpu.memory_space<vmem>>, vector<16x16xbf16>
    tpu.vector_store %arg11[%c145, %c0_51], %92 {strides = array<i32>} : memref<342x16xbf16, #tpu.memory_space<vmem>>, vector<16x16xbf16>,
    %94 = vector.extract_strided_slice %75 {offsets = [128, 0], sizes = [16, 16], strides = [1, 1]} : vector<256x16xbf16> to vector<16x16xbf16>
    %c163 = arith.constant 163 : index
    %c0_52 = arith.constant 0 : index
    %95 = vector.load %arg11[%c163, %c0_52] : memref<342x16xbf16, #tpu.memory_space<vmem>>, vector<16x16xbf16>
    tpu.vector_store %arg11[%c163, %c0_52], %94 {strides = array<i32>} : memref<342x16xbf16, #tpu.memory_space<vmem>>, vector<16x16xbf16>,
    %96 = vector.extract_strided_slice %75 {offsets = [144, 0], sizes = [16, 16], strides = [1, 1]} : vector<256x16xbf16> to vector<16x16xbf16>
    %c181 = arith.constant 181 : index
    %c0_53 = arith.constant 0 : index
    %97 = vector.load %arg11[%c181, %c0_53] : memref<342x16xbf16, #tpu.memory_space<vmem>>, vector<16x16xbf16>
    tpu.vector_store %arg11[%c181, %c0_53], %96 {strides = array<i32>} : memref<342x16xbf16, #tpu.memory_space<vmem>>, vector<16x16xbf16>,
    %98 = vector.extract_strided_slice %75 {offsets = [160, 0], sizes = [16, 16], strides = [1, 1]} : vector<256x16xbf16> to vector<16x16xbf16>
    %c199 = arith.constant 199 : index
    %c0_54 = arith.constant 0 : index
    %99 = vector.load %arg11[%c199, %c0_54] : memref<342x16xbf16, #tpu.memory_space<vmem>>, vector<16x16xbf16>
    tpu.vector_store %arg11[%c199, %c0_54], %98 {strides = array<i32>} : memref<342x16xbf16, #tpu.memory_space<vmem>>, vector<16x16xbf16>,
    %100 = vector.extract_strided_slice %75 {offsets = [176, 0], sizes = [16, 16], strides = [1, 1]} : vector<256x16xbf16> to vector<16x16xbf16>
    %c217 = arith.constant 217 : index
    %c0_55 = arith.constant 0 : index
    %101 = vector.load %arg11[%c217, %c0_55] : memref<342x16xbf16, #tpu.memory_space<vmem>>, vector<16x16xbf16>
    tpu.vector_store %arg11[%c217, %c0_55], %100 {strides = array<i32>} : memref<342x16xbf16, #tpu.memory_space<vmem>>, vector<16x16xbf16>,
    %102 = vector.extract_strided_slice %75 {offsets = [192, 0], sizes = [16, 16], strides = [1, 1]} : vector<256x16xbf16> to vector<16x16xbf16>
    %c235 = arith.constant 235 : index
    %c0_56 = arith.constant 0 : index
    %103 = vector.load %arg11[%c235, %c0_56] : memref<342x16xbf16, #tpu.memory_space<vmem>>, vector<16x16xbf16>
    tpu.vector_store %arg11[%c235, %c0_56], %102 {strides = array<i32>} : memref<342x16xbf16, #tpu.memory_space<vmem>>, vector<16x16xbf16>,
    %104 = vector.extract_strided_slice %75 {offsets = [208, 0], sizes = [16, 16], strides = [1, 1]} : vector<256x16xbf16> to vector<16x16xbf16>
    %c253 = arith.constant 253 : index
    %c0_57 = arith.constant 0 : index
    %105 = vector.load %arg11[%c253, %c0_57] : memref<342x16xbf16, #tpu.memory_space<vmem>>, vector<16x16xbf16>
    tpu.vector_store %arg11[%c253, %c0_57], %104 {strides = array<i32>} : memref<342x16xbf16, #tpu.memory_space<vmem>>, vector<16x16xbf16>,
    %106 = vector.extract_strided_slice %75 {offsets = [224, 0], sizes = [16, 16], strides = [1, 1]} : vector<256x16xbf16> to vector<16x16xbf16>
    %c271 = arith.constant 271 : index
    %c0_58 = arith.constant 0 : index
    %107 = vector.load %arg11[%c271, %c0_58] : memref<342x16xbf16, #tpu.memory_space<vmem>>, vector<16x16xbf16>
    tpu.vector_store %arg11[%c271, %c0_58], %106 {strides = array<i32>} : memref<342x16xbf16, #tpu.memory_space<vmem>>, vector<16x16xbf16>,
    %108 = vector.extract_strided_slice %75 {offsets = [240, 0], sizes = [16, 16], strides = [1, 1]} : vector<256x16xbf16> to vector<16x16xbf16>
    %c289 = arith.constant 289 : index
    %c0_59 = arith.constant 0 : index
    %109 = vector.load %arg11[%c289, %c0_59] : memref<342x16xbf16, #tpu.memory_space<vmem>>, vector<16x16xbf16>
    tpu.vector_store %arg11[%c289, %c0_59], %108 {strides = array<i32>} : memref<342x16xbf16, #tpu.memory_space<vmem>>, vector<16x16xbf16>,
    %cst_60 = arith.constant 0.000000e+00 : f32
    %110 = vector.broadcast %cst_60 : f32 to vector<288x2xf32>
    %c0_61 = arith.constant 0 : index
    %c0_62 = arith.constant 0 : index
    %111 = vector.load %arg11[%c0_61, %c0_62] : memref<342x16xbf16, #tpu.memory_space<vmem>>, vector<288x16xbf16>
    %c0_63 = arith.constant 0 : index
    %c0_64 = arith.constant 0 : index
    %c0_65 = arith.constant 0 : index
    %112 = vector.load %arg7[%c0_63, %c0_64, %c0_65] : memref<9x16x2xbf16, #tpu.memory_space<vmem>>, vector<1x16x2xbf16>
    %113 = vector.shape_cast %112 : vector<1x16x2xbf16> to vector<16x2xbf16>
    %cst_66 = arith.constant dense<0.000000e+00> : vector<288x2xf32>
    %114 = tpu.matmul %111, %113, %cst_66 {dimension_numbers = #tpu.dot_dimension_numbers<[1], [0], [0], [1], [0, 0, 1, 1], [], []>} : vector<288x16xbf16>, vector<16x2xbf16>, vector<288x2xf32> -> vector<288x2xf32>
    %115 = arith.addf %110, %114 : vector<288x2xf32>
    %c1_67 = arith.constant 1 : index
    %c0_68 = arith.constant 0 : index
    %116 = vector.load %arg11[%c1_67, %c0_68] : memref<342x16xbf16, #tpu.memory_space<vmem>>, vector<288x16xbf16>
    %c1_69 = arith.constant 1 : index
    %c0_70 = arith.constant 0 : index
    %c0_71 = arith.constant 0 : index
    %117 = vector.load %arg7[%c1_69, %c0_70, %c0_71] : memref<9x16x2xbf16, #tpu.memory_space<vmem>>, vector<1x16x2xbf16>
    %118 = vector.shape_cast %117 : vector<1x16x2xbf16> to vector<16x2xbf16>
    %cst_72 = arith.constant dense<0.000000e+00> : vector<288x2xf32>
    %119 = tpu.matmul %116, %118, %cst_72 {dimension_numbers = #tpu.dot_dimension_numbers<[1], [0], [0], [1], [0, 0, 1, 1], [], []>} : vector<288x16xbf16>, vector<16x2xbf16>, vector<288x2xf32> -> vector<288x2xf32>
    %120 = arith.addf %115, %119 : vector<288x2xf32>
    %c2_73 = arith.constant 2 : index
    %c0_74 = arith.constant 0 : index
    %121 = vector.load %arg11[%c2_73, %c0_74] : memref<342x16xbf16, #tpu.memory_space<vmem>>, vector<288x16xbf16>
    %c2_75 = arith.constant 2 : index
    %c0_76 = arith.constant 0 : index
    %c0_77 = arith.constant 0 : index
    %122 = vector.load %arg7[%c2_75, %c0_76, %c0_77] : memref<9x16x2xbf16, #tpu.memory_space<vmem>>, vector<1x16x2xbf16>
    %123 = vector.shape_cast %122 : vector<1x16x2xbf16> to vector<16x2xbf16>
    %cst_78 = arith.constant dense<0.000000e+00> : vector<288x2xf32>
    %124 = tpu.matmul %121, %123, %cst_78 {dimension_numbers = #tpu.dot_dimension_numbers<[1], [0], [0], [1], [0, 0, 1, 1], [], []>} : vector<288x16xbf16>, vector<16x2xbf16>, vector<288x2xf32> -> vector<288x2xf32>
    %125 = arith.addf %120, %124 : vector<288x2xf32>
    %c18 = arith.constant 18 : index
    %c0_79 = arith.constant 0 : index
    %126 = vector.load %arg11[%c18, %c0_79] : memref<342x16xbf16, #tpu.memory_space<vmem>>, vector<288x16xbf16>
    %c3_80 = arith.constant 3 : index
    %c0_81 = arith.constant 0 : index
    %c0_82 = arith.constant 0 : index
    %127 = vector.load %arg7[%c3_80, %c0_81, %c0_82] : memref<9x16x2xbf16, #tpu.memory_space<vmem>>, vector<1x16x2xbf16>
    %128 = vector.shape_cast %127 : vector<1x16x2xbf16> to vector<16x2xbf16>
    %cst_83 = arith.constant dense<0.000000e+00> : vector<288x2xf32>
    %129 = tpu.matmul %126, %128, %cst_83 {dimension_numbers = #tpu.dot_dimension_numbers<[1], [0], [0], [1], [0, 0, 1, 1], [], []>} : vector<288x16xbf16>, vector<16x2xbf16>, vector<288x2xf32> -> vector<288x2xf32>
    %130 = arith.addf %125, %129 : vector<288x2xf32>
    %c19_84 = arith.constant 19 : index
    %c0_85 = arith.constant 0 : index
    %131 = vector.load %arg11[%c19_84, %c0_85] : memref<342x16xbf16, #tpu.memory_space<vmem>>, vector<288x16xbf16>
    %c4 = arith.constant 4 : index
    %c0_86 = arith.constant 0 : index
    %c0_87 = arith.constant 0 : index
    %132 = vector.load %arg7[%c4, %c0_86, %c0_87] : memref<9x16x2xbf16, #tpu.memory_space<vmem>>, vector<1x16x2xbf16>
    %133 = vector.shape_cast %132 : vector<1x16x2xbf16> to vector<16x2xbf16>
    %cst_88 = arith.constant dense<0.000000e+00> : vector<288x2xf32>
    %134 = tpu.matmul %131, %133, %cst_88 {dimension_numbers = #tpu.dot_dimension_numbers<[1], [0], [0], [1], [0, 0, 1, 1], [], []>} : vector<288x16xbf16>, vector<16x2xbf16>, vector<288x2xf32> -> vector<288x2xf32>
    %135 = arith.addf %130, %134 : vector<288x2xf32>
    %c20 = arith.constant 20 : index
    %c0_89 = arith.constant 0 : index
    %136 = vector.load %arg11[%c20, %c0_89] : memref<342x16xbf16, #tpu.memory_space<vmem>>, vector<288x16xbf16>
    %c5 = arith.constant 5 : index
    %c0_90 = arith.constant 0 : index
    %c0_91 = arith.constant 0 : index
    %137 = vector.load %arg7[%c5, %c0_90, %c0_91] : memref<9x16x2xbf16, #tpu.memory_space<vmem>>, vector<1x16x2xbf16>
    %138 = vector.shape_cast %137 : vector<1x16x2xbf16> to vector<16x2xbf16>
    %cst_92 = arith.constant dense<0.000000e+00> : vector<288x2xf32>
    %139 = tpu.matmul %136, %138, %cst_92 {dimension_numbers = #tpu.dot_dimension_numbers<[1], [0], [0], [1], [0, 0, 1, 1], [], []>} : vector<288x16xbf16>, vector<16x2xbf16>, vector<288x2xf32> -> vector<288x2xf32>
    %140 = arith.addf %135, %139 : vector<288x2xf32>
    %c36 = arith.constant 36 : index
    %c0_93 = arith.constant 0 : index
    %141 = vector.load %arg11[%c36, %c0_93] : memref<342x16xbf16, #tpu.memory_space<vmem>>, vector<288x16xbf16>
    %c6 = arith.constant 6 : index
    %c0_94 = arith.constant 0 : index
    %c0_95 = arith.constant 0 : index
    %142 = vector.load %arg7[%c6, %c0_94, %c0_95] : memref<9x16x2xbf16, #tpu.memory_space<vmem>>, vector<1x16x2xbf16>
    %143 = vector.shape_cast %142 : vector<1x16x2xbf16> to vector<16x2xbf16>
    %cst_96 = arith.constant dense<0.000000e+00> : vector<288x2xf32>
    %144 = tpu.matmul %141, %143, %cst_96 {dimension_numbers = #tpu.dot_dimension_numbers<[1], [0], [0], [1], [0, 0, 1, 1], [], []>} : vector<288x16xbf16>, vector<16x2xbf16>, vector<288x2xf32> -> vector<288x2xf32>
    %145 = arith.addf %140, %144 : vector<288x2xf32>
    %c37_97 = arith.constant 37 : index
    %c0_98 = arith.constant 0 : index
    %146 = vector.load %arg11[%c37_97, %c0_98] : memref<342x16xbf16, #tpu.memory_space<vmem>>, vector<288x16xbf16>
    %c7 = arith.constant 7 : index
    %c0_99 = arith.constant 0 : index
    %c0_100 = arith.constant 0 : index
    %147 = vector.load %arg7[%c7, %c0_99, %c0_100] : memref<9x16x2xbf16, #tpu.memory_space<vmem>>, vector<1x16x2xbf16>
    %148 = vector.shape_cast %147 : vector<1x16x2xbf16> to vector<16x2xbf16>
    %cst_101 = arith.constant dense<0.000000e+00> : vector<288x2xf32>
    %149 = tpu.matmul %146, %148, %cst_101 {dimension_numbers = #tpu.dot_dimension_numbers<[1], [0], [0], [1], [0, 0, 1, 1], [], []>} : vector<288x16xbf16>, vector<16x2xbf16>, vector<288x2xf32> -> vector<288x2xf32>
    %150 = arith.addf %145, %149 : vector<288x2xf32>
    %c38 = arith.constant 38 : index
    %c0_102 = arith.constant 0 : index
    %151 = vector.load %arg11[%c38, %c0_102] : memref<342x16xbf16, #tpu.memory_space<vmem>>, vector<288x16xbf16>
    %c8 = arith.constant 8 : index
    %c0_103 = arith.constant 0 : index
    %c0_104 = arith.constant 0 : index
    %152 = vector.load %arg7[%c8, %c0_103, %c0_104] : memref<9x16x2xbf16, #tpu.memory_space<vmem>>, vector<1x16x2xbf16>
    %153 = vector.shape_cast %152 : vector<1x16x2xbf16> to vector<16x2xbf16>
    %cst_105 = arith.constant dense<0.000000e+00> : vector<288x2xf32>
    %154 = tpu.matmul %151, %153, %cst_105 {dimension_numbers = #tpu.dot_dimension_numbers<[1], [0], [0], [1], [0, 0, 1, 1], [], []>} : vector<288x16xbf16>, vector<16x2xbf16>, vector<288x2xf32> -> vector<288x2xf32>
    %155 = arith.addf %150, %154 : vector<288x2xf32>
    %c0_106 = arith.constant 0 : index
    %c0_107 = arith.constant 0 : index
    %156 = vector.load %arg8[%c0_106, %c0_107] : memref<1x2xf32, #tpu.memory_space<vmem>>, vector<1x2xf32>
    %157 = vector.broadcast %156 : vector<1x2xf32> to vector<288x2xf32>
    %158 = arith.mulf %155, %157 : vector<288x2xf32>
    %c0_108 = arith.constant 0 : index
    %c0_109 = arith.constant 0 : index
    %159 = vector.load %arg9[%c0_108, %c0_109] : memref<1x2xf32, #tpu.memory_space<vmem>>, vector<1x2xf32>
    %160 = vector.broadcast %159 : vector<1x2xf32> to vector<288x2xf32>
    %161 = arith.addf %158, %160 : vector<288x2xf32>
    %cst_110 = arith.constant 0.000000e+00 : f32
    %162 = vector.broadcast %cst_110 : f32 to vector<288x2xf32>
    %163 = arith.maximumf %161, %162 : vector<288x2xf32>
    %164 = vector.shape_cast %163 : vector<288x2xf32> to vector<16x18x2xf32>
    %165 = vector.extract_strided_slice %164 {offsets = [0, 0, 0], sizes = [16, 16, 2], strides = [1, 1, 1]} : vector<16x18x2xf32> to vector<16x16x2xf32>
    %c0_111 = arith.constant 0 : index
    %c0_112 = arith.constant 0 : index
    %c0_113 = arith.constant 0 : index
    %c0_114 = arith.constant 0 : index
    %166 = vector.load %arg10[%c0_111, %c0_112, %c0_113, %c0_114] : memref<1x16x16x2xf32, #tpu.memory_space<vmem>>, vector<1x16x16x2xf32>
    %167 = vector.shape_cast %166 : vector<1x16x16x2xf32> to vector<16x16x2xf32>
    %168 = vector.shape_cast %165 : vector<16x16x2xf32> to vector<1x16x16x2xf32>
    tpu.vector_store %arg10[%c0_111, %c0_112, %c0_113, %c0_114], %168 {strides = array<i32>} : memref<1x16x16x2xf32, #tpu.memory_space<vmem>>, vector<1x16x16x2xf32>,
    return
  }
  func.func @transform_0(%arg0: i32) -> (i32, i32, i32) {
    %c0_i32 = arith.constant 0 : i32
    %c0_i32_0 = arith.constant 0 : i32
    %c0_i32_1 = arith.constant 0 : i32
    return %arg0, %c0_i32, %c0_i32_0 : i32, i32, i32
  }
  func.func @transform_1(%arg0: i32) -> (i32, i32) {
    %c0_i32 = arith.constant 0 : i32
    %c0_i32_0 = arith.constant 0 : i32
    %c0_i32_1 = arith.constant 0 : i32
    return %c0_i32, %c0_i32_0 : i32, i32
  }
  func.func @transform_2(%arg0: i32) -> (i32, i32, i32) {
    %c0_i32 = arith.constant 0 : i32
    %c0_i32_0 = arith.constant 0 : i32
    %c0_i32_1 = arith.constant 0 : i32
    %c0_i32_2 = arith.constant 0 : i32
    return %c0_i32, %c0_i32_0, %c0_i32_1 : i32, i32, i32
  }
  func.func @transform_3(%arg0: i32) -> (i32, i32) {
    %c0_i32 = arith.constant 0 : i32
    %c0_i32_0 = arith.constant 0 : i32
    %c0_i32_1 = arith.constant 0 : i32
    return %c0_i32, %c0_i32_0 : i32, i32
  }
  func.func @transform_4(%arg0: i32) -> (i32, i32) {
    %c0_i32 = arith.constant 0 : i32
    %c0_i32_0 = arith.constant 0 : i32
    %c0_i32_1 = arith.constant 0 : i32
    return %c0_i32, %c0_i32_0 : i32, i32
  }
  func.func @transform_5(%arg0: i32) -> (i32, i32, i32) {
    %c0_i32 = arith.constant 0 : i32
    %c0_i32_0 = arith.constant 0 : i32
    %c0_i32_1 = arith.constant 0 : i32
    %c0_i32_2 = arith.constant 0 : i32
    return %c0_i32, %c0_i32_0, %c0_i32_1 : i32, i32, i32
  }
  func.func @transform_6(%arg0: i32) -> (i32, i32, i32) {
    %c0_i32 = arith.constant 0 : i32
    %c0_i32_0 = arith.constant 0 : i32
    %c0_i32_1 = arith.constant 0 : i32
    %c0_i32_2 = arith.constant 0 : i32
    return %c0_i32, %c0_i32_0, %c0_i32_1 : i32, i32, i32
  }
  func.func @transform_7(%arg0: i32) -> (i32, i32) {
    %c0_i32 = arith.constant 0 : i32
    %c0_i32_0 = arith.constant 0 : i32
    %c0_i32_1 = arith.constant 0 : i32
    return %c0_i32, %c0_i32_0 : i32, i32
  }
  func.func @transform_8(%arg0: i32) -> (i32, i32) {
    %c0_i32 = arith.constant 0 : i32
    %c0_i32_0 = arith.constant 0 : i32
    %c0_i32_1 = arith.constant 0 : i32
    return %c0_i32, %c0_i32_0 : i32, i32
  }
  func.func @transform_9(%arg0: i32) -> (i32, i32, i32, i32) {
    %c0_i32 = arith.constant 0 : i32
    %c0_i32_0 = arith.constant 0 : i32
    %c0_i32_1 = arith.constant 0 : i32
    %c0_i32_2 = arith.constant 0 : i32
    return %arg0, %c0_i32, %c0_i32_0, %c0_i32_1 : i32, i32, i32, i32
  }
}

</mosaic_0001>

<llo_original>
// kernel: tpu_custom_call.1
$region0: #{tpu_custom_call.1}
  #allocation0 [shape = 'u32[]', space=smem, size = 0x4, offset = 0x4, fixed_abs, tag = 'smem constant byte address 0x4 - core index']
  #allocation1 [shape = 'u32[72,128]{1,0:T(1,128)}', space=vmem, size = 0x9000, scoped, tag = 'internal scratch']
  #allocation2 [shape = 'bf16[342,16]{1,0:T(8,128)(2,1)}', space=vmem, size = 0x15800, scoped, tag = 'scratch operand']
  %s0 = inlined_call_operand.vmem [shape: bf16[2,256,8], index: 0, kind: input, shape index: {}]
  %s1 = inlined_call_operand.vmem [shape: bf16[160,256], index: 1, kind: input, shape index: {}]
  %s2 = inlined_call_operand.vmem [shape: bf16[4,8,2], index: 2, kind: input, shape index: {}]
  %s3 = inlined_call_operand.vmem [shape: f32[4,2], index: 3, kind: input, shape index: {}]
  %s4 = inlined_call_operand.vmem [shape: f32[4,2], index: 4, kind: input, shape index: {}]
  %s5 = inlined_call_operand.vmem [shape: bf16[4,256,40], index: 5, kind: input, shape index: {}]
  %s6 = inlined_call_operand.vmem [shape: bf16[9,16,2], index: 6, kind: input, shape index: {}]
  %s7 = inlined_call_operand.vmem [shape: f32[1,2], index: 7, kind: input, shape index: {}]
  %s8 = inlined_call_operand.vmem [shape: f32[1,2], index: 8, kind: input, shape index: {}]
  %s9 = inlined_call_operand.vmem [shape: f32[2,16,16,2], index: 9, kind: output, shape index: {}]
  %s10 = sld [smem:[#allocation0]]
  $region69: #{tpu_custom_call.1} parent=0
    _
  %s12 = ssub.s32 1, %s10
  %s13 = scalar_select 0, %s12, %s10
  loop: start=0, step=1, limit=4
  $region2: #{tpu_custom_call.1} parent=0 // loop_pre_header
    _
  $region3: #{tpu_custom_call.1} parent=0 // loop_header
    %s15 = sphi 0, %s19
    %p16 = scmp.ge.s32.totalorder %s15, 4
    %s25 = sphi 0, %s27
    %s28 = sphi 0, %s25
    %s29 = sphi 0, %s28
    %s45 = sphi 0, %s29
    %s49 = sphi 0, %s49
    %s51 = sphi 0, %s49
    %s52 = sphi 0, %s51
    %s66 = sphi 0, %s52
    %s70 = sphi 0, %s70
    %s72 = sphi 0, %s70
    %s73 = sphi 0, %s72
    %s87 = sphi 0, %s73
    %s91 = sphi 0, %s91
    %s93 = sphi 0, %s91
    %s94 = sphi 0, %s93
    %s108 = sphi 0, %s94
    %s112 = sphi 0, %s112
    %s114 = sphi 0, %s112
    %s115 = sphi 0, %s114
    %s129 = sphi 0, %s115
    %s133 = sphi 0, %s133
    %s135 = sphi 0, %s133
    %s136 = sphi 0, %s135
    %s150 = sphi 0, %s136
    %s154 = sphi 0, %s154
    %s156 = sphi 0, %s154
    %s157 = sphi 0, %s156
    %s171 = sphi 0, %s157
    %s175 = sphi 0, %s175
    %s177 = sphi 0, %s175
    %s178 = sphi 0, %s177
    %s192 = sphi 0, %s178
    %s196 = sphi 0, %s196
    %s198 = sphi 0, %s196
    %s199 = sphi 0, %s198
    %s213 = sphi 0, %s199
    %s219 = sphi 0, %s221
    %s222 = sphi 0, %s219
    %s223 = sphi 0, %s222
    %s239 = sphi 0, %s223
  $region4: #{tpu_custom_call.1} parent=0 // loop_header_branch
    %18 = sbr.rel (%p16) target = $region8
  $region5: #{tpu_custom_call.1} parent=0 // loop_body
    %s20 = ssub.s32 %s15, 1
    %s21 = ssub.s32 %s15, 2
    %s22 = sadd.s32 %s15, 1
    %s23 = ssub.s32 %s15, %s22
    %p24 = scmp.eq.s32.totalorder %s23, 0
    %s26 = sadd.s32 %s25, 1
    %s27 = scalar_select %p24, %s25, %s26
    %p30 = pneg %p24
    %p31 = scmp.eq.s32.totalorder %s15, 1
    %p32 = por %p30, %p31
    %p33 = scmp.ne.s32.totalorder %s25, %s28
    %p34 = scmp.eq.s32.totalorder %s15, 0
    %p35 = por %p33, %p34
    %p36 = scmp.ne.s32.totalorder %s25, %s28
    %p37 = scmp.eq.s32.totalorder %s20, 1
    %p38 = por %p36, %p37
    %p39 = scmp.ne.s32.totalorder %s28, %s29
    %p40 = scmp.eq.s32.totalorder %s20, 0
    %p41 = por %p39, %p40
    %p42 = scmp.ne.s32.totalorder %s28, %s29
    %p43 = scmp.eq.s32.totalorder %s21, 1
    %p44 = por %p42, %p43
    %p46 = scmp.ne.s32.totalorder %s29, %s45
    %p47 = scmp.eq.s32.totalorder %s21, 0
    %p48 = por %p46, %p47
    %s50 = sadd.s32 %s49, 1
    %p53 = scmp.eq.s32.totalorder %s15, 1
    %p54 = scmp.ne.s32.totalorder %s49, %s51
    %p55 = scmp.eq.s32.totalorder %s15, 0
    %p56 = por %p54, %p55
    %p57 = scmp.ne.s32.totalorder %s49, %s51
    %p58 = scmp.eq.s32.totalorder %s20, 1
    %p59 = por %p57, %p58
    %p60 = scmp.ne.s32.totalorder %s51, %s52
    %p61 = scmp.eq.s32.totalorder %s20, 0
    %p62 = por %p60, %p61
    %p63 = scmp.ne.s32.totalorder %s51, %s52
    %p64 = scmp.eq.s32.totalorder %s21, 1
    %p65 = por %p63, %p64
    %p67 = scmp.ne.s32.totalorder %s52, %s66
    %p68 = scmp.eq.s32.totalorder %s21, 0
    %p69 = por %p67, %p68
    %s71 = sadd.s32 %s70, 1
    %p74 = scmp.eq.s32.totalorder %s15, 1
    %p75 = scmp.ne.s32.totalorder %s70, %s72
    %p76 = scmp.eq.s32.totalorder %s15, 0
    %p77 = por %p75, %p76
    %p78 = scmp.ne.s32.totalorder %s70, %s72
    %p79 = scmp.eq.s32.totalorder %s20, 1
    %p80 = por %p78, %p79
    %p81 = scmp.ne.s32.totalorder %s72, %s73
    %p82 = scmp.eq.s32.totalorder %s20, 0
    %p83 = por %p81, %p82
    %p84 = scmp.ne.s32.totalorder %s72, %s73
    %p85 = scmp.eq.s32.totalorder %s21, 1
    %p86 = por %p84, %p85
    %p88 = scmp.ne.s32.totalorder %s73, %s87
    %p89 = scmp.eq.s32.totalorder %s21, 0
    %p90 = por %p88, %p89
    %s92 = sadd.s32 %s91, 1
    %p95 = scmp.eq.s32.totalorder %s15, 1
    %p96 = scmp.ne.s32.totalorder %s91, %s93
    %p97 = scmp.eq.s32.totalorder %s15, 0
    %p98 = por %p96, %p97
    %p99 = scmp.ne.s32.totalorder %s91, %s93
    %p100 = scmp.eq.s32.totalorder %s20, 1
    %p101 = por %p99, %p100
    %p102 = scmp.ne.s32.totalorder %s93, %s94
    %p103 = scmp.eq.s32.totalorder %s20, 0
    %p104 = por %p102, %p103
    %p105 = scmp.ne.s32.totalorder %s93, %s94
    %p106 = scmp.eq.s32.totalorder %s21, 1
    %p107 = por %p105, %p106
    %p109 = scmp.ne.s32.totalorder %s94, %s108
    %p110 = scmp.eq.s32.totalorder %s21, 0
    %p111 = por %p109, %p110
    %s113 = sadd.s32 %s112, 1
    %p116 = scmp.eq.s32.totalorder %s15, 1
    %p117 = scmp.ne.s32.totalorder %s112, %s114
    %p118 = scmp.eq.s32.totalorder %s15, 0
    %p119 = por %p117, %p118
    %p120 = scmp.ne.s32.totalorder %s112, %s114
    %p121 = scmp.eq.s32.totalorder %s20, 1
    %p122 = por %p120, %p121
    %p123 = scmp.ne.s32.totalorder %s114, %s115
    %p124 = scmp.eq.s32.totalorder %s20, 0
    %p125 = por %p123, %p124
    %p126 = scmp.ne.s32.totalorder %s114, %s115
    %p127 = scmp.eq.s32.totalorder %s21, 1
    %p128 = por %p126, %p127
    %p130 = scmp.ne.s32.totalorder %s115, %s129
    %p131 = scmp.eq.s32.totalorder %s21, 0
    %p132 = por %p130, %p131
    %s134 = sadd.s32 %s133, 1
    %p137 = scmp.eq.s32.totalorder %s15, 1
    %p138 = scmp.ne.s32.totalorder %s133, %s135
    %p139 = scmp.eq.s32.totalorder %s15, 0
    %p140 = por %p138, %p139
    %p141 = scmp.ne.s32.totalorder %s133, %s135
    %p142 = scmp.eq.s32.totalorder %s20, 1
    %p143 = por %p141, %p142
    %p144 = scmp.ne.s32.totalorder %s135, %s136
    %p145 = scmp.eq.s32.totalorder %s20, 0
    %p146 = por %p144, %p145
    %p147 = scmp.ne.s32.totalorder %s135, %s136
    %p148 = scmp.eq.s32.totalorder %s21, 1
    %p149 = por %p147, %p148
    %p151 = scmp.ne.s32.totalorder %s136, %s150
    %p152 = scmp.eq.s32.totalorder %s21, 0
    %p153 = por %p151, %p152
    %s155 = sadd.s32 %s154, 1
    %p158 = scmp.eq.s32.totalorder %s15, 1
    %p159 = scmp.ne.s32.totalorder %s154, %s156
    %p160 = scmp.eq.s32.totalorder %s15, 0
    %p161 = por %p159, %p160
    %p162 = scmp.ne.s32.totalorder %s154, %s156
    %p163 = scmp.eq.s32.totalorder %s20, 1
    %p164 = por %p162, %p163
    %p165 = scmp.ne.s32.totalorder %s156, %s157
    %p166 = scmp.eq.s32.totalorder %s20, 0
    %p167 = por %p165, %p166
    %p168 = scmp.ne.s32.totalorder %s156, %s157
    %p169 = scmp.eq.s32.totalorder %s21, 1
    %p170 = por %p168, %p169
    %p172 = scmp.ne.s32.totalorder %s157, %s171
    %p173 = scmp.eq.s32.totalorder %s21, 0
    %p174 = por %p172, %p173
    %s176 = sadd.s32 %s175, 1
    %p179 = scmp.eq.s32.totalorder %s15, 1
    %p180 = scmp.ne.s32.totalorder %s175, %s177
    %p181 = scmp.eq.s32.totalorder %s15, 0
    %p182 = por %p180, %p181
    %p183 = scmp.ne.s32.totalorder %s175, %s177
    %p184 = scmp.eq.s32.totalorder %s20, 1
    %p185 = por %p183, %p184
    %p186 = scmp.ne.s32.totalorder %s177, %s178
    %p187 = scmp.eq.s32.totalorder %s20, 0
    %p188 = por %p186, %p187
    %p189 = scmp.ne.s32.totalorder %s177, %s178
    %p190 = scmp.eq.s32.totalorder %s21, 1
    %p191 = por %p189, %p190
    %p193 = scmp.ne.s32.totalorder %s178, %s192
    %p194 = scmp.eq.s32.totalorder %s21, 0
    %p195 = por %p193, %p194
    %s197 = sadd.s32 %s196, 1
    %p200 = scmp.eq.s32.totalorder %s15, 1
    %p201 = scmp.ne.s32.totalorder %s196, %s198
    %p202 = scmp.eq.s32.totalorder %s15, 0
    %p203 = por %p201, %p202
    %p204 = scmp.ne.s32.totalorder %s196, %s198
    %p205 = scmp.eq.s32.totalorder %s20, 1
    %p206 = por %p204, %p205
    %p207 = scmp.ne.s32.totalorder %s198, %s199
    %p208 = scmp.eq.s32.totalorder %s20, 0
    %p209 = por %p207, %p208
    %p210 = scmp.ne.s32.totalorder %s198, %s199
    %p211 = scmp.eq.s32.totalorder %s21, 1
    %p212 = por %p210, %p211
    %p214 = scmp.ne.s32.totalorder %s199, %s213
    %p215 = scmp.eq.s32.totalorder %s21, 0
    %p216 = por %p214, %p215
    %s217 = ssub.s32 %s15, %s22
    %p218 = scmp.eq.s32.totalorder %s217, 0
    %s220 = sadd.s32 %s219, 1
    %s221 = scalar_select %p218, %s219, %s220
    %p224 = pneg %p218
    %p225 = scmp.eq.s32.totalorder %s15, 1
    %p226 = por %p224, %p225
    %p227 = scmp.ne.s32.totalorder %s219, %s222
    %p228 = scmp.eq.s32.totalorder %s15, 0
    %p229 = por %p227, %p228
    %p230 = scmp.ne.s32.totalorder %s219, %s222
    %p231 = scmp.eq.s32.totalorder %s20, 1
    %p232 = por %p230, %p231
    %p233 = scmp.ne.s32.totalorder %s222, %s223
    %p234 = scmp.eq.s32.totalorder %s20, 0
    %p235 = por %p233, %p234
    %p236 = scmp.ne.s32.totalorder %s222, %s223
    %p237 = scmp.eq.s32.totalorder %s21, 1
    %p238 = por %p236, %p237
    %p240 = scmp.ne.s32.totalorder %s223, %s239
    %p241 = scmp.eq.s32.totalorder %s21, 0
    %p242 = por %p240, %p241
    %p243 = scmp.le.s32.totalorder 1, %s15
    %p244 = scmp.lt.s32.totalorder %s15, 3
    %p245 = pnand %p243, %p244
    %p246 = pneg %p245
    // Predicated region
    $region9: #{tpu_custom_call.1} parent=5 // pred_check
      _
    $region10: #{tpu_custom_call.1} parent=5 // pred_check_branch
      %248 = sbr.rel (%p245) target = $region12
    $region11: #{tpu_custom_call.1} parent=5 // pred_region
      %s249 = ssub.s32 %s15, 1
      // Predicated region
      $region13: #{tpu_custom_call.1} parent=11 // pred_check
        %p250 = pneg %p62
      $region14: #{tpu_custom_call.1} parent=11 // pred_check_branch
        %252 = sbr.rel (%p250) target = $region16
      $region15: #{tpu_custom_call.1} parent=11 // pred_region
        _
      $region16: #{tpu_custom_call.1} parent=11 // pred_fallthru
        _
      // Predicated region
      $region17: #{tpu_custom_call.1} parent=11 // pred_check
        %p253 = pneg %p83
      $region18: #{tpu_custom_call.1} parent=11 // pred_check_branch
        %255 = sbr.rel (%p253) target = $region20
      $region19: #{tpu_custom_call.1} parent=11 // pred_region
        _
      $region20: #{tpu_custom_call.1} parent=11 // pred_fallthru
        _
      // Predicated region
      $region21: #{tpu_custom_call.1} parent=11 // pred_check
        %p256 = pneg %p104
      $region22: #{tpu_custom_call.1} parent=11 // pred_check_branch
        %258 = sbr.rel (%p256) target = $region24
      $region23: #{tpu_custom_call.1} parent=11 // pred_region
        _
      $region24: #{tpu_custom_call.1} parent=11 // pred_fallthru
        _
      // Predicated region
      $region25: #{tpu_custom_call.1} parent=11 // pred_check
        %p259 = pneg %p125
      $region26: #{tpu_custom_call.1} parent=11 // pred_check_branch
        %261 = sbr.rel (%p259) target = $region28
      $region27: #{tpu_custom_call.1} parent=11 // pred_region
        _
      $region28: #{tpu_custom_call.1} parent=11 // pred_fallthru
        _
      // Predicated region
      $region29: #{tpu_custom_call.1} parent=11 // pred_check
        %p262 = pneg %p146
      $region30: #{tpu_custom_call.1} parent=11 // pred_check_branch
        %264 = sbr.rel (%p262) target = $region32
      $region31: #{tpu_custom_call.1} parent=11 // pred_region
        _
      $region32: #{tpu_custom_call.1} parent=11 // pred_fallthru
        _
      // Predicated region
      $region33: #{tpu_custom_call.1} parent=11 // pred_check
        %p265 = pneg %p167
      $region34: #{tpu_custom_call.1} parent=11 // pred_check_branch
        %267 = sbr.rel (%p265) target = $region36
      $region35: #{tpu_custom_call.1} parent=11 // pred_region
        _
      $region36: #{tpu_custom_call.1} parent=11 // pred_fallthru
        _
      // Predicated region
      $region37: #{tpu_custom_call.1} parent=11 // pred_check
        %p268 = pneg %p188
      $region38: #{tpu_custom_call.1} parent=11 // pred_check_branch
        %270 = sbr.rel (%p268) target = $region40
      $region39: #{tpu_custom_call.1} parent=11 // pred_region
        _
      $region40: #{tpu_custom_call.1} parent=11 // pred_fallthru
        _
      // Predicated region
      $region41: #{tpu_custom_call.1} parent=11 // pred_check
        %p271 = pneg %p209
      $region42: #{tpu_custom_call.1} parent=11 // pred_check_branch
        %273 = sbr.rel (%p271) target = $region44
      $region43: #{tpu_custom_call.1} parent=11 // pred_region
        _
      $region44: #{tpu_custom_call.1} parent=11 // pred_fallthru
        _
    $region12: #{tpu_custom_call.1} parent=5 // pred_fallthru
      _
    %p274 = scmp.lt.s32.totalorder %s15, 2
    // Predicated region
    $region45: #{tpu_custom_call.1} parent=5 // pred_check
      %p275 = pneg %p274
    $region46: #{tpu_custom_call.1} parent=5 // pred_check_branch
      %277 = sbr.rel (%p275) target = $region48
    $region47: #{tpu_custom_call.1} parent=5 // pred_region
      // Predicated region
      $region49: #{tpu_custom_call.1} parent=47 // pred_check
        %p278 = pneg %p35
      $region50: #{tpu_custom_call.1} parent=47 // pred_check_branch
        %280 = sbr.rel (%p278) target = $region52
      $region51: #{tpu_custom_call.1} parent=47 // pred_region
        %p281 = scmp.lt.s32.totalorder %s15, 1
        %s282 = scalar_select %p281, %s15, 1
        %s283 = smul.addr %s282, 32
        %s284 = smul.addr %s283, 4
        %s285 = scalar_lea.vmem %s0, %s284
      $region52: #{tpu_custom_call.1} parent=47 // pred_fallthru
        _
    $region48: #{tpu_custom_call.1} parent=5 // pred_fallthru
      _
    %p286 = scmp.le.s32.totalorder 1, %s15
    %p287 = scmp.lt.s32.totalorder %s15, 3
    %p288 = pnand %p286, %p287
    %p289 = pneg %p288
    // Predicated region
    $region53: #{tpu_custom_call.1} parent=5 // pred_check
      _
    $region54: #{tpu_custom_call.1} parent=5 // pred_check_branch
      %291 = sbr.rel (%p288) target = $region56
    $region55: #{tpu_custom_call.1} parent=5 // pred_region
      %s292 = ssub.s32 %s15, 1
      %p293 = scmp.lt.s32.totalorder %s20, 1
      %s294 = scalar_select %p293, %s20, 1
      %s295 = smul.addr %s294, 32
      %s296 = smul.addr %s295, 4
      %s297 = scalar_lea.vmem %s0, %s296
      %p298 = pneg %p41
      %p299 = pneg %p38
      %p300 = pneg %p62
      %p301 = pneg %p59
      %p302 = pneg %p83
      %p303 = pneg %p80
      %p304 = pneg %p104
      %p305 = pneg %p101
      %p306 = pneg %p125
      %p307 = pneg %p122
      %p308 = pneg %p146
      %p309 = pneg %p143
      %p310 = pneg %p167
      %p311 = pneg %p164
      %p312 = pneg %p188
      %p313 = pneg %p185
      %p314 = pneg %p209
      %p315 = pneg %p206
      %p316 = pneg %p235
      %p317 = pneg %p232
      %p318 = scmp.lt.s32.totalorder %s20, 1
      %s319 = scalar_select %p318, %s20, 1
      %s320 = smul.addr %s319, 32
      %s321 = smul.addr %s320, 8
      %s322 = scalar_lea.vmem %s9, %s321
      %p323 = scmp.lt.s32.totalorder %s20, 1
      %s324 = scalar_select %p323, %s20, 1
      %s325 = smul.addr %s324, 32
      %s326 = smul.addr %s325, 4
      %s327 = scalar_lea.vmem %s0, %s326
      %p328 = scmp.lt.s32.totalorder %s20, 1
      %s329 = scalar_select %p328, %s20, 1
      %s330 = smul.addr %s329, 32
      %s331 = smul.addr %s330, 8
      %s332 = scalar_lea.vmem %s9, %s331
      %v334 = vld [vmem:[%s327] sm:$0xf]
      %v335 = vld [vmem:[%s327 + $0x4] sm:$0xf]
      %v336 = vld [vmem:[%s327 + $0x8] sm:$0xf]
      %v337 = vld [vmem:[%s327 + $0xc] sm:$0xf]
      %v338 = vld [vmem:[%s327 + $0x10] sm:$0xf]
      %v339 = vld [vmem:[%s327 + $0x14] sm:$0xf]
      %v340 = vld [vmem:[%s327 + $0x18] sm:$0xf]
      %v341 = vld [vmem:[%s327 + $0x1c] sm:$0xf]
      %v342 = vld [vmem:[%s327 + $0x20] sm:$0xf]
      %v343 = vld [vmem:[%s327 + $0x24] sm:$0xf]
      %v344 = vld [vmem:[%s327 + $0x28] sm:$0xf]
      %v345 = vld [vmem:[%s327 + $0x2c] sm:$0xf]
      %v346 = vld [vmem:[%s327 + $0x30] sm:$0xf]
      %v347 = vld [vmem:[%s327 + $0x34] sm:$0xf]
      %v348 = vld [vmem:[%s327 + $0x38] sm:$0xf]
      %v349 = vld [vmem:[%s327 + $0x3c] sm:$0xf]
      %v350 = vld [vmem:[%s327 + $0x40] sm:$0xf]
      %v351 = vld [vmem:[%s327 + $0x44] sm:$0xf]
      %v352 = vld [vmem:[%s327 + $0x48] sm:$0xf]
      %v353 = vld [vmem:[%s327 + $0x4c] sm:$0xf]
      %v354 = vld [vmem:[%s327 + $0x50] sm:$0xf]
      %v355 = vld [vmem:[%s327 + $0x54] sm:$0xf]
      %v356 = vld [vmem:[%s327 + $0x58] sm:$0xf]
      %v357 = vld [vmem:[%s327 + $0x5c] sm:$0xf]
      %v358 = vld [vmem:[%s327 + $0x60] sm:$0xf]
      %v359 = vld [vmem:[%s327 + $0x64] sm:$0xf]
      %v360 = vld [vmem:[%s327 + $0x68] sm:$0xf]
      %v361 = vld [vmem:[%s327 + $0x6c] sm:$0xf]
      %v362 = vld [vmem:[%s327 + $0x70] sm:$0xf]
      %v363 = vld [vmem:[%s327 + $0x74] sm:$0xf]
      %v364 = vld [vmem:[%s327 + $0x78] sm:$0xf]
      %v365 = vld [vmem:[%s327 + $0x7c] sm:$0xf]
      %v366 = vld [vmem:[%s1] sm:$0xff]
      %v367 = vld [vmem:[%s1 + $0x8] sm:$0xff]
      %v368 = vld [vmem:[%s1 + $0x10] sm:$0xff]
      %v369 = vld [vmem:[%s1 + $0x18] sm:$0xff]
      %v370 = vld [vmem:[%s1 + $0x20] sm:$0xff]
      %v371 = vld [vmem:[%s1 + $0x28] sm:$0xff]
      %v372 = vld [vmem:[%s1 + $0x30] sm:$0xff]
      %v373 = vld [vmem:[%s1 + $0x38] sm:$0xff]
      %v374 = vld [vmem:[%s1 + $0x40] sm:$0xff]
      %v375 = vld [vmem:[%s1 + $0x48] sm:$0xff]
      %v376 = vld [vmem:[%s1 + $0x50] sm:$0xff]
      %v377 = vld [vmem:[%s1 + $0x58] sm:$0xff]
      %v378 = vld [vmem:[%s1 + $0x60] sm:$0xff]
      %v379 = vld [vmem:[%s1 + $0x68] sm:$0xff]
      %v380 = vld [vmem:[%s1 + $0x70] sm:$0xff]
      %v381 = vld [vmem:[%s1 + $0x78] sm:$0xff]
      %v382 = vld [vmem:[%s1 + $0x80] sm:$0xff]
      %v383 = vld [vmem:[%s1 + $0x88] sm:$0xff]
      %v384 = vld [vmem:[%s1 + $0x90] sm:$0xff]
      %v385 = vld [vmem:[%s1 + $0x98] sm:$0xff]
      %v406 = vunpack.c.l.b16 %v366
      %v407 = vunpack.c.h.b16 %v366
      %v408 = vunpack.c.l.b16 %v367
      %v409 = vunpack.c.h.b16 %v367
      %v410 = vunpack.c.l.b16 %v368
      %v411 = vunpack.c.h.b16 %v368
      %v412 = vunpack.c.l.b16 %v369
      %v413 = vunpack.c.h.b16 %v369
      %v414 = vunpack.c.l.b16 %v370
      %v415 = vunpack.c.h.b16 %v370
      %v416 = vunpack.c.l.b16 %v371
      %v417 = vunpack.c.h.b16 %v371
      %v418 = vunpack.c.l.b16 %v372
      %v419 = vunpack.c.h.b16 %v372
      %v420 = vunpack.c.l.b16 %v373
      %v421 = vunpack.c.h.b16 %v373
      %v422 = vunpack.c.l.b16 %v374
      %v423 = vunpack.c.h.b16 %v374
      %v424 = vunpack.c.l.b16 %v375
      %v425 = vunpack.c.h.b16 %v375
      %v426 = vunpack.c.l.b16 %v376
      %v427 = vunpack.c.h.b16 %v376
      %v428 = vunpack.c.l.b16 %v377
      %v429 = vunpack.c.h.b16 %v377
      %v430 = vunpack.c.l.b16 %v378
      %v431 = vunpack.c.h.b16 %v378
      %v432 = vunpack.c.l.b16 %v379
      %v433 = vunpack.c.h.b16 %v379
      %v434 = vunpack.c.l.b16 %v380
      %v435 = vunpack.c.h.b16 %v380
      %v436 = vunpack.c.l.b16 %v381
      %v437 = vunpack.c.h.b16 %v381
      %v438 = vunpack.c.l.b16 %v382
      %v439 = vunpack.c.h.b16 %v382
      %v440 = vunpack.c.l.b16 %v383
      %v441 = vunpack.c.h.b16 %v383
      %v442 = vunpack.c.l.b16 %v384
      %v443 = vunpack.c.h.b16 %v384
      %v444 = vunpack.c.l.b16 %v385
      %v445 = vunpack.c.h.b16 %v385
      %v446 = vpack.c.b16 %v408, %v406
      %v447 = vpack.c.b16 %v409, %v407
      %v448 = vpack.c.b16 %v412, %v410
      %v449 = vpack.c.b16 %v413, %v411
      %v450 = vpack.c.b16 %v416, %v414
      %v451 = vpack.c.b16 %v417, %v415
      %v452 = vpack.c.b16 %v420, %v418
      %v453 = vpack.c.b16 %v421, %v419
      %v454 = vpack.c.b16 %v424, %v422
      %v455 = vpack.c.b16 %v425, %v423
      %v456 = vpack.c.b16 %v428, %v426
      %v457 = vpack.c.b16 %v429, %v427
      %v458 = vpack.c.b16 %v432, %v430
      %v459 = vpack.c.b16 %v433, %v431
      %v460 = vpack.c.b16 %v436, %v434
      %v461 = vpack.c.b16 %v437, %v435
      %v462 = vpack.c.b16 %v440, %v438
      %v463 = vpack.c.b16 %v441, %v439
      %v464 = vpack.c.b16 %v444, %v442
      %v465 = vpack.c.b16 %v445, %v443
      %v518 = vunpack.c.l.b16 %v334
      %v519 = vunpack.c.l.b16 %v335
      %v520 = vunpack.c.l.b16 %v336
      %v521 = vunpack.c.l.b16 %v337
      %v522 = vunpack.c.l.b16 %v338
      %v523 = vunpack.c.l.b16 %v339
      %v524 = vunpack.c.l.b16 %v340
      %v525 = vunpack.c.l.b16 %v341
      %v526 = vunpack.c.l.b16 %v342
      %v527 = vunpack.c.l.b16 %v343
      %v528 = vunpack.c.l.b16 %v344
      %v529 = vunpack.c.l.b16 %v345
      %v530 = vunpack.c.l.b16 %v346
      %v531 = vunpack.c.l.b16 %v347
      %v532 = vunpack.c.l.b16 %v348
      %v533 = vunpack.c.l.b16 %v349
      %v534 = vunpack.c.l.b16 %v350
      %v535 = vunpack.c.l.b16 %v351
      %v536 = vunpack.c.l.b16 %v352
      %v537 = vunpack.c.l.b16 %v353
      %v538 = vunpack.c.l.b16 %v354
      %v539 = vunpack.c.l.b16 %v355
      %v540 = vunpack.c.l.b16 %v356
      %v541 = vunpack.c.l.b16 %v357
      %v542 = vunpack.c.l.b16 %v358
      %v543 = vunpack.c.l.b16 %v359
      %v544 = vunpack.c.l.b16 %v360
      %v545 = vunpack.c.l.b16 %v361
      %v546 = vunpack.c.l.b16 %v362
      %v547 = vunpack.c.l.b16 %v363
      %v548 = vunpack.c.l.b16 %v364
      %v549 = vunpack.c.l.b16 %v365
      %v550 = vpack.c.b16 %v519, %v518
      %v551 = vpack.c.b16 %v521, %v520
      %v552 = vpack.c.b16 %v523, %v522
      %v553 = vpack.c.b16 %v525, %v524
      %v554 = vpack.c.b16 %v527, %v526
      %v555 = vpack.c.b16 %v529, %v528
      %v556 = vpack.c.b16 %v531, %v530
      %v557 = vpack.c.b16 %v533, %v532
      %v558 = vpack.c.b16 %v535, %v534
      %v559 = vpack.c.b16 %v537, %v536
      %v560 = vpack.c.b16 %v539, %v538
      %v561 = vpack.c.b16 %v541, %v540
      %v562 = vpack.c.b16 %v543, %v542
      %v563 = vpack.c.b16 %v545, %v544
      %v564 = vpack.c.b16 %v547, %v546
      %v565 = vpack.c.b16 %v549, %v548
      %582 = vmatpush.bf16.msra.mxu0 %v557
      %583 = vmatpush.bf16.msra.mxu0 %v556
      %584 = vmatpush.bf16.msra.mxu0 %v555
      %585 = vmatpush.bf16.msra.mxu0 %v554
      %586 = vmatpush.bf16.msra.mxu0 %v553
      %587 = vmatpush.bf16.msra.mxu0 %v552
      %588 = vmatpush.bf16.msra.mxu0 %v551
      %589 = vmatpush.bf16.msra.mxu0 %v550
      %590 = vmatmul.bf16.gmra.mxu0 %v446
      %v591 = vpop.f32.mrf.mxu0
      %v592 = vadd.f32 0.0, %v591
      %v593 = vpop.f32.mrf.mxu0
      %v594 = vadd.f32 0.0, %v593
      %595 = vmatmul.bf16.gmra.mxu0 %v448
      %v596 = vpop.f32.mrf.mxu0
      %v597 = vadd.f32 0.0, %v596
      %v598 = vpop.f32.mrf.mxu0
      %v599 = vadd.f32 0.0, %v598
      %600 = vmatmul.bf16.gmra.mxu0 %v450
      %v601 = vpop.f32.mrf.mxu0
      %v602 = vadd.f32 0.0, %v601
      %v603 = vpop.f32.mrf.mxu0
      %v604 = vadd.f32 0.0, %v603
      %605 = vmatmul.bf16.gmra.mxu0 %v452
      %v606 = vpop.f32.mrf.mxu0
      %v607 = vadd.f32 0.0, %v606
      %v608 = vpop.f32.mrf.mxu0
      %v609 = vadd.f32 0.0, %v608
      %610 = vmatmul.bf16.gmra.mxu0 %v454
      %v611 = vpop.f32.mrf.mxu0
      %v612 = vadd.f32 0.0, %v611
      %v613 = vpop.f32.mrf.mxu0
      %v614 = vadd.f32 0.0, %v613
      %615 = vmatmul.bf16.gmra.mxu0 %v456
      %v616 = vpop.f32.mrf.mxu0
      %v617 = vadd.f32 0.0, %v616
      %v618 = vpop.f32.mrf.mxu0
      %v619 = vadd.f32 0.0, %v618
      %620 = vmatmul.bf16.gmra.mxu0 %v458
      %v621 = vpop.f32.mrf.mxu0
      %v622 = vadd.f32 0.0, %v621
      %v623 = vpop.f32.mrf.mxu0
      %v624 = vadd.f32 0.0, %v623
      %625 = vmatmul.bf16.gmra.mxu0 %v460
      %v626 = vpop.f32.mrf.mxu0
      %v627 = vadd.f32 0.0, %v626
      %v628 = vpop.f32.mrf.mxu0
      %v629 = vadd.f32 0.0, %v628
      %630 = vmatmul.bf16.gmra.mxu0 %v462
      %v631 = vpop.f32.mrf.mxu0
      %v632 = vadd.f32 0.0, %v631
      %v633 = vpop.f32.mrf.mxu0
      %v634 = vadd.f32 0.0, %v633
      %635 = vmatmul.bf16.gmra.mxu0 %v464
      %v636 = vpop.f32.mrf.mxu0
      %v637 = vadd.f32 0.0, %v636
      %v638 = vpop.f32.mrf.mxu0
      %v639 = vadd.f32 0.0, %v638
      %640 = vdwg.mxu0
      %641 = vmatpush.bf16.msra.mxu0 %v565
      %642 = vmatpush.bf16.msra.mxu0 %v564
      %643 = vmatpush.bf16.msra.mxu0 %v563
      %644 = vmatpush.bf16.msra.mxu0 %v562
      %645 = vmatpush.bf16.msra.mxu0 %v561
      %646 = vmatpush.bf16.msra.mxu0 %v560
      %647 = vmatpush.bf16.msra.mxu0 %v559
      %648 = vmatpush.bf16.msra.mxu0 %v558
      %649 = vmatmul.bf16.gmra.mxu0 %v447
      %v650 = vpop.f32.mrf.mxu0
      %v651 = vadd.f32 %v592, %v650
      %v652 = vpop.f32.mrf.mxu0
      %v653 = vadd.f32 %v594, %v652
      %654 = vmatmul.bf16.gmra.mxu0 %v449
      %v655 = vpop.f32.mrf.mxu0
      %v656 = vadd.f32 %v597, %v655
      %v657 = vpop.f32.mrf.mxu0
      %v658 = vadd.f32 %v599, %v657
      %659 = vmatmul.bf16.gmra.mxu0 %v451
      %v660 = vpop.f32.mrf.mxu0
      %v661 = vadd.f32 %v602, %v660
      %v662 = vpop.f32.mrf.mxu0
      %v663 = vadd.f32 %v604, %v662
      %664 = vmatmul.bf16.gmra.mxu0 %v453
      %v665 = vpop.f32.mrf.mxu0
      %v666 = vadd.f32 %v607, %v665
      %v667 = vpop.f32.mrf.mxu0
      %v668 = vadd.f32 %v609, %v667
      %669 = vmatmul.bf16.gmra.mxu0 %v455
      %v670 = vpop.f32.mrf.mxu0
      %v671 = vadd.f32 %v612, %v670
      %v672 = vpop.f32.mrf.mxu0
      %v673 = vadd.f32 %v614, %v672
      %674 = vmatmul.bf16.gmra.mxu0 %v457
      %v675 = vpop.f32.mrf.mxu0
      %v676 = vadd.f32 %v617, %v675
      %v677 = vpop.f32.mrf.mxu0
      %v678 = vadd.f32 %v619, %v677
      %679 = vmatmul.bf16.gmra.mxu0 %v459
      %v680 = vpop.f32.mrf.mxu0
      %v681 = vadd.f32 %v622, %v680
      %v682 = vpop.f32.mrf.mxu0
      %v683 = vadd.f32 %v624, %v682
      %684 = vmatmul.bf16.gmra.mxu0 %v461
      %v685 = vpop.f32.mrf.mxu0
      %v686 = vadd.f32 %v627, %v685
      %v687 = vpop.f32.mrf.mxu0
      %v688 = vadd.f32 %v629, %v687
      %689 = vmatmul.bf16.gmra.mxu0 %v463
      %v690 = vpop.f32.mrf.mxu0
      %v691 = vadd.f32 %v632, %v690
      %v692 = vpop.f32.mrf.mxu0
      %v693 = vadd.f32 %v634, %v692
      %694 = vmatmul.bf16.gmra.mxu0 %v465
      %v695 = vpop.f32.mrf.mxu0
      %v696 = vadd.f32 %v637, %v695
      %v697 = vpop.f32.mrf.mxu0
      %v698 = vadd.f32 %v639, %v697
      %699 = vdwg.mxu0
      %v700 = vpack.c.bf16 %v651, %v651
      %v701 = vpack.c.bf16 %v653, %v653
      %v702 = vpack.c.bf16 %v656, %v656
      %v703 = vpack.c.bf16 %v658, %v658
      %v704 = vpack.c.bf16 %v661, %v661
      %v705 = vpack.c.bf16 %v663, %v663
      %v706 = vpack.c.bf16 %v666, %v666
      %v707 = vpack.c.bf16 %v668, %v668
      %v708 = vpack.c.bf16 %v671, %v671
      %v709 = vpack.c.bf16 %v673, %v673
      %v710 = vpack.c.bf16 %v676, %v676
      %v711 = vpack.c.bf16 %v678, %v678
      %v712 = vpack.c.bf16 %v681, %v681
      %v713 = vpack.c.bf16 %v683, %v683
      %v714 = vpack.c.bf16 %v686, %v686
      %v715 = vpack.c.bf16 %v688, %v688
      %v716 = vpack.c.bf16 %v691, %v691
      %v717 = vpack.c.bf16 %v693, %v693
      %v718 = vpack.c.bf16 %v696, %v696
      %v719 = vpack.c.bf16 %v698, %v698
      %v720 = vld [vmem:[%s3] sm:$0xf]
      %v721 = vld [vmem:[%s4] sm:$0xf]
      %v722 = vld [vmem:[%s2] sm:$0xf]
      %v728 = vunpack.c.l.b16 %v700
      %v729 = vunpack.c.l.b16 %v701
      %v730 = vunpack.c.l.b16 %v702
      %v731 = vunpack.c.l.b16 %v703
      %v732 = vunpack.c.l.b16 %v704
      %v733 = vpack.c.b16 %v729, %v728
      %v734 = vpack.c.b16 %v731, %v730
      %v735 = vpack.c.b16 %v732, %v732
      %vm736 = vcmask 64512
      %v738 = vsel %vm736, %v733, 0
      %v741 = vsel %vm736, %v734, 0
      %v744 = vsel %vm736, %v735, 0
      %vm746 = vcmask 1043456
      %v748 = vsel %vm746, %v722, 0
      %750 = vmatpush.bf16.msra.mxu0 0
      %751 = vmatpush.bf16.msra.mxu0 0
      %752 = vmatpush.bf16.msra.mxu0 0
      %753 = vmatpush.bf16.msra.mxu0 0
      %754 = vmatpush.bf16.msra.mxu0 0
      %755 = vmatpush.bf16.msra.mxu0 0
      %756 = vmatpush.bf16.msra.mxu0 0
      %757 = vmatpush.bf16.msra.mxu0 %v748
      %758 = vmatmul.bf16.gmra.mxu0 %v738
      %v759 = vpop.f32.mrf.mxu0
      %v760 = vadd.f32 0.0, %v759
      %v761 = vpop.f32.mrf.mxu0
      %v762 = vadd.f32 0.0, %v761
      %763 = vmatmul.bf16.gmra.mxu0 %v741
      %v764 = vpop.f32.mrf.mxu0
      %v765 = vadd.f32 0.0, %v764
      %v766 = vpop.f32.mrf.mxu0
      %v767 = vadd.f32 0.0, %v766
      %768 = vmatmul.bf16.gmra.mxu0 %v744
      %v769 = vpop.f32.mrf.mxu0
      %v770 = vadd.f32 0.0, %v769
      %v771 = vpop.f32.mrf.mxu0
      %772 = vdwg.mxu0
      %v773 = vperm.slane %v720, 0
      %v774 = vmul.f32 %v760, %v773
      %v775 = vmul.f32 %v762, %v773
      %v776 = vmul.f32 %v765, %v773
      %v777 = vmul.f32 %v767, %v773
      %v778 = vmul.f32 %v770, %v773
      %v779 = vperm.slane %v721, 0
      %v780 = vadd.f32 %v774, %v779
      %v781 = vadd.f32 %v775, %v779
      %v782 = vadd.f32 %v776, %v779
      %v783 = vadd.f32 %v777, %v779
      %v784 = vadd.f32 %v778, %v779
      %v785 = vmax.f32 %v780, 0.0
      %v786 = vmax.f32 %v781, 0.0
      %v787 = vmax.f32 %v782, 0.0
      %v788 = vmax.f32 %v783, 0.0
      %v789 = vmax.f32 %v784, 0.0
      %v790 = vld [vmem:[%s5] sm:$0xf]
      %v791 = vld [vmem:[%s5 + $0x4] sm:$0xf]
      %v792 = vld [vmem:[%s5 + $0x8] sm:$0xf]
      %v793 = vld [vmem:[%s5 + $0xc] sm:$0xf]
      %v794 = vld [vmem:[%s5 + $0x10] sm:$0xf]
      %v795 = vld [vmem:[%s5 + $0x14] sm:$0xf]
      %v796 = vld [vmem:[%s5 + $0x18] sm:$0xf]
      %v797 = vld [vmem:[%s5 + $0x1c] sm:$0xf]
      %v798 = vld [vmem:[%s5 + $0x20] sm:$0xf]
      %v799 = vld [vmem:[%s5 + $0x24] sm:$0xf]
      %v800 = vld [vmem:[%s5 + $0x28] sm:$0xf]
      %v801 = vld [vmem:[%s5 + $0x2c] sm:$0xf]
      %v802 = vld [vmem:[%s5 + $0x30] sm:$0xf]
      %v803 = vld [vmem:[%s5 + $0x34] sm:$0xf]
      %v804 = vld [vmem:[%s5 + $0x38] sm:$0xf]
      %v805 = vld [vmem:[%s5 + $0x3c] sm:$0xf]
      %v806 = vld [vmem:[%s5 + $0x40] sm:$0xf]
      %v807 = vld [vmem:[%s5 + $0x44] sm:$0xf]
      %v808 = vld [vmem:[%s5 + $0x48] sm:$0xf]
      %v809 = vld [vmem:[%s5 + $0x4c] sm:$0xf]
      %v810 = vld [vmem:[%s5 + $0x50] sm:$0xf]
      %v811 = vld [vmem:[%s5 + $0x54] sm:$0xf]
      %v812 = vld [vmem:[%s5 + $0x58] sm:$0xf]
      %v813 = vld [vmem:[%s5 + $0x5c] sm:$0xf]
      %v814 = vld [vmem:[%s5 + $0x60] sm:$0xf]
      %v815 = vld [vmem:[%s5 + $0x64] sm:$0xf]
      %v816 = vld [vmem:[%s5 + $0x68] sm:$0xf]
      %v817 = vld [vmem:[%s5 + $0x6c] sm:$0xf]
      %v818 = vld [vmem:[%s5 + $0x70] sm:$0xf]
      %v819 = vld [vmem:[%s5 + $0x74] sm:$0xf]
      %v820 = vld [vmem:[%s5 + $0x78] sm:$0xf]
      %v821 = vld [vmem:[%s5 + $0x7c] sm:$0xf]
      %v822 = vpack.c.bf16 %v786, %v785
      %v823 = vpack.c.bf16 %v788, %v787
      %v824 = vpack.c.bf16 %v789, %v789
      %v857 = vunpack.c.l.b16 %v790
      %v858 = vunpack.c.l.b16 %v791
      %v859 = vunpack.c.l.b16 %v792
      %v860 = vunpack.c.l.b16 %v793
      %v861 = vunpack.c.l.b16 %v794
      %v862 = vunpack.c.l.b16 %v795
      %v863 = vunpack.c.l.b16 %v796
      %v864 = vunpack.c.l.b16 %v797
      %v865 = vunpack.c.l.b16 %v798
      %v866 = vunpack.c.l.b16 %v799
      %v867 = vunpack.c.l.b16 %v800
      %v868 = vunpack.c.l.b16 %v801
      %v869 = vunpack.c.l.b16 %v802
      %v870 = vunpack.c.l.b16 %v803
      %v871 = vunpack.c.l.b16 %v804
      %v872 = vunpack.c.l.b16 %v805
      %v873 = vunpack.c.l.b16 %v806
      %v874 = vunpack.c.l.b16 %v807
      %v875 = vunpack.c.l.b16 %v808
      %v876 = vunpack.c.l.b16 %v809
      %v877 = vunpack.c.l.b16 %v810
      %v878 = vunpack.c.l.b16 %v811
      %v879 = vunpack.c.l.b16 %v812
      %v880 = vunpack.c.l.b16 %v813
      %v881 = vunpack.c.l.b16 %v814
      %v882 = vunpack.c.l.b16 %v815
      %v883 = vunpack.c.l.b16 %v816
      %v884 = vunpack.c.l.b16 %v817
      %v885 = vunpack.c.l.b16 %v818
      %v886 = vunpack.c.l.b16 %v819
      %v887 = vunpack.c.l.b16 %v820
      %v888 = vunpack.c.l.b16 %v821
      %v889 = vpack.c.b16 %v858, %v857
      %v890 = vpack.c.b16 %v860, %v859
      %v891 = vpack.c.b16 %v862, %v861
      %v892 = vpack.c.b16 %v864, %v863
      %v893 = vpack.c.b16 %v866, %v865
      %v894 = vpack.c.b16 %v868, %v867
      %v895 = vpack.c.b16 %v870, %v869
      %v896 = vpack.c.b16 %v872, %v871
      %v897 = vpack.c.b16 %v874, %v873
      %v898 = vpack.c.b16 %v876, %v875
      %v899 = vpack.c.b16 %v878, %v877
      %v900 = vpack.c.b16 %v880, %v879
      %v901 = vpack.c.b16 %v882, %v881
      %v902 = vpack.c.b16 %v884, %v883
      %v903 = vpack.c.b16 %v886, %v885
      %v904 = vpack.c.b16 %v888, %v887
      %vm905 = vcmask 326656
      %v907 = vsel %vm905, %v889, 0
      %v910 = vsel %vm905, %v890, 0
      %v913 = vsel %vm905, %v891, 0
      %v916 = vsel %vm905, %v892, 0
      %v919 = vsel %vm905, %v893, 0
      %v922 = vsel %vm905, %v894, 0
      %v925 = vsel %vm905, %v895, 0
      %v928 = vsel %vm905, %v896, 0
      %v931 = vsel %vm905, %v897, 0
      %v934 = vsel %vm905, %v898, 0
      %v937 = vsel %vm905, %v899, 0
      %v940 = vsel %vm905, %v900, 0
      %v943 = vsel %vm905, %v901, 0
      %v946 = vsel %vm905, %v902, 0
      %v949 = vsel %vm905, %v903, 0
      %v952 = vsel %vm905, %v904, 0
      %v955 = vsel %vm746, %v824, 0
      %957 = vmatpush.bf16.msra.mxu0 0
      %958 = vmatpush.bf16.msra.mxu0 0
      %959 = vmatpush.bf16.msra.mxu0 0
      %960 = vmatpush.bf16.msra.mxu0 0
      %961 = vmatpush.bf16.msra.mxu0 0
      %962 = vmatpush.bf16.msra.mxu0 %v955
      %963 = vmatpush.bf16.msra.mxu0 %v823
      %964 = vmatpush.bf16.msra.mxu0 %v822
      %965 = vmatmul.bf16.gmra.mxu0 %v907
      %v966 = vpop.f32.mrf.mxu0
      %v967 = vadd.f32 0.0, %v966
      %v968 = vpop.f32.mrf.mxu0
      %v969 = vadd.f32 0.0, %v968
      %970 = vmatmul.bf16.gmra.mxu0 %v910
      %v971 = vpop.f32.mrf.mxu0
      %v972 = vadd.f32 0.0, %v971
      %v973 = vpop.f32.mrf.mxu0
      %v974 = vadd.f32 0.0, %v973
      %975 = vmatmul.bf16.gmra.mxu0 %v913
      %v976 = vpop.f32.mrf.mxu0
      %v977 = vadd.f32 0.0, %v976
      %v978 = vpop.f32.mrf.mxu0
      %v979 = vadd.f32 0.0, %v978
      %980 = vmatmul.bf16.gmra.mxu0 %v916
      %v981 = vpop.f32.mrf.mxu0
      %v982 = vadd.f32 0.0, %v981
      %v983 = vpop.f32.mrf.mxu0
      %v984 = vadd.f32 0.0, %v983
      %985 = vmatmul.bf16.gmra.mxu0 %v919
      %v986 = vpop.f32.mrf.mxu0
      %v987 = vadd.f32 0.0, %v986
      %v988 = vpop.f32.mrf.mxu0
      %v989 = vadd.f32 0.0, %v988
      %990 = vmatmul.bf16.gmra.mxu0 %v922
      %v991 = vpop.f32.mrf.mxu0
      %v992 = vadd.f32 0.0, %v991
      %v993 = vpop.f32.mrf.mxu0
      %v994 = vadd.f32 0.0, %v993
      %995 = vmatmul.bf16.gmra.mxu0 %v925
      %v996 = vpop.f32.mrf.mxu0
      %v997 = vadd.f32 0.0, %v996
      %v998 = vpop.f32.mrf.mxu0
      %v999 = vadd.f32 0.0, %v998
      %1000 = vmatmul.bf16.gmra.mxu0 %v928
      %v1001 = vpop.f32.mrf.mxu0
      %v1002 = vadd.f32 0.0, %v1001
      %v1003 = vpop.f32.mrf.mxu0
      %v1004 = vadd.f32 0.0, %v1003
      %1005 = vmatmul.bf16.gmra.mxu0 %v931
      %v1006 = vpop.f32.mrf.mxu0
      %v1007 = vadd.f32 0.0, %v1006
      %v1008 = vpop.f32.mrf.mxu0
      %v1009 = vadd.f32 0.0, %v1008
      %1010 = vmatmul.bf16.gmra.mxu0 %v934
      %v1011 = vpop.f32.mrf.mxu0
      %v1012 = vadd.f32 0.0, %v1011
      %v1013 = vpop.f32.mrf.mxu0
      %v1014 = vadd.f32 0.0, %v1013
      %1015 = vmatmul.bf16.gmra.mxu0 %v937
      %v1016 = vpop.f32.mrf.mxu0
      %v1017 = vadd.f32 0.0, %v1016
      %v1018 = vpop.f32.mrf.mxu0
      %v1019 = vadd.f32 0.0, %v1018
      %1020 = vmatmul.bf16.gmra.mxu0 %v940
      %v1021 = vpop.f32.mrf.mxu0
      %v1022 = vadd.f32 0.0, %v1021
      %v1023 = vpop.f32.mrf.mxu0
      %v1024 = vadd.f32 0.0, %v1023
      %1025 = vmatmul.bf16.gmra.mxu0 %v943
      %v1026 = vpop.f32.mrf.mxu0
      %v1027 = vadd.f32 0.0, %v1026
      %v1028 = vpop.f32.mrf.mxu0
      %v1029 = vadd.f32 0.0, %v1028
      %1030 = vmatmul.bf16.gmra.mxu0 %v946
      %v1031 = vpop.f32.mrf.mxu0
      %v1032 = vadd.f32 0.0, %v1031
      %v1033 = vpop.f32.mrf.mxu0
      %v1034 = vadd.f32 0.0, %v1033
      %1035 = vmatmul.bf16.gmra.mxu0 %v949
      %v1036 = vpop.f32.mrf.mxu0
      %v1037 = vadd.f32 0.0, %v1036
      %v1038 = vpop.f32.mrf.mxu0
      %v1039 = vadd.f32 0.0, %v1038
      %1040 = vmatmul.bf16.gmra.mxu0 %v952
      %v1041 = vpop.f32.mrf.mxu0
      %v1042 = vadd.f32 0.0, %v1041
      %v1043 = vpop.f32.mrf.mxu0
      %v1044 = vadd.f32 0.0, %v1043
      %1045 = vdwg.mxu0
      %v1046 = vpack.c.bf16 %v967, %v967
      %v1047 = vpack.c.bf16 %v969, %v969
      %v1048 = vpack.c.bf16 %v972, %v972
      %v1049 = vpack.c.bf16 %v974, %v974
      %v1050 = vpack.c.bf16 %v977, %v977
      %v1051 = vpack.c.bf16 %v979, %v979
      %v1052 = vpack.c.bf16 %v982, %v982
      %v1053 = vpack.c.bf16 %v984, %v984
      %v1054 = vpack.c.bf16 %v987, %v987
      %v1055 = vpack.c.bf16 %v989, %v989
      %v1056 = vpack.c.bf16 %v992, %v992
      %v1057 = vpack.c.bf16 %v994, %v994
      %v1058 = vpack.c.bf16 %v997, %v997
      %v1059 = vpack.c.bf16 %v999, %v999
      %v1060 = vpack.c.bf16 %v1002, %v1002
      %v1061 = vpack.c.bf16 %v1004, %v1004
      %v1062 = vpack.c.bf16 %v1007, %v1007
      %v1063 = vpack.c.bf16 %v1009, %v1009
      %v1064 = vpack.c.bf16 %v1012, %v1012
      %v1065 = vpack.c.bf16 %v1014, %v1014
      %v1066 = vpack.c.bf16 %v1017, %v1017
      %v1067 = vpack.c.bf16 %v1019, %v1019
      %v1068 = vpack.c.bf16 %v1022, %v1022
      %v1069 = vpack.c.bf16 %v1024, %v1024
      %v1070 = vpack.c.bf16 %v1027, %v1027
      %v1071 = vpack.c.bf16 %v1029, %v1029
      %v1072 = vpack.c.bf16 %v1032, %v1032
      %v1073 = vpack.c.bf16 %v1034, %v1034
      %v1074 = vpack.c.bf16 %v1037, %v1037
      %v1075 = vpack.c.bf16 %v1039, %v1039
      %v1076 = vpack.c.bf16 %v1042, %v1042
      %v1077 = vpack.c.bf16 %v1044, %v1044
      %s1078 = scalar_lea.vmem %s2, 4
      %v1079 = vld [vmem:[%s1078] sm:$0xf]
      %v1085 = vunpack.c.l.b16 %v705
      %v1086 = vunpack.c.l.b16 %v706
      %v1087 = vunpack.c.l.b16 %v707
      %v1088 = vunpack.c.l.b16 %v708
      %v1089 = vunpack.c.l.b16 %v709
      %v1090 = vpack.c.b16 %v1086, %v1085
      %v1091 = vpack.c.b16 %v1088, %v1087
      %v1092 = vpack.c.b16 %v1089, %v1089
      %v1094 = vsel %vm736, %v1090, 0
      %v1097 = vsel %vm736, %v1091, 0
      %v1100 = vsel %vm736, %v1092, 0
      %v1103 = vsel %vm746, %v1079, 0
      %1105 = vmatpush.bf16.msra.mxu0 0
      %1106 = vmatpush.bf16.msra.mxu0 0
      %1107 = vmatpush.bf16.msra.mxu0 0
      %1108 = vmatpush.bf16.msra.mxu0 0
      %1109 = vmatpush.bf16.msra.mxu0 0
      %1110 = vmatpush.bf16.msra.mxu0 0
      %1111 = vmatpush.bf16.msra.mxu0 0
      %1112 = vmatpush.bf16.msra.mxu0 %v1103
      %1113 = vmatmul.bf16.gmra.mxu0 %v1094
      %v1114 = vpop.f32.mrf.mxu0
      %v1115 = vadd.f32 0.0, %v1114
      %v1116 = vpop.f32.mrf.mxu0
      %v1117 = vadd.f32 0.0, %v1116
      %1118 = vmatmul.bf16.gmra.mxu0 %v1097
      %v1119 = vpop.f32.mrf.mxu0
      %v1120 = vadd.f32 0.0, %v1119
      %v1121 = vpop.f32.mrf.mxu0
      %v1122 = vadd.f32 0.0, %v1121
      %1123 = vmatmul.bf16.gmra.mxu0 %v1100
      %v1124 = vpop.f32.mrf.mxu0
      %v1125 = vadd.f32 0.0, %v1124
      %v1126 = vpop.f32.mrf.mxu0
      %1127 = vdwg.mxu0
      %v1128 = vperm.slane %v720, 1
      %v1129 = vmul.f32 %v1115, %v1128
      %v1130 = vmul.f32 %v1117, %v1128
      %v1131 = vmul.f32 %v1120, %v1128
      %v1132 = vmul.f32 %v1122, %v1128
      %v1133 = vmul.f32 %v1125, %v1128
      %v1134 = vperm.slane %v721, 1
      %v1135 = vadd.f32 %v1129, %v1134
      %v1136 = vadd.f32 %v1130, %v1134
      %v1137 = vadd.f32 %v1131, %v1134
      %v1138 = vadd.f32 %v1132, %v1134
      %v1139 = vadd.f32 %v1133, %v1134
      %v1140 = vmax.f32 %v1135, 0.0
      %v1141 = vmax.f32 %v1136, 0.0
      %v1142 = vmax.f32 %v1137, 0.0
      %v1143 = vmax.f32 %v1138, 0.0
      %v1144 = vmax.f32 %v1139, 0.0
      %s1145 = scalar_lea.vmem %s5, 128
      %v1146 = vld [vmem:[%s1145] sm:$0xf]
      %v1147 = vld [vmem:[%s1145 + $0x4] sm:$0xf]
      %v1148 = vld [vmem:[%s1145 + $0x8] sm:$0xf]
      %v1149 = vld [vmem:[%s1145 + $0xc] sm:$0xf]
      %v1150 = vld [vmem:[%s1145 + $0x10] sm:$0xf]
      %v1151 = vld [vmem:[%s1145 + $0x14] sm:$0xf]
      %v1152 = vld [vmem:[%s1145 + $0x18] sm:$0xf]
      %v1153 = vld [vmem:[%s1145 + $0x1c] sm:$0xf]
      %v1154 = vld [vmem:[%s1145 + $0x20] sm:$0xf]
      %v1155 = vld [vmem:[%s1145 + $0x24] sm:$0xf]
      %v1156 = vld [vmem:[%s1145 + $0x28] sm:$0xf]
      %v1157 = vld [vmem:[%s1145 + $0x2c] sm:$0xf]
      %v1158 = vld [vmem:[%s1145 + $0x30] sm:$0xf]
      %v1159 = vld [vmem:[%s1145 + $0x34] sm:$0xf]
      %v1160 = vld [vmem:[%s1145 + $0x38] sm:$0xf]
      %v1161 = vld [vmem:[%s1145 + $0x3c] sm:$0xf]
      %v1162 = vld [vmem:[%s1145 + $0x40] sm:$0xf]
      %v1163 = vld [vmem:[%s1145 + $0x44] sm:$0xf]
      %v1164 = vld [vmem:[%s1145 + $0x48] sm:$0xf]
      %v1165 = vld [vmem:[%s1145 + $0x4c] sm:$0xf]
      %v1166 = vld [vmem:[%s1145 + $0x50] sm:$0xf]
      %v1167 = vld [vmem:[%s1145 + $0x54] sm:$0xf]
      %v1168 = vld [vmem:[%s1145 + $0x58] sm:$0xf]
      %v1169 = vld [vmem:[%s1145 + $0x5c] sm:$0xf]
      %v1170 = vld [vmem:[%s1145 + $0x60] sm:$0xf]
      %v1171 = vld [vmem:[%s1145 + $0x64] sm:$0xf]
      %v1172 = vld [vmem:[%s1145 + $0x68] sm:$0xf]
      %v1173 = vld [vmem:[%s1145 + $0x6c] sm:$0xf]
      %v1174 = vld [vmem:[%s1145 + $0x70] sm:$0xf]
      %v1175 = vld [vmem:[%s1145 + $0x74] sm:$0xf]
      %v1176 = vld [vmem:[%s1145 + $0x78] sm:$0xf]
      %v1177 = vld [vmem:[%s1145 + $0x7c] sm:$0xf]
      %v1178 = vpack.c.bf16 %v1141, %v1140
      %v1179 = vpack.c.bf16 %v1143, %v1142
      %v1180 = vpack.c.bf16 %v1144, %v1144
      %v1213 = vunpack.c.l.b16 %v1146
      %v1214 = vunpack.c.l.b16 %v1147
      %v1215 = vunpack.c.l.b16 %v1148
      %v1216 = vunpack.c.l.b16 %v1149
      %v1217 = vunpack.c.l.b16 %v1150
      %v1218 = vunpack.c.l.b16 %v1151
      %v1219 = vunpack.c.l.b16 %v1152
      %v1220 = vunpack.c.l.b16 %v1153
      %v1221 = vunpack.c.l.b16 %v1154
      %v1222 = vunpack.c.l.b16 %v1155
      %v1223 = vunpack.c.l.b16 %v1156
      %v1224 = vunpack.c.l.b16 %v1157
      %v1225 = vunpack.c.l.b16 %v1158
      %v1226 = vunpack.c.l.b16 %v1159
      %v1227 = vunpack.c.l.b16 %v1160
      %v1228 = vunpack.c.l.b16 %v1161
      %v1229 = vunpack.c.l.b16 %v1162
      %v1230 = vunpack.c.l.b16 %v1163
      %v1231 = vunpack.c.l.b16 %v1164
      %v1232 = vunpack.c.l.b16 %v1165
      %v1233 = vunpack.c.l.b16 %v1166
      %v1234 = vunpack.c.l.b16 %v1167
      %v1235 = vunpack.c.l.b16 %v1168
      %v1236 = vunpack.c.l.b16 %v1169
      %v1237 = vunpack.c.l.b16 %v1170
      %v1238 = vunpack.c.l.b16 %v1171
      %v1239 = vunpack.c.l.b16 %v1172
      %v1240 = vunpack.c.l.b16 %v1173
      %v1241 = vunpack.c.l.b16 %v1174
      %v1242 = vunpack.c.l.b16 %v1175
      %v1243 = vunpack.c.l.b16 %v1176
      %v1244 = vunpack.c.l.b16 %v1177
      %v1245 = vpack.c.b16 %v1214, %v1213
      %v1246 = vpack.c.b16 %v1216, %v1215
      %v1247 = vpack.c.b16 %v1218, %v1217
      %v1248 = vpack.c.b16 %v1220, %v1219
      %v1249 = vpack.c.b16 %v1222, %v1221
      %v1250 = vpack.c.b16 %v1224, %v1223
      %v1251 = vpack.c.b16 %v1226, %v1225
      %v1252 = vpack.c.b16 %v1228, %v1227
      %v1253 = vpack.c.b16 %v1230, %v1229
      %v1254 = vpack.c.b16 %v1232, %v1231
      %v1255 = vpack.c.b16 %v1234, %v1233
      %v1256 = vpack.c.b16 %v1236, %v1235
      %v1257 = vpack.c.b16 %v1238, %v1237
      %v1258 = vpack.c.b16 %v1240, %v1239
      %v1259 = vpack.c.b16 %v1242, %v1241
      %v1260 = vpack.c.b16 %v1244, %v1243
      %v1262 = vsel %vm905, %v1245, 0
      %v1265 = vsel %vm905, %v1246, 0
      %v1268 = vsel %vm905, %v1247, 0
      %v1271 = vsel %vm905, %v1248, 0
      %v1274 = vsel %vm905, %v1249, 0
      %v1277 = vsel %vm905, %v1250, 0
      %v1280 = vsel %vm905, %v1251, 0
      %v1283 = vsel %vm905, %v1252, 0
      %v1286 = vsel %vm905, %v1253, 0
      %v1289 = vsel %vm905, %v1254, 0
      %v1292 = vsel %vm905, %v1255, 0
      %v1295 = vsel %vm905, %v1256, 0
      %v1298 = vsel %vm905, %v1257, 0
      %v1301 = vsel %vm905, %v1258, 0
      %v1304 = vsel %vm905, %v1259, 0
      %v1307 = vsel %vm905, %v1260, 0
      %v1310 = vsel %vm746, %v1180, 0
      %1312 = vmatpush.bf16.msra.mxu0 0
      %1313 = vmatpush.bf16.msra.mxu0 0
      %1314 = vmatpush.bf16.msra.mxu0 0
      %1315 = vmatpush.bf16.msra.mxu0 0
      %1316 = vmatpush.bf16.msra.mxu0 0
      %1317 = vmatpush.bf16.msra.mxu0 %v1310
      %1318 = vmatpush.bf16.msra.mxu0 %v1179
      %1319 = vmatpush.bf16.msra.mxu0 %v1178
      %1320 = vmatmul.bf16.gmra.mxu0 %v1262
      %v1321 = vpop.f32.mrf.mxu0
      %v1322 = vadd.f32 0.0, %v1321
      %v1323 = vpop.f32.mrf.mxu0
      %v1324 = vadd.f32 0.0, %v1323
      %1325 = vmatmul.bf16.gmra.mxu0 %v1265
      %v1326 = vpop.f32.mrf.mxu0
      %v1327 = vadd.f32 0.0, %v1326
      %v1328 = vpop.f32.mrf.mxu0
      %v1329 = vadd.f32 0.0, %v1328
      %1330 = vmatmul.bf16.gmra.mxu0 %v1268
      %v1331 = vpop.f32.mrf.mxu0
      %v1332 = vadd.f32 0.0, %v1331
      %v1333 = vpop.f32.mrf.mxu0
      %v1334 = vadd.f32 0.0, %v1333
      %1335 = vmatmul.bf16.gmra.mxu0 %v1271
      %v1336 = vpop.f32.mrf.mxu0
      %v1337 = vadd.f32 0.0, %v1336
      %v1338 = vpop.f32.mrf.mxu0
      %v1339 = vadd.f32 0.0, %v1338
      %1340 = vmatmul.bf16.gmra.mxu0 %v1274
      %v1341 = vpop.f32.mrf.mxu0
      %v1342 = vadd.f32 0.0, %v1341
      %v1343 = vpop.f32.mrf.mxu0
      %v1344 = vadd.f32 0.0, %v1343
      %1345 = vmatmul.bf16.gmra.mxu0 %v1277
      %v1346 = vpop.f32.mrf.mxu0
      %v1347 = vadd.f32 0.0, %v1346
      %v1348 = vpop.f32.mrf.mxu0
      %v1349 = vadd.f32 0.0, %v1348
      %1350 = vmatmul.bf16.gmra.mxu0 %v1280
      %v1351 = vpop.f32.mrf.mxu0
      %v1352 = vadd.f32 0.0, %v1351
      %v1353 = vpop.f32.mrf.mxu0
      %v1354 = vadd.f32 0.0, %v1353
      %1355 = vmatmul.bf16.gmra.mxu0 %v1283
      %v1356 = vpop.f32.mrf.mxu0
      %v1357 = vadd.f32 0.0, %v1356
      %v1358 = vpop.f32.mrf.mxu0
      %v1359 = vadd.f32 0.0, %v1358
      %1360 = vmatmul.bf16.gmra.mxu0 %v1286
      %v1361 = vpop.f32.mrf.mxu0
      %v1362 = vadd.f32 0.0, %v1361
      %v1363 = vpop.f32.mrf.mxu0
      %v1364 = vadd.f32 0.0, %v1363
      %1365 = vmatmul.bf16.gmra.mxu0 %v1289
      %v1366 = vpop.f32.mrf.mxu0
      %v1367 = vadd.f32 0.0, %v1366
      %v1368 = vpop.f32.mrf.mxu0
      %v1369 = vadd.f32 0.0, %v1368
      %1370 = vmatmul.bf16.gmra.mxu0 %v1292
      %v1371 = vpop.f32.mrf.mxu0
      %v1372 = vadd.f32 0.0, %v1371
      %v1373 = vpop.f32.mrf.mxu0
      %v1374 = vadd.f32 0.0, %v1373
      %1375 = vmatmul.bf16.gmra.mxu0 %v1295
      %v1376 = vpop.f32.mrf.mxu0
      %v1377 = vadd.f32 0.0, %v1376
      %v1378 = vpop.f32.mrf.mxu0
      %v1379 = vadd.f32 0.0, %v1378
      %1380 = vmatmul.bf16.gmra.mxu0 %v1298
      %v1381 = vpop.f32.mrf.mxu0
      %v1382 = vadd.f32 0.0, %v1381
      %v1383 = vpop.f32.mrf.mxu0
      %v1384 = vadd.f32 0.0, %v1383
      %1385 = vmatmul.bf16.gmra.mxu0 %v1301
      %v1386 = vpop.f32.mrf.mxu0
      %v1387 = vadd.f32 0.0, %v1386
      %v1388 = vpop.f32.mrf.mxu0
      %v1389 = vadd.f32 0.0, %v1388
      %1390 = vmatmul.bf16.gmra.mxu0 %v1304
      %v1391 = vpop.f32.mrf.mxu0
      %v1392 = vadd.f32 0.0, %v1391
      %v1393 = vpop.f32.mrf.mxu0
      %v1394 = vadd.f32 0.0, %v1393
      %1395 = vmatmul.bf16.gmra.mxu0 %v1307
      %v1396 = vpop.f32.mrf.mxu0
      %v1397 = vadd.f32 0.0, %v1396
      %v1398 = vpop.f32.mrf.mxu0
      %v1399 = vadd.f32 0.0, %v1398
      %1400 = vdwg.mxu0
      %v1401 = vpack.c.bf16 %v1322, %v1322
      %v1402 = vpack.c.bf16 %v1324, %v1324
      %v1403 = vpack.c.bf16 %v1327, %v1327
      %v1404 = vpack.c.bf16 %v1329, %v1329
      %v1405 = vpack.c.bf16 %v1332, %v1332
      %v1406 = vpack.c.bf16 %v1334, %v1334
      %v1407 = vpack.c.bf16 %v1337, %v1337
      %v1408 = vpack.c.bf16 %v1339, %v1339
      %v1409 = vpack.c.bf16 %v1342, %v1342
      %v1410 = vpack.c.bf16 %v1344, %v1344
      %v1411 = vpack.c.bf16 %v1347, %v1347
      %v1412 = vpack.c.bf16 %v1349, %v1349
      %v1413 = vpack.c.bf16 %v1352, %v1352
      %v1414 = vpack.c.bf16 %v1354, %v1354
      %v1415 = vpack.c.bf16 %v1357, %v1357
      %v1416 = vpack.c.bf16 %v1359, %v1359
      %v1417 = vpack.c.bf16 %v1362, %v1362
      %v1418 = vpack.c.bf16 %v1364, %v1364
      %v1419 = vpack.c.bf16 %v1367, %v1367
      %v1420 = vpack.c.bf16 %v1369, %v1369
      %v1421 = vpack.c.bf16 %v1372, %v1372
      %v1422 = vpack.c.bf16 %v1374, %v1374
      %v1423 = vpack.c.bf16 %v1377, %v1377
      %v1424 = vpack.c.bf16 %v1379, %v1379
      %v1425 = vpack.c.bf16 %v1382, %v1382
      %v1426 = vpack.c.bf16 %v1384, %v1384
      %v1427 = vpack.c.bf16 %v1387, %v1387
      %v1428 = vpack.c.bf16 %v1389, %v1389
      %v1429 = vpack.c.bf16 %v1392, %v1392
      %v1430 = vpack.c.bf16 %v1394, %v1394
      %v1431 = vpack.c.bf16 %v1397, %v1397
      %v1432 = vpack.c.bf16 %v1399, %v1399
      %s1433 = scalar_lea.vmem %s2, 8
      %v1434 = vld [vmem:[%s1433] sm:$0xf]
      %v1440 = vunpack.c.l.b16 %v710
      %v1441 = vunpack.c.l.b16 %v711
      %v1442 = vunpack.c.l.b16 %v712
      %v1443 = vunpack.c.l.b16 %v713
      %v1444 = vunpack.c.l.b16 %v714
      %v1445 = vpack.c.b16 %v1441, %v1440
      %v1446 = vpack.c.b16 %v1443, %v1442
      %v1447 = vpack.c.b16 %v1444, %v1444
      %v1449 = vsel %vm736, %v1445, 0
      %v1452 = vsel %vm736, %v1446, 0
      %v1455 = vsel %vm736, %v1447, 0
      %v1458 = vsel %vm746, %v1434, 0
      %1460 = vmatpush.bf16.msra.mxu0 0
      %1461 = vmatpush.bf16.msra.mxu0 0
      %1462 = vmatpush.bf16.msra.mxu0 0
      %1463 = vmatpush.bf16.msra.mxu0 0
      %1464 = vmatpush.bf16.msra.mxu0 0
      %1465 = vmatpush.bf16.msra.mxu0 0
      %1466 = vmatpush.bf16.msra.mxu0 0
      %1467 = vmatpush.bf16.msra.mxu0 %v1458
      %1468 = vmatmul.bf16.gmra.mxu0 %v1449
      %v1469 = vpop.f32.mrf.mxu0
      %v1470 = vadd.f32 0.0, %v1469
      %v1471 = vpop.f32.mrf.mxu0
      %v1472 = vadd.f32 0.0, %v1471
      %1473 = vmatmul.bf16.gmra.mxu0 %v1452
      %v1474 = vpop.f32.mrf.mxu0
      %v1475 = vadd.f32 0.0, %v1474
      %v1476 = vpop.f32.mrf.mxu0
      %v1477 = vadd.f32 0.0, %v1476
      %1478 = vmatmul.bf16.gmra.mxu0 %v1455
      %v1479 = vpop.f32.mrf.mxu0
      %v1480 = vadd.f32 0.0, %v1479
      %v1481 = vpop.f32.mrf.mxu0
      %1482 = vdwg.mxu0
      %v1483 = vperm.slane %v720, 2
      %v1484 = vmul.f32 %v1470, %v1483
      %v1485 = vmul.f32 %v1472, %v1483
      %v1486 = vmul.f32 %v1475, %v1483
      %v1487 = vmul.f32 %v1477, %v1483
      %v1488 = vmul.f32 %v1480, %v1483
      %v1489 = vperm.slane %v721, 2
      %v1490 = vadd.f32 %v1484, %v1489
      %v1491 = vadd.f32 %v1485, %v1489
      %v1492 = vadd.f32 %v1486, %v1489
      %v1493 = vadd.f32 %v1487, %v1489
      %v1494 = vadd.f32 %v1488, %v1489
      %v1495 = vmax.f32 %v1490, 0.0
      %v1496 = vmax.f32 %v1491, 0.0
      %v1497 = vmax.f32 %v1492, 0.0
      %v1498 = vmax.f32 %v1493, 0.0
      %v1499 = vmax.f32 %v1494, 0.0
      %s1500 = scalar_lea.vmem %s5, 256
      %v1501 = vld [vmem:[%s1500] sm:$0xf]
      %v1502 = vld [vmem:[%s1500 + $0x4] sm:$0xf]
      %v1503 = vld [vmem:[%s1500 + $0x8] sm:$0xf]
      %v1504 = vld [vmem:[%s1500 + $0xc] sm:$0xf]
      %v1505 = vld [vmem:[%s1500 + $0x10] sm:$0xf]
      %v1506 = vld [vmem:[%s1500 + $0x14] sm:$0xf]
      %v1507 = vld [vmem:[%s1500 + $0x18] sm:$0xf]
      %v1508 = vld [vmem:[%s1500 + $0x1c] sm:$0xf]
      %v1509 = vld [vmem:[%s1500 + $0x20] sm:$0xf]
      %v1510 = vld [vmem:[%s1500 + $0x24] sm:$0xf]
      %v1511 = vld [vmem:[%s1500 + $0x28] sm:$0xf]
      %v1512 = vld [vmem:[%s1500 + $0x2c] sm:$0xf]
      %v1513 = vld [vmem:[%s1500 + $0x30] sm:$0xf]
      %v1514 = vld [vmem:[%s1500 + $0x34] sm:$0xf]
      %v1515 = vld [vmem:[%s1500 + $0x38] sm:$0xf]
      %v1516 = vld [vmem:[%s1500 + $0x3c] sm:$0xf]
      %v1517 = vld [vmem:[%s1500 + $0x40] sm:$0xf]
      %v1518 = vld [vmem:[%s1500 + $0x44] sm:$0xf]
      %v1519 = vld [vmem:[%s1500 + $0x48] sm:$0xf]
      %v1520 = vld [vmem:[%s1500 + $0x4c] sm:$0xf]
      %v1521 = vld [vmem:[%s1500 + $0x50] sm:$0xf]
      %v1522 = vld [vmem:[%s1500 + $0x54] sm:$0xf]
      %v1523 = vld [vmem:[%s1500 + $0x58] sm:$0xf]
      %v1524 = vld [vmem:[%s1500 + $0x5c] sm:$0xf]
      %v1525 = vld [vmem:[%s1500 + $0x60] sm:$0xf]
      %v1526 = vld [vmem:[%s1500 + $0x64] sm:$0xf]
      %v1527 = vld [vmem:[%s1500 + $0x68] sm:$0xf]
      %v1528 = vld [vmem:[%s1500 + $0x6c] sm:$0xf]
      %v1529 = vld [vmem:[%s1500 + $0x70] sm:$0xf]
      %v1530 = vld [vmem:[%s1500 + $0x74] sm:$0xf]
      %v1531 = vld [vmem:[%s1500 + $0x78] sm:$0xf]
      %v1532 = vld [vmem:[%s1500 + $0x7c] sm:$0xf]
      %v1533 = vpack.c.bf16 %v1496, %v1495
      %v1534 = vpack.c.bf16 %v1498, %v1497
      %v1535 = vpack.c.bf16 %v1499, %v1499
      %v1568 = vunpack.c.l.b16 %v1501
      %v1569 = vunpack.c.l.b16 %v1502
      %v1570 = vunpack.c.l.b16 %v1503
      %v1571 = vunpack.c.l.b16 %v1504
      %v1572 = vunpack.c.l.b16 %v1505
      %v1573 = vunpack.c.l.b16 %v1506
      %v1574 = vunpack.c.l.b16 %v1507
      %v1575 = vunpack.c.l.b16 %v1508
      %v1576 = vunpack.c.l.b16 %v1509
      %v1577 = vunpack.c.l.b16 %v1510
      %v1578 = vunpack.c.l.b16 %v1511
      %v1579 = vunpack.c.l.b16 %v1512
      %v1580 = vunpack.c.l.b16 %v1513
      %v1581 = vunpack.c.l.b16 %v1514
      %v1582 = vunpack.c.l.b16 %v1515
      %v1583 = vunpack.c.l.b16 %v1516
      %v1584 = vunpack.c.l.b16 %v1517
      %v1585 = vunpack.c.l.b16 %v1518
      %v1586 = vunpack.c.l.b16 %v1519
      %v1587 = vunpack.c.l.b16 %v1520
      %v1588 = vunpack.c.l.b16 %v1521
      %v1589 = vunpack.c.l.b16 %v1522
      %v1590 = vunpack.c.l.b16 %v1523
      %v1591 = vunpack.c.l.b16 %v1524
      %v1592 = vunpack.c.l.b16 %v1525
      %v1593 = vunpack.c.l.b16 %v1526
      %v1594 = vunpack.c.l.b16 %v1527
      %v1595 = vunpack.c.l.b16 %v1528
      %v1596 = vunpack.c.l.b16 %v1529
      %v1597 = vunpack.c.l.b16 %v1530
      %v1598 = vunpack.c.l.b16 %v1531
      %v1599 = vunpack.c.l.b16 %v1532
      %v1600 = vpack.c.b16 %v1569, %v1568
      %v1601 = vpack.c.b16 %v1571, %v1570
      %v1602 = vpack.c.b16 %v1573, %v1572
      %v1603 = vpack.c.b16 %v1575, %v1574
      %v1604 = vpack.c.b16 %v1577, %v1576
      %v1605 = vpack.c.b16 %v1579, %v1578
      %v1606 = vpack.c.b16 %v1581, %v1580
      %v1607 = vpack.c.b16 %v1583, %v1582
      %v1608 = vpack.c.b16 %v1585, %v1584
      %v1609 = vpack.c.b16 %v1587, %v1586
      %v1610 = vpack.c.b16 %v1589, %v1588
      %v1611 = vpack.c.b16 %v1591, %v1590
      %v1612 = vpack.c.b16 %v1593, %v1592
      %v1613 = vpack.c.b16 %v1595, %v1594
      %v1614 = vpack.c.b16 %v1597, %v1596
      %v1615 = vpack.c.b16 %v1599, %v1598
      %v1617 = vsel %vm905, %v1600, 0
      %v1620 = vsel %vm905, %v1601, 0
      %v1623 = vsel %vm905, %v1602, 0
      %v1626 = vsel %vm905, %v1603, 0
      %v1629 = vsel %vm905, %v1604, 0
      %v1632 = vsel %vm905, %v1605, 0
      %v1635 = vsel %vm905, %v1606, 0
      %v1638 = vsel %vm905, %v1607, 0
      %v1641 = vsel %vm905, %v1608, 0
      %v1644 = vsel %vm905, %v1609, 0
      %v1647 = vsel %vm905, %v1610, 0
      %v1650 = vsel %vm905, %v1611, 0
      %v1653 = vsel %vm905, %v1612, 0
      %v1656 = vsel %vm905, %v1613, 0
      %v1659 = vsel %vm905, %v1614, 0
      %v1662 = vsel %vm905, %v1615, 0
      %v1665 = vsel %vm746, %v1535, 0
      %1667 = vmatpush.bf16.msra.mxu0 0
      %1668 = vmatpush.bf16.msra.mxu0 0
      %1669 = vmatpush.bf16.msra.mxu0 0
      %1670 = vmatpush.bf16.msra.mxu0 0
      %1671 = vmatpush.bf16.msra.mxu0 0
      %1672 = vmatpush.bf16.msra.mxu0 %v1665
      %1673 = vmatpush.bf16.msra.mxu0 %v1534
      %1674 = vmatpush.bf16.msra.mxu0 %v1533
      %1675 = vmatmul.bf16.gmra.mxu0 %v1617
      %v1676 = vpop.f32.mrf.mxu0
      %v1677 = vadd.f32 0.0, %v1676
      %v1678 = vpop.f32.mrf.mxu0
      %v1679 = vadd.f32 0.0, %v1678
      %1680 = vmatmul.bf16.gmra.mxu0 %v1620
      %v1681 = vpop.f32.mrf.mxu0
      %v1682 = vadd.f32 0.0, %v1681
      %v1683 = vpop.f32.mrf.mxu0
      %v1684 = vadd.f32 0.0, %v1683
      %1685 = vmatmul.bf16.gmra.mxu0 %v1623
      %v1686 = vpop.f32.mrf.mxu0
      %v1687 = vadd.f32 0.0, %v1686
      %v1688 = vpop.f32.mrf.mxu0
      %v1689 = vadd.f32 0.0, %v1688
      %1690 = vmatmul.bf16.gmra.mxu0 %v1626
      %v1691 = vpop.f32.mrf.mxu0
      %v1692 = vadd.f32 0.0, %v1691
      %v1693 = vpop.f32.mrf.mxu0
      %v1694 = vadd.f32 0.0, %v1693
      %1695 = vmatmul.bf16.gmra.mxu0 %v1629
      %v1696 = vpop.f32.mrf.mxu0
      %v1697 = vadd.f32 0.0, %v1696
      %v1698 = vpop.f32.mrf.mxu0
      %v1699 = vadd.f32 0.0, %v1698
      %1700 = vmatmul.bf16.gmra.mxu0 %v1632
      %v1701 = vpop.f32.mrf.mxu0
      %v1702 = vadd.f32 0.0, %v1701
      %v1703 = vpop.f32.mrf.mxu0
      %v1704 = vadd.f32 0.0, %v1703
      %1705 = vmatmul.bf16.gmra.mxu0 %v1635
      %v1706 = vpop.f32.mrf.mxu0
      %v1707 = vadd.f32 0.0, %v1706
      %v1708 = vpop.f32.mrf.mxu0
      %v1709 = vadd.f32 0.0, %v1708
      %1710 = vmatmul.bf16.gmra.mxu0 %v1638
      %v1711 = vpop.f32.mrf.mxu0
      %v1712 = vadd.f32 0.0, %v1711
      %v1713 = vpop.f32.mrf.mxu0
      %v1714 = vadd.f32 0.0, %v1713
      %1715 = vmatmul.bf16.gmra.mxu0 %v1641
      %v1716 = vpop.f32.mrf.mxu0
      %v1717 = vadd.f32 0.0, %v1716
      %v1718 = vpop.f32.mrf.mxu0
      %v1719 = vadd.f32 0.0, %v1718
      %1720 = vmatmul.bf16.gmra.mxu0 %v1644
      %v1721 = vpop.f32.mrf.mxu0
      %v1722 = vadd.f32 0.0, %v1721
      %v1723 = vpop.f32.mrf.mxu0
      %v1724 = vadd.f32 0.0, %v1723
      %1725 = vmatmul.bf16.gmra.mxu0 %v1647
      %v1726 = vpop.f32.mrf.mxu0
      %v1727 = vadd.f32 0.0, %v1726
      %v1728 = vpop.f32.mrf.mxu0
      %v1729 = vadd.f32 0.0, %v1728
      %1730 = vmatmul.bf16.gmra.mxu0 %v1650
      %v1731 = vpop.f32.mrf.mxu0
      %v1732 = vadd.f32 0.0, %v1731
      %v1733 = vpop.f32.mrf.mxu0
      %v1734 = vadd.f32 0.0, %v1733
      %1735 = vmatmul.bf16.gmra.mxu0 %v1653
      %v1736 = vpop.f32.mrf.mxu0
      %v1737 = vadd.f32 0.0, %v1736
      %v1738 = vpop.f32.mrf.mxu0
      %v1739 = vadd.f32 0.0, %v1738
      %1740 = vmatmul.bf16.gmra.mxu0 %v1656
      %v1741 = vpop.f32.mrf.mxu0
      %v1742 = vadd.f32 0.0, %v1741
      %v1743 = vpop.f32.mrf.mxu0
      %v1744 = vadd.f32 0.0, %v1743
      %1745 = vmatmul.bf16.gmra.mxu0 %v1659
      %v1746 = vpop.f32.mrf.mxu0
      %v1747 = vadd.f32 0.0, %v1746
      %v1748 = vpop.f32.mrf.mxu0
      %v1749 = vadd.f32 0.0, %v1748
      %1750 = vmatmul.bf16.gmra.mxu0 %v1662
      %v1751 = vpop.f32.mrf.mxu0
      %v1752 = vadd.f32 0.0, %v1751
      %v1753 = vpop.f32.mrf.mxu0
      %v1754 = vadd.f32 0.0, %v1753
      %1755 = vdwg.mxu0
      %v1756 = vpack.c.bf16 %v1677, %v1677
      %v1757 = vpack.c.bf16 %v1679, %v1679
      %v1758 = vpack.c.bf16 %v1682, %v1682
      %v1759 = vpack.c.bf16 %v1684, %v1684
      %v1760 = vpack.c.bf16 %v1687, %v1687
      %v1761 = vpack.c.bf16 %v1689, %v1689
      %v1762 = vpack.c.bf16 %v1692, %v1692
      %v1763 = vpack.c.bf16 %v1694, %v1694
      %v1764 = vpack.c.bf16 %v1697, %v1697
      %v1765 = vpack.c.bf16 %v1699, %v1699
      %v1766 = vpack.c.bf16 %v1702, %v1702
      %v1767 = vpack.c.bf16 %v1704, %v1704
      %v1768 = vpack.c.bf16 %v1707, %v1707
      %v1769 = vpack.c.bf16 %v1709, %v1709
      %v1770 = vpack.c.bf16 %v1712, %v1712
      %v1771 = vpack.c.bf16 %v1714, %v1714
      %v1772 = vpack.c.bf16 %v1717, %v1717
      %v1773 = vpack.c.bf16 %v1719, %v1719
      %v1774 = vpack.c.bf16 %v1722, %v1722
      %v1775 = vpack.c.bf16 %v1724, %v1724
      %v1776 = vpack.c.bf16 %v1727, %v1727
      %v1777 = vpack.c.bf16 %v1729, %v1729
      %v1778 = vpack.c.bf16 %v1732, %v1732
      %v1779 = vpack.c.bf16 %v1734, %v1734
      %v1780 = vpack.c.bf16 %v1737, %v1737
      %v1781 = vpack.c.bf16 %v1739, %v1739
      %v1782 = vpack.c.bf16 %v1742, %v1742
      %v1783 = vpack.c.bf16 %v1744, %v1744
      %v1784 = vpack.c.bf16 %v1747, %v1747
      %v1785 = vpack.c.bf16 %v1749, %v1749
      %v1786 = vpack.c.bf16 %v1752, %v1752
      %v1787 = vpack.c.bf16 %v1754, %v1754
      %s1788 = scalar_lea.vmem %s2, 12
      %v1789 = vld [vmem:[%s1788] sm:$0xf]
      %v1795 = vunpack.c.l.b16 %v715
      %v1796 = vunpack.c.l.b16 %v716
      %v1797 = vunpack.c.l.b16 %v717
      %v1798 = vunpack.c.l.b16 %v718
      %v1799 = vunpack.c.l.b16 %v719
      %v1800 = vpack.c.b16 %v1796, %v1795
      %v1801 = vpack.c.b16 %v1798, %v1797
      %v1802 = vpack.c.b16 %v1799, %v1799
      %v1804 = vsel %vm736, %v1800, 0
      %v1807 = vsel %vm736, %v1801, 0
      %v1810 = vsel %vm736, %v1802, 0
      %v1813 = vsel %vm746, %v1789, 0
      %1815 = vmatpush.bf16.msra.mxu0 0
      %1816 = vmatpush.bf16.msra.mxu0 0
      %1817 = vmatpush.bf16.msra.mxu0 0
      %1818 = vmatpush.bf16.msra.mxu0 0
      %1819 = vmatpush.bf16.msra.mxu0 0
      %1820 = vmatpush.bf16.msra.mxu0 0
      %1821 = vmatpush.bf16.msra.mxu0 0
      %1822 = vmatpush.bf16.msra.mxu0 %v1813
      %1823 = vmatmul.bf16.gmra.mxu0 %v1804
      %v1824 = vpop.f32.mrf.mxu0
      %v1825 = vadd.f32 0.0, %v1824
      %v1826 = vpop.f32.mrf.mxu0
      %v1827 = vadd.f32 0.0, %v1826
      %1828 = vmatmul.bf16.gmra.mxu0 %v1807
      %v1829 = vpop.f32.mrf.mxu0
      %v1830 = vadd.f32 0.0, %v1829
      %v1831 = vpop.f32.mrf.mxu0
      %v1832 = vadd.f32 0.0, %v1831
      %1833 = vmatmul.bf16.gmra.mxu0 %v1810
      %v1834 = vpop.f32.mrf.mxu0
      %v1835 = vadd.f32 0.0, %v1834
      %v1836 = vpop.f32.mrf.mxu0
      %1837 = vdwg.mxu0
      %v1838 = vperm.slane %v720, 3
      %v1839 = vmul.f32 %v1825, %v1838
      %v1840 = vmul.f32 %v1827, %v1838
      %v1841 = vmul.f32 %v1830, %v1838
      %v1842 = vmul.f32 %v1832, %v1838
      %v1843 = vmul.f32 %v1835, %v1838
      %v1844 = vperm.slane %v721, 3
      %v1845 = vadd.f32 %v1839, %v1844
      %v1846 = vadd.f32 %v1840, %v1844
      %v1847 = vadd.f32 %v1841, %v1844
      %v1848 = vadd.f32 %v1842, %v1844
      %v1849 = vadd.f32 %v1843, %v1844
      %v1850 = vmax.f32 %v1845, 0.0
      %v1851 = vmax.f32 %v1846, 0.0
      %v1852 = vmax.f32 %v1847, 0.0
      %v1853 = vmax.f32 %v1848, 0.0
      %v1854 = vmax.f32 %v1849, 0.0
      %s1855 = scalar_lea.vmem %s5, 384
      %v1856 = vld [vmem:[%s1855] sm:$0xf]
      %v1857 = vld [vmem:[%s1855 + $0x4] sm:$0xf]
      %v1858 = vld [vmem:[%s1855 + $0x8] sm:$0xf]
      %v1859 = vld [vmem:[%s1855 + $0xc] sm:$0xf]
      %v1860 = vld [vmem:[%s1855 + $0x10] sm:$0xf]
      %v1861 = vld [vmem:[%s1855 + $0x14] sm:$0xf]
      %v1862 = vld [vmem:[%s1855 + $0x18] sm:$0xf]
      %v1863 = vld [vmem:[%s1855 + $0x1c] sm:$0xf]
      %v1864 = vld [vmem:[%s1855 + $0x20] sm:$0xf]
      %v1865 = vld [vmem:[%s1855 + $0x24] sm:$0xf]
      %v1866 = vld [vmem:[%s1855 + $0x28] sm:$0xf]
      %v1867 = vld [vmem:[%s1855 + $0x2c] sm:$0xf]
      %v1868 = vld [vmem:[%s1855 + $0x30] sm:$0xf]
      %v1869 = vld [vmem:[%s1855 + $0x34] sm:$0xf]
      %v1870 = vld [vmem:[%s1855 + $0x38] sm:$0xf]
      %v1871 = vld [vmem:[%s1855 + $0x3c] sm:$0xf]
      %v1872 = vld [vmem:[%s1855 + $0x40] sm:$0xf]
      %v1873 = vld [vmem:[%s1855 + $0x44] sm:$0xf]
      %v1874 = vld [vmem:[%s1855 + $0x48] sm:$0xf]
      %v1875 = vld [vmem:[%s1855 + $0x4c] sm:$0xf]
      %v1876 = vld [vmem:[%s1855 + $0x50] sm:$0xf]
      %v1877 = vld [vmem:[%s1855 + $0x54] sm:$0xf]
      %v1878 = vld [vmem:[%s1855 + $0x58] sm:$0xf]
      %v1879 = vld [vmem:[%s1855 + $0x5c] sm:$0xf]
      %v1880 = vld [vmem:[%s1855 + $0x60] sm:$0xf]
      %v1881 = vld [vmem:[%s1855 + $0x64] sm:$0xf]
      %v1882 = vld [vmem:[%s1855 + $0x68] sm:$0xf]
      %v1883 = vld [vmem:[%s1855 + $0x6c] sm:$0xf]
      %v1884 = vld [vmem:[%s1855 + $0x70] sm:$0xf]
      %v1885 = vld [vmem:[%s1855 + $0x74] sm:$0xf]
      %v1886 = vld [vmem:[%s1855 + $0x78] sm:$0xf]
      %v1887 = vld [vmem:[%s1855 + $0x7c] sm:$0xf]
      %v1888 = vpack.c.bf16 %v1851, %v1850
      %v1889 = vpack.c.bf16 %v1853, %v1852
      %v1890 = vpack.c.bf16 %v1854, %v1854
      %v1923 = vunpack.c.l.b16 %v1856
      %v1924 = vunpack.c.l.b16 %v1857
      %v1925 = vunpack.c.l.b16 %v1858
      %v1926 = vunpack.c.l.b16 %v1859
      %v1927 = vunpack.c.l.b16 %v1860
      %v1928 = vunpack.c.l.b16 %v1861
      %v1929 = vunpack.c.l.b16 %v1862
      %v1930 = vunpack.c.l.b16 %v1863
      %v1931 = vunpack.c.l.b16 %v1864
      %v1932 = vunpack.c.l.b16 %v1865
      %v1933 = vunpack.c.l.b16 %v1866
      %v1934 = vunpack.c.l.b16 %v1867
      %v1935 = vunpack.c.l.b16 %v1868
      %v1936 = vunpack.c.l.b16 %v1869
      %v1937 = vunpack.c.l.b16 %v1870
      %v1938 = vunpack.c.l.b16 %v1871
      %v1939 = vunpack.c.l.b16 %v1872
      %v1940 = vunpack.c.l.b16 %v1873
      %v1941 = vunpack.c.l.b16 %v1874
      %v1942 = vunpack.c.l.b16 %v1875
      %v1943 = vunpack.c.l.b16 %v1876
      %v1944 = vunpack.c.l.b16 %v1877
      %v1945 = vunpack.c.l.b16 %v1878
      %v1946 = vunpack.c.l.b16 %v1879
      %v1947 = vunpack.c.l.b16 %v1880
      %v1948 = vunpack.c.l.b16 %v1881
      %v1949 = vunpack.c.l.b16 %v1882
      %v1950 = vunpack.c.l.b16 %v1883
      %v1951 = vunpack.c.l.b16 %v1884
      %v1952 = vunpack.c.l.b16 %v1885
      %v1953 = vunpack.c.l.b16 %v1886
      %v1954 = vunpack.c.l.b16 %v1887
      %v1955 = vpack.c.b16 %v1924, %v1923
      %v1956 = vpack.c.b16 %v1926, %v1925
      %v1957 = vpack.c.b16 %v1928, %v1927
      %v1958 = vpack.c.b16 %v1930, %v1929
      %v1959 = vpack.c.b16 %v1932, %v1931
      %v1960 = vpack.c.b16 %v1934, %v1933
      %v1961 = vpack.c.b16 %v1936, %v1935
      %v1962 = vpack.c.b16 %v1938, %v1937
      %v1963 = vpack.c.b16 %v1940, %v1939
      %v1964 = vpack.c.b16 %v1942, %v1941
      %v1965 = vpack.c.b16 %v1944, %v1943
      %v1966 = vpack.c.b16 %v1946, %v1945
      %v1967 = vpack.c.b16 %v1948, %v1947
      %v1968 = vpack.c.b16 %v1950, %v1949
      %v1969 = vpack.c.b16 %v1952, %v1951
      %v1970 = vpack.c.b16 %v1954, %v1953
      %v1972 = vsel %vm905, %v1955, 0
      %v1975 = vsel %vm905, %v1956, 0
      %v1978 = vsel %vm905, %v1957, 0
      %v1981 = vsel %vm905, %v1958, 0
      %v1984 = vsel %vm905, %v1959, 0
      %v1987 = vsel %vm905, %v1960, 0
      %v1990 = vsel %vm905, %v1961, 0
      %v1993 = vsel %vm905, %v1962, 0
      %v1996 = vsel %vm905, %v1963, 0
      %v1999 = vsel %vm905, %v1964, 0
      %v2002 = vsel %vm905, %v1965, 0
      %v2005 = vsel %vm905, %v1966, 0
      %v2008 = vsel %vm905, %v1967, 0
      %v2011 = vsel %vm905, %v1968, 0
      %v2014 = vsel %vm905, %v1969, 0
      %v2017 = vsel %vm905, %v1970, 0
      %v2020 = vsel %vm746, %v1890, 0
      %2022 = vmatpush.bf16.msra.mxu0 0
      %2023 = vmatpush.bf16.msra.mxu0 0
      %2024 = vmatpush.bf16.msra.mxu0 0
      %2025 = vmatpush.bf16.msra.mxu0 0
      %2026 = vmatpush.bf16.msra.mxu0 0
      %2027 = vmatpush.bf16.msra.mxu0 %v2020
      %2028 = vmatpush.bf16.msra.mxu0 %v1889
      %2029 = vmatpush.bf16.msra.mxu0 %v1888
      %2030 = vmatmul.bf16.gmra.mxu0 %v1972
      %v2031 = vpop.f32.mrf.mxu0
      %v2032 = vadd.f32 0.0, %v2031
      %v2033 = vpop.f32.mrf.mxu0
      %v2034 = vadd.f32 0.0, %v2033
      %2035 = vmatmul.bf16.gmra.mxu0 %v1975
      %v2036 = vpop.f32.mrf.mxu0
      %v2037 = vadd.f32 0.0, %v2036
      %v2038 = vpop.f32.mrf.mxu0
      %v2039 = vadd.f32 0.0, %v2038
      %2040 = vmatmul.bf16.gmra.mxu0 %v1978
      %v2041 = vpop.f32.mrf.mxu0
      %v2042 = vadd.f32 0.0, %v2041
      %v2043 = vpop.f32.mrf.mxu0
      %v2044 = vadd.f32 0.0, %v2043
      %2045 = vmatmul.bf16.gmra.mxu0 %v1981
      %v2046 = vpop.f32.mrf.mxu0
      %v2047 = vadd.f32 0.0, %v2046
      %v2048 = vpop.f32.mrf.mxu0
      %v2049 = vadd.f32 0.0, %v2048
      %2050 = vmatmul.bf16.gmra.mxu0 %v1984
      %v2051 = vpop.f32.mrf.mxu0
      %v2052 = vadd.f32 0.0, %v2051
      %v2053 = vpop.f32.mrf.mxu0
      %v2054 = vadd.f32 0.0, %v2053
      %2055 = vmatmul.bf16.gmra.mxu0 %v1987
      %v2056 = vpop.f32.mrf.mxu0
      %v2057 = vadd.f32 0.0, %v2056
      %v2058 = vpop.f32.mrf.mxu0
      %v2059 = vadd.f32 0.0, %v2058
      %2060 = vmatmul.bf16.gmra.mxu0 %v1990
      %v2061 = vpop.f32.mrf.mxu0
      %v2062 = vadd.f32 0.0, %v2061
      %v2063 = vpop.f32.mrf.mxu0
      %v2064 = vadd.f32 0.0, %v2063
      %2065 = vmatmul.bf16.gmra.mxu0 %v1993
      %v2066 = vpop.f32.mrf.mxu0
      %v2067 = vadd.f32 0.0, %v2066
      %v2068 = vpop.f32.mrf.mxu0
      %v2069 = vadd.f32 0.0, %v2068
      %2070 = vmatmul.bf16.gmra.mxu0 %v1996
      %v2071 = vpop.f32.mrf.mxu0
      %v2072 = vadd.f32 0.0, %v2071
      %v2073 = vpop.f32.mrf.mxu0
      %v2074 = vadd.f32 0.0, %v2073
      %2075 = vmatmul.bf16.gmra.mxu0 %v1999
      %v2076 = vpop.f32.mrf.mxu0
      %v2077 = vadd.f32 0.0, %v2076
      %v2078 = vpop.f32.mrf.mxu0
      %v2079 = vadd.f32 0.0, %v2078
      %2080 = vmatmul.bf16.gmra.mxu0 %v2002
      %v2081 = vpop.f32.mrf.mxu0
      %v2082 = vadd.f32 0.0, %v2081
      %v2083 = vpop.f32.mrf.mxu0
      %v2084 = vadd.f32 0.0, %v2083
      %2085 = vmatmul.bf16.gmra.mxu0 %v2005
      %v2086 = vpop.f32.mrf.mxu0
      %v2087 = vadd.f32 0.0, %v2086
      %v2088 = vpop.f32.mrf.mxu0
      %v2089 = vadd.f32 0.0, %v2088
      %2090 = vmatmul.bf16.gmra.mxu0 %v2008
      %v2091 = vpop.f32.mrf.mxu0
      %v2092 = vadd.f32 0.0, %v2091
      %v2093 = vpop.f32.mrf.mxu0
      %v2094 = vadd.f32 0.0, %v2093
      %2095 = vmatmul.bf16.gmra.mxu0 %v2011
      %v2096 = vpop.f32.mrf.mxu0
      %v2097 = vadd.f32 0.0, %v2096
      %v2098 = vpop.f32.mrf.mxu0
      %v2099 = vadd.f32 0.0, %v2098
      %2100 = vmatmul.bf16.gmra.mxu0 %v2014
      %v2101 = vpop.f32.mrf.mxu0
      %v2102 = vadd.f32 0.0, %v2101
      %v2103 = vpop.f32.mrf.mxu0
      %v2104 = vadd.f32 0.0, %v2103
      %2105 = vmatmul.bf16.gmra.mxu0 %v2017
      %v2106 = vpop.f32.mrf.mxu0
      %v2107 = vadd.f32 0.0, %v2106
      %v2108 = vpop.f32.mrf.mxu0
      %v2109 = vadd.f32 0.0, %v2108
      %2110 = vdwg.mxu0
      %v2111 = vpack.c.bf16 %v2032, %v2032
      %v2112 = vpack.c.bf16 %v2034, %v2034
      %v2113 = vpack.c.bf16 %v2037, %v2037
      %v2114 = vpack.c.bf16 %v2039, %v2039
      %v2115 = vpack.c.bf16 %v2042, %v2042
      %v2116 = vpack.c.bf16 %v2044, %v2044
      %v2117 = vpack.c.bf16 %v2047, %v2047
      %v2118 = vpack.c.bf16 %v2049, %v2049
      %v2119 = vpack.c.bf16 %v2052, %v2052
      %v2120 = vpack.c.bf16 %v2054, %v2054
      %v2121 = vpack.c.bf16 %v2057, %v2057
      %v2122 = vpack.c.bf16 %v2059, %v2059
      %v2123 = vpack.c.bf16 %v2062, %v2062
      %v2124 = vpack.c.bf16 %v2064, %v2064
      %v2125 = vpack.c.bf16 %v2067, %v2067
      %v2126 = vpack.c.bf16 %v2069, %v2069
      %v2127 = vpack.c.bf16 %v2072, %v2072
      %v2128 = vpack.c.bf16 %v2074, %v2074
      %v2129 = vpack.c.bf16 %v2077, %v2077
      %v2130 = vpack.c.bf16 %v2079, %v2079
      %v2131 = vpack.c.bf16 %v2082, %v2082
      %v2132 = vpack.c.bf16 %v2084, %v2084
      %v2133 = vpack.c.bf16 %v2087, %v2087
      %v2134 = vpack.c.bf16 %v2089, %v2089
      %v2135 = vpack.c.bf16 %v2092, %v2092
      %v2136 = vpack.c.bf16 %v2094, %v2094
      %v2137 = vpack.c.bf16 %v2097, %v2097
      %v2138 = vpack.c.bf16 %v2099, %v2099
      %v2139 = vpack.c.bf16 %v2102, %v2102
      %v2140 = vpack.c.bf16 %v2104, %v2104
      %v2141 = vpack.c.bf16 %v2107, %v2107
      %v2142 = vpack.c.bf16 %v2109, %v2109
      %v2175 = vunpack.c.l.b16 %v1046
      %v2176 = vunpack.c.l.b16 %v1047
      %v2177 = vunpack.c.l.b16 %v1048
      %v2178 = vunpack.c.l.b16 %v1049
      %v2179 = vunpack.c.l.b16 %v1050
      %v2180 = vunpack.c.l.b16 %v1051
      %v2181 = vunpack.c.l.b16 %v1052
      %v2182 = vunpack.c.l.b16 %v1053
      %v2183 = vunpack.c.l.b16 %v1054
      %v2184 = vunpack.c.l.b16 %v1055
      %v2185 = vunpack.c.l.b16 %v1056
      %v2186 = vunpack.c.l.b16 %v1057
      %v2187 = vunpack.c.l.b16 %v1058
      %v2188 = vunpack.c.l.b16 %v1059
      %v2189 = vunpack.c.l.b16 %v1060
      %v2190 = vunpack.c.l.b16 %v1061
      %v2191 = vunpack.c.l.b16 %v1062
      %v2192 = vunpack.c.l.b16 %v1063
      %v2193 = vunpack.c.l.b16 %v1064
      %v2194 = vunpack.c.l.b16 %v1065
      %v2195 = vunpack.c.l.b16 %v1066
      %v2196 = vunpack.c.l.b16 %v1067
      %v2197 = vunpack.c.l.b16 %v1068
      %v2198 = vunpack.c.l.b16 %v1069
      %v2199 = vunpack.c.l.b16 %v1070
      %v2200 = vunpack.c.l.b16 %v1071
      %v2201 = vunpack.c.l.b16 %v1072
      %v2202 = vunpack.c.l.b16 %v1073
      %v2203 = vunpack.c.l.b16 %v1074
      %v2204 = vunpack.c.l.b16 %v1075
      %v2205 = vunpack.c.l.b16 %v1076
      %v2206 = vunpack.c.l.b16 %v1077
      %v2207 = vpack.c.b16 %v2176, %v2175
      %v2208 = vpack.c.b16 %v2178, %v2177
      %v2209 = vpack.c.b16 %v2180, %v2179
      %v2210 = vpack.c.b16 %v2182, %v2181
      %v2211 = vpack.c.b16 %v2184, %v2183
      %v2212 = vpack.c.b16 %v2186, %v2185
      %v2213 = vpack.c.b16 %v2188, %v2187
      %v2214 = vpack.c.b16 %v2190, %v2189
      %v2215 = vpack.c.b16 %v2192, %v2191
      %v2216 = vpack.c.b16 %v2194, %v2193
      %v2217 = vpack.c.b16 %v2196, %v2195
      %v2218 = vpack.c.b16 %v2198, %v2197
      %v2219 = vpack.c.b16 %v2200, %v2199
      %v2220 = vpack.c.b16 %v2202, %v2201
      %v2221 = vpack.c.b16 %v2204, %v2203
      %v2222 = vpack.c.b16 %v2206, %v2205
      %2223 = vrot.lane.b32.xlu0 %v2207, 8
      %v2224 = vpop.permute.xlu0 %2223
      %2225 = vrot.lane.b32.xlu0 %v2208, 8
      %v2226 = vpop.permute.xlu0 %2225
      %2227 = vrot.lane.b32.xlu0 %v2209, 8
      %v2228 = vpop.permute.xlu0 %2227
      %2229 = vrot.lane.b32.xlu0 %v2210, 8
      %v2230 = vpop.permute.xlu0 %2229
      %2231 = vrot.lane.b32.xlu0 %v2211, 8
      %v2232 = vpop.permute.xlu0 %2231
      %2233 = vrot.lane.b32.xlu0 %v2212, 8
      %v2234 = vpop.permute.xlu0 %2233
      %2235 = vrot.lane.b32.xlu0 %v2213, 8
      %v2236 = vpop.permute.xlu0 %2235
      %2237 = vrot.lane.b32.xlu0 %v2214, 8
      %v2238 = vpop.permute.xlu0 %2237
      %2239 = vrot.lane.b32.xlu0 %v2215, 8
      %v2240 = vpop.permute.xlu0 %2239
      %2241 = vrot.lane.b32.xlu0 %v2216, 8
      %v2242 = vpop.permute.xlu0 %2241
      %2243 = vrot.lane.b32.xlu0 %v2217, 8
      %v2244 = vpop.permute.xlu0 %2243
      %2245 = vrot.lane.b32.xlu0 %v2218, 8
      %v2246 = vpop.permute.xlu0 %2245
      %2247 = vrot.lane.b32.xlu0 %v2219, 8
      %v2248 = vpop.permute.xlu0 %2247
      %2249 = vrot.lane.b32.xlu0 %v2220, 8
      %v2250 = vpop.permute.xlu0 %2249
      %2251 = vrot.lane.b32.xlu0 %v2221, 8
      %v2252 = vpop.permute.xlu0 %2251
      %2253 = vrot.lane.b32.xlu0 %v2222, 8
      %v2254 = vpop.permute.xlu0 %2253
      %v2287 = vunpack.c.l.b16 %v1401
      %v2288 = vunpack.c.l.b16 %v1402
      %v2289 = vunpack.c.l.b16 %v1403
      %v2290 = vunpack.c.l.b16 %v1404
      %v2291 = vunpack.c.l.b16 %v1405
      %v2292 = vunpack.c.l.b16 %v1406
      %v2293 = vunpack.c.l.b16 %v1407
      %v2294 = vunpack.c.l.b16 %v1408
      %v2295 = vunpack.c.l.b16 %v1409
      %v2296 = vunpack.c.l.b16 %v1410
      %v2297 = vunpack.c.l.b16 %v1411
      %v2298 = vunpack.c.l.b16 %v1412
      %v2299 = vunpack.c.l.b16 %v1413
      %v2300 = vunpack.c.l.b16 %v1414
      %v2301 = vunpack.c.l.b16 %v1415
      %v2302 = vunpack.c.l.b16 %v1416
      %v2303 = vunpack.c.l.b16 %v1417
      %v2304 = vunpack.c.l.b16 %v1418
      %v2305 = vunpack.c.l.b16 %v1419
      %v2306 = vunpack.c.l.b16 %v1420
      %v2307 = vunpack.c.l.b16 %v1421
      %v2308 = vunpack.c.l.b16 %v1422
      %v2309 = vunpack.c.l.b16 %v1423
      %v2310 = vunpack.c.l.b16 %v1424
      %v2311 = vunpack.c.l.b16 %v1425
      %v2312 = vunpack.c.l.b16 %v1426
      %v2313 = vunpack.c.l.b16 %v1427
      %v2314 = vunpack.c.l.b16 %v1428
      %v2315 = vunpack.c.l.b16 %v1429
      %v2316 = vunpack.c.l.b16 %v1430
      %v2317 = vunpack.c.l.b16 %v1431
      %v2318 = vunpack.c.l.b16 %v1432
      %v2319 = vpack.c.b16 %v2288, %v2287
      %v2320 = vpack.c.b16 %v2290, %v2289
      %v2321 = vpack.c.b16 %v2292, %v2291
      %v2322 = vpack.c.b16 %v2294, %v2293
      %v2323 = vpack.c.b16 %v2296, %v2295
      %v2324 = vpack.c.b16 %v2298, %v2297
      %v2325 = vpack.c.b16 %v2300, %v2299
      %v2326 = vpack.c.b16 %v2302, %v2301
      %v2327 = vpack.c.b16 %v2304, %v2303
      %v2328 = vpack.c.b16 %v2306, %v2305
      %v2329 = vpack.c.b16 %v2308, %v2307
      %v2330 = vpack.c.b16 %v2310, %v2309
      %v2331 = vpack.c.b16 %v2312, %v2311
      %v2332 = vpack.c.b16 %v2314, %v2313
      %v2333 = vpack.c.b16 %v2316, %v2315
      %v2334 = vpack.c.b16 %v2318, %v2317
      %2335 = vrot.lane.b32.xlu0 %v2319, 10
      %v2336 = vpop.permute.xlu0 %2335
      %2337 = vrot.lane.b32.xlu0 %v2320, 10
      %v2338 = vpop.permute.xlu0 %2337
      %2339 = vrot.lane.b32.xlu0 %v2321, 10
      %v2340 = vpop.permute.xlu0 %2339
      %2341 = vrot.lane.b32.xlu0 %v2322, 10
      %v2342 = vpop.permute.xlu0 %2341
      %2343 = vrot.lane.b32.xlu0 %v2323, 10
      %v2344 = vpop.permute.xlu0 %2343
      %2345 = vrot.lane.b32.xlu0 %v2324, 10
      %v2346 = vpop.permute.xlu0 %2345
      %2347 = vrot.lane.b32.xlu0 %v2325, 10
      %v2348 = vpop.permute.xlu0 %2347
      %2349 = vrot.lane.b32.xlu0 %v2326, 10
      %v2350 = vpop.permute.xlu0 %2349
      %2351 = vrot.lane.b32.xlu0 %v2327, 10
      %v2352 = vpop.permute.xlu0 %2351
      %2353 = vrot.lane.b32.xlu0 %v2328, 10
      %v2354 = vpop.permute.xlu0 %2353
      %2355 = vrot.lane.b32.xlu0 %v2329, 10
      %v2356 = vpop.permute.xlu0 %2355
      %2357 = vrot.lane.b32.xlu0 %v2330, 10
      %v2358 = vpop.permute.xlu0 %2357
      %2359 = vrot.lane.b32.xlu0 %v2331, 10
      %v2360 = vpop.permute.xlu0 %2359
      %2361 = vrot.lane.b32.xlu0 %v2332, 10
      %v2362 = vpop.permute.xlu0 %2361
      %2363 = vrot.lane.b32.xlu0 %v2333, 10
      %v2364 = vpop.permute.xlu0 %2363
      %2365 = vrot.lane.b32.xlu0 %v2334, 10
      %v2366 = vpop.permute.xlu0 %2365
      %v2399 = vunpack.c.l.b16 %v1756
      %v2400 = vunpack.c.l.b16 %v1757
      %v2401 = vunpack.c.l.b16 %v1758
      %v2402 = vunpack.c.l.b16 %v1759
      %v2403 = vunpack.c.l.b16 %v1760
      %v2404 = vunpack.c.l.b16 %v1761
      %v2405 = vunpack.c.l.b16 %v1762
      %v2406 = vunpack.c.l.b16 %v1763
      %v2407 = vunpack.c.l.b16 %v1764
      %v2408 = vunpack.c.l.b16 %v1765
      %v2409 = vunpack.c.l.b16 %v1766
      %v2410 = vunpack.c.l.b16 %v1767
      %v2411 = vunpack.c.l.b16 %v1768
      %v2412 = vunpack.c.l.b16 %v1769
      %v2413 = vunpack.c.l.b16 %v1770
      %v2414 = vunpack.c.l.b16 %v1771
      %v2415 = vunpack.c.l.b16 %v1772
      %v2416 = vunpack.c.l.b16 %v1773
      %v2417 = vunpack.c.l.b16 %v1774
      %v2418 = vunpack.c.l.b16 %v1775
      %v2419 = vunpack.c.l.b16 %v1776
      %v2420 = vunpack.c.l.b16 %v1777
      %v2421 = vunpack.c.l.b16 %v1778
      %v2422 = vunpack.c.l.b16 %v1779
      %v2423 = vunpack.c.l.b16 %v1780
      %v2424 = vunpack.c.l.b16 %v1781
      %v2425 = vunpack.c.l.b16 %v1782
      %v2426 = vunpack.c.l.b16 %v1783
      %v2427 = vunpack.c.l.b16 %v1784
      %v2428 = vunpack.c.l.b16 %v1785
      %v2429 = vunpack.c.l.b16 %v1786
      %v2430 = vunpack.c.l.b16 %v1787
      %v2431 = vpack.c.b16 %v2400, %v2399
      %v2432 = vpack.c.b16 %v2402, %v2401
      %v2433 = vpack.c.b16 %v2404, %v2403
      %v2434 = vpack.c.b16 %v2406, %v2405
      %v2435 = vpack.c.b16 %v2408, %v2407
      %v2436 = vpack.c.b16 %v2410, %v2409
      %v2437 = vpack.c.b16 %v2412, %v2411
      %v2438 = vpack.c.b16 %v2414, %v2413
      %v2439 = vpack.c.b16 %v2416, %v2415
      %v2440 = vpack.c.b16 %v2418, %v2417
      %v2441 = vpack.c.b16 %v2420, %v2419
      %v2442 = vpack.c.b16 %v2422, %v2421
      %v2443 = vpack.c.b16 %v2424, %v2423
      %v2444 = vpack.c.b16 %v2426, %v2425
      %v2445 = vpack.c.b16 %v2428, %v2427
      %v2446 = vpack.c.b16 %v2430, %v2429
      %2447 = vrot.lane.b32.xlu0 %v2431, 12
      %v2448 = vpop.permute.xlu0 %2447
      %2449 = vrot.lane.b32.xlu0 %v2432, 12
      %v2450 = vpop.permute.xlu0 %2449
      %2451 = vrot.lane.b32.xlu0 %v2433, 12
      %v2452 = vpop.permute.xlu0 %2451
      %2453 = vrot.lane.b32.xlu0 %v2434, 12
      %v2454 = vpop.permute.xlu0 %2453
      %2455 = vrot.lane.b32.xlu0 %v2435, 12
      %v2456 = vpop.permute.xlu0 %2455
      %2457 = vrot.lane.b32.xlu0 %v2436, 12
      %v2458 = vpop.permute.xlu0 %2457
      %2459 = vrot.lane.b32.xlu0 %v2437, 12
      %v2460 = vpop.permute.xlu0 %2459
      %2461 = vrot.lane.b32.xlu0 %v2438, 12
      %v2462 = vpop.permute.xlu0 %2461
      %2463 = vrot.lane.b32.xlu0 %v2439, 12
      %v2464 = vpop.permute.xlu0 %2463
      %2465 = vrot.lane.b32.xlu0 %v2440, 12
      %v2466 = vpop.permute.xlu0 %2465
      %2467 = vrot.lane.b32.xlu0 %v2441, 12
      %v2468 = vpop.permute.xlu0 %2467
      %2469 = vrot.lane.b32.xlu0 %v2442, 12
      %v2470 = vpop.permute.xlu0 %2469
      %2471 = vrot.lane.b32.xlu0 %v2443, 12
      %v2472 = vpop.permute.xlu0 %2471
      %2473 = vrot.lane.b32.xlu0 %v2444, 12
      %v2474 = vpop.permute.xlu0 %2473
      %2475 = vrot.lane.b32.xlu0 %v2445, 12
      %v2476 = vpop.permute.xlu0 %2475
      %2477 = vrot.lane.b32.xlu0 %v2446, 12
      %v2478 = vpop.permute.xlu0 %2477
      %v2511 = vunpack.c.l.b16 %v2111
      %v2512 = vunpack.c.l.b16 %v2112
      %v2513 = vunpack.c.l.b16 %v2113
      %v2514 = vunpack.c.l.b16 %v2114
      %v2515 = vunpack.c.l.b16 %v2115
      %v2516 = vunpack.c.l.b16 %v2116
      %v2517 = vunpack.c.l.b16 %v2117
      %v2518 = vunpack.c.l.b16 %v2118
      %v2519 = vunpack.c.l.b16 %v2119
      %v2520 = vunpack.c.l.b16 %v2120
      %v2521 = vunpack.c.l.b16 %v2121
      %v2522 = vunpack.c.l.b16 %v2122
      %v2523 = vunpack.c.l.b16 %v2123
      %v2524 = vunpack.c.l.b16 %v2124
      %v2525 = vunpack.c.l.b16 %v2125
      %v2526 = vunpack.c.l.b16 %v2126
      %v2527 = vunpack.c.l.b16 %v2127
      %v2528 = vunpack.c.l.b16 %v2128
      %v2529 = vunpack.c.l.b16 %v2129
      %v2530 = vunpack.c.l.b16 %v2130
      %v2531 = vunpack.c.l.b16 %v2131
      %v2532 = vunpack.c.l.b16 %v2132
      %v2533 = vunpack.c.l.b16 %v2133
      %v2534 = vunpack.c.l.b16 %v2134
      %v2535 = vunpack.c.l.b16 %v2135
      %v2536 = vunpack.c.l.b16 %v2136
      %v2537 = vunpack.c.l.b16 %v2137
      %v2538 = vunpack.c.l.b16 %v2138
      %v2539 = vunpack.c.l.b16 %v2139
      %v2540 = vunpack.c.l.b16 %v2140
      %v2541 = vunpack.c.l.b16 %v2141
      %v2542 = vunpack.c.l.b16 %v2142
      %v2543 = vpack.c.b16 %v2512, %v2511
      %v2544 = vpack.c.b16 %v2514, %v2513
      %v2545 = vpack.c.b16 %v2516, %v2515
      %v2546 = vpack.c.b16 %v2518, %v2517
      %v2547 = vpack.c.b16 %v2520, %v2519
      %v2548 = vpack.c.b16 %v2522, %v2521
      %v2549 = vpack.c.b16 %v2524, %v2523
      %v2550 = vpack.c.b16 %v2526, %v2525
      %v2551 = vpack.c.b16 %v2528, %v2527
      %v2552 = vpack.c.b16 %v2530, %v2529
      %v2553 = vpack.c.b16 %v2532, %v2531
      %v2554 = vpack.c.b16 %v2534, %v2533
      %v2555 = vpack.c.b16 %v2536, %v2535
      %v2556 = vpack.c.b16 %v2538, %v2537
      %v2557 = vpack.c.b16 %v2540, %v2539
      %v2558 = vpack.c.b16 %v2542, %v2541
      %2559 = vrot.lane.b32.xlu0 %v2543, 14
      %v2560 = vpop.permute.xlu0 %2559
      %2561 = vrot.lane.b32.xlu0 %v2544, 14
      %v2562 = vpop.permute.xlu0 %2561
      %2563 = vrot.lane.b32.xlu0 %v2545, 14
      %v2564 = vpop.permute.xlu0 %2563
      %2565 = vrot.lane.b32.xlu0 %v2546, 14
      %v2566 = vpop.permute.xlu0 %2565
      %2567 = vrot.lane.b32.xlu0 %v2547, 14
      %v2568 = vpop.permute.xlu0 %2567
      %2569 = vrot.lane.b32.xlu0 %v2548, 14
      %v2570 = vpop.permute.xlu0 %2569
      %2571 = vrot.lane.b32.xlu0 %v2549, 14
      %v2572 = vpop.permute.xlu0 %2571
      %2573 = vrot.lane.b32.xlu0 %v2550, 14
      %v2574 = vpop.permute.xlu0 %2573
      %2575 = vrot.lane.b32.xlu0 %v2551, 14
      %v2576 = vpop.permute.xlu0 %2575
      %2577 = vrot.lane.b32.xlu0 %v2552, 14
      %v2578 = vpop.permute.xlu0 %2577
      %2579 = vrot.lane.b32.xlu0 %v2553, 14
      %v2580 = vpop.permute.xlu0 %2579
      %2581 = vrot.lane.b32.xlu0 %v2554, 14
      %v2582 = vpop.permute.xlu0 %2581
      %2583 = vrot.lane.b32.xlu0 %v2555, 14
      %v2584 = vpop.permute.xlu0 %2583
      %2585 = vrot.lane.b32.xlu0 %v2556, 14
      %v2586 = vpop.permute.xlu0 %2585
      %2587 = vrot.lane.b32.xlu0 %v2557, 14
      %v2588 = vpop.permute.xlu0 %2587
      %2589 = vrot.lane.b32.xlu0 %v2558, 14
      %v2590 = vpop.permute.xlu0 %2589
      %v2593 = vsel %vm736, %v550, %v2224
      %v2596 = vsel %vm736, %v551, %v2226
      %v2599 = vsel %vm736, %v552, %v2228
      %v2602 = vsel %vm736, %v553, %v2230
      %v2605 = vsel %vm736, %v554, %v2232
      %v2608 = vsel %vm736, %v555, %v2234
      %v2611 = vsel %vm736, %v556, %v2236
      %v2614 = vsel %vm736, %v557, %v2238
      %v2617 = vsel %vm736, %v558, %v2240
      %v2620 = vsel %vm736, %v559, %v2242
      %v2623 = vsel %vm736, %v560, %v2244
      %v2626 = vsel %vm736, %v561, %v2246
      %v2629 = vsel %vm736, %v562, %v2248
      %v2632 = vsel %vm736, %v563, %v2250
      %v2635 = vsel %vm736, %v564, %v2252
      %v2638 = vsel %vm736, %v565, %v2254
      %vm2639 = vcmask 80896
      %v2641 = vsel %vm2639, %v2593, %v2336
      %v2643 = vsel %vm2639, %v2596, %v2338
      %v2645 = vsel %vm2639, %v2599, %v2340
      %v2647 = vsel %vm2639, %v2602, %v2342
      %v2649 = vsel %vm2639, %v2605, %v2344
      %v2651 = vsel %vm2639, %v2608, %v2346
      %v2653 = vsel %vm2639, %v2611, %v2348
      %v2655 = vsel %vm2639, %v2614, %v2350
      %v2657 = vsel %vm2639, %v2617, %v2352
      %v2659 = vsel %vm2639, %v2620, %v2354
      %v2661 = vsel %vm2639, %v2623, %v2356
      %v2663 = vsel %vm2639, %v2626, %v2358
      %v2665 = vsel %vm2639, %v2629, %v2360
      %v2667 = vsel %vm2639, %v2632, %v2362
      %v2669 = vsel %vm2639, %v2635, %v2364
      %v2671 = vsel %vm2639, %v2638, %v2366
      %vm2672 = vcmask 97280
      %v2674 = vsel %vm2672, %v2641, %v2448
      %v2676 = vsel %vm2672, %v2643, %v2450
      %v2678 = vsel %vm2672, %v2645, %v2452
      %v2680 = vsel %vm2672, %v2647, %v2454
      %v2682 = vsel %vm2672, %v2649, %v2456
      %v2684 = vsel %vm2672, %v2651, %v2458
      %v2686 = vsel %vm2672, %v2653, %v2460
      %v2688 = vsel %vm2672, %v2655, %v2462
      %v2690 = vsel %vm2672, %v2657, %v2464
      %v2692 = vsel %vm2672, %v2659, %v2466
      %v2694 = vsel %vm2672, %v2661, %v2468
      %v2696 = vsel %vm2672, %v2663, %v2470
      %v2698 = vsel %vm2672, %v2665, %v2472
      %v2700 = vsel %vm2672, %v2667, %v2474
      %v2702 = vsel %vm2672, %v2669, %v2476
      %v2704 = vsel %vm2672, %v2671, %v2478
      %vm2705 = vcmask 113664
      %v2707 = vsel %vm2705, %v2674, %v2560
      %v2709 = vsel %vm2705, %v2676, %v2562
      %v2711 = vsel %vm2705, %v2678, %v2564
      %v2713 = vsel %vm2705, %v2680, %v2566
      %v2715 = vsel %vm2705, %v2682, %v2568
      %v2717 = vsel %vm2705, %v2684, %v2570
      %v2719 = vsel %vm2705, %v2686, %v2572
      %v2721 = vsel %vm2705, %v2688, %v2574
      %v2723 = vsel %vm2705, %v2690, %v2576
      %v2725 = vsel %vm2705, %v2692, %v2578
      %v2727 = vsel %vm2705, %v2694, %v2580
      %v2729 = vsel %vm2705, %v2696, %v2582
      %v2731 = vsel %vm2705, %v2698, %v2584
      %v2733 = vsel %vm2705, %v2700, %v2586
      %v2735 = vsel %vm2705, %v2702, %v2588
      %v2737 = vsel %vm2705, %v2704, %v2590
      %vm2738 = vcmask 125952
      %2739 = vst.msk [vmem:[#allocation2] sm:$0xf] %vm2738, 0
      %2740 = vst.msk [vmem:[#allocation2 + $0x4] sm:$0xf] %vm2738, 0
      %2741 = vst.msk [vmem:[#allocation2 + $0x8] sm:$0xf] %vm2738, 0
      %2742 = vst.msk [vmem:[#allocation2 + $0xc] sm:$0xf] %vm2738, 0
      %2743 = vst.msk [vmem:[#allocation2 + $0x10] sm:$0xf] %vm2738, 0
      %2744 = vst.msk [vmem:[#allocation2 + $0x14] sm:$0xf] %vm2738, 0
      %2745 = vst.msk [vmem:[#allocation2 + $0x18] sm:$0xf] %vm2738, 0
      %2746 = vst.msk [vmem:[#allocation2 + $0x1c] sm:$0xf] %vm2738, 0
      %2747 = vst.msk [vmem:[#allocation2 + $0x20] sm:$0xf] %vm2738, 0
      %2748 = vst.msk [vmem:[#allocation2 + $0x24] sm:$0xf] %vm2738, 0
      %2749 = vst.msk [vmem:[#allocation2 + $0x28] sm:$0xf] %vm2738, 0
      %2750 = vst.msk [vmem:[#allocation2 + $0x2c] sm:$0xf] %vm2738, 0
      %2751 = vst.msk [vmem:[#allocation2 + $0x30] sm:$0xf] %vm2738, 0
      %2752 = vst.msk [vmem:[#allocation2 + $0x34] sm:$0xf] %vm2738, 0
      %2753 = vst.msk [vmem:[#allocation2 + $0x38] sm:$0xf] %vm2738, 0
      %2754 = vst.msk [vmem:[#allocation2 + $0x3c] sm:$0xf] %vm2738, 0
      %2755 = vst.msk [vmem:[#allocation2 + $0x40] sm:$0xf] %vm2738, 0
      %2756 = vst.msk [vmem:[#allocation2 + $0x44] sm:$0xf] %vm2738, 0
      %2757 = vst.msk [vmem:[#allocation2 + $0x48] sm:$0xf] %vm2738, 0
      %2758 = vst.msk [vmem:[#allocation2 + $0x4c] sm:$0xf] %vm2738, 0
      %2759 = vst.msk [vmem:[#allocation2 + $0x50] sm:$0xf] %vm2738, 0
      %2760 = vst.msk [vmem:[#allocation2 + $0x54] sm:$0xf] %vm2738, 0
      %2761 = vst.msk [vmem:[#allocation2 + $0x58] sm:$0xf] %vm2738, 0
      %2762 = vst.msk [vmem:[#allocation2 + $0x5c] sm:$0xf] %vm2738, 0
      %2763 = vst.msk [vmem:[#allocation2 + $0x60] sm:$0xf] %vm2738, 0
      %2764 = vst.msk [vmem:[#allocation2 + $0x64] sm:$0xf] %vm2738, 0
      %2765 = vst.msk [vmem:[#allocation2 + $0x68] sm:$0xf] %vm2738, 0
      %2766 = vst.msk [vmem:[#allocation2 + $0x6c] sm:$0xf] %vm2738, 0
      %2767 = vst.msk [vmem:[#allocation2 + $0x70] sm:$0xf] %vm2738, 0
      %2768 = vst.msk [vmem:[#allocation2 + $0x74] sm:$0xf] %vm2738, 0
      %2769 = vst.msk [vmem:[#allocation2 + $0x78] sm:$0xf] %vm2738, 0
      %2770 = vst.msk [vmem:[#allocation2 + $0x7c] sm:$0xf] %vm2738, 0
      %2771 = vst.msk [vmem:[#allocation2 + $0x80] sm:$0xf] %vm2738, 0
      %2772 = vst.msk [vmem:[#allocation2 + $0x84] sm:$0xf] %vm2738, 0
      %2773 = vst.msk [vmem:[#allocation2 + $0x88] sm:$0xf] %vm2738, 0
      %2774 = vst.msk [vmem:[#allocation2 + $0x8c] sm:$0xf] %vm2738, 0
      %2775 = vst.msk [vmem:[#allocation2 + $0x90] sm:$0xf] %vm2738, 0
      %2776 = vst.msk [vmem:[#allocation2 + $0x94] sm:$0xf] %vm2738, 0
      %2777 = vst.msk [vmem:[#allocation2 + $0x98] sm:$0xf] %vm2738, 0
      %2778 = vst.msk [vmem:[#allocation2 + $0x9c] sm:$0xf] %vm2738, 0
      %2779 = vst.msk [vmem:[#allocation2 + $0xa0] sm:$0xf] %vm2738, 0
      %2780 = vst.msk [vmem:[#allocation2 + $0xa4] sm:$0xf] %vm2738, 0
      %vm2781 = vcmask 124928
      %2782 = vst.msk [vmem:[#allocation2 + $0xa8] sm:$0x7] %vm2781, 0
      %v2784 = vunpack.c.l.b16 %v2707
      %v2785 = vunpack.c.h.b16 %v2707
      %v2786 = vpack.c.b16 %v2784, %v2784
      %v2787 = vpack.c.b16 %v2785, %v2785
      %vm2788 = vsmask.f32 1280
      %vm2789 = vsmask.f32 5392
      %vm2790 = vmor %vm2788, %vm2789
      %v2792 = vshrl.u32 %v2786, 16
      %v2794 = vrot.slane %v2792, 6
      %v2795 = vshll.u32 %v2786, 16
      %v2797 = vrot.slane %v2795, 7
      %v2798 = vor.u32 %v2794, %v2797
      %v2799 = vrot.slane %v2798, 4
      %v2801 = vshrl.u32 %v2787, 16
      %v2803 = vrot.slane %v2801, 6
      %v2804 = vshll.u32 %v2787, 16
      %v2806 = vrot.slane %v2804, 7
      %v2807 = vor.u32 %v2803, %v2806
      %v2808 = vsel %vm2790, %v2799, %v2807
      %v2809 = vrot.slane %v2807, 4
      %vm2813 = vcmask 125953
      %vm2814 = vsmask.f32 7942
      %vm2815 = vmand %vm2813, %vm2814
      %v2816 = vld [vmem:[#allocation2 + $0x8] sm:$0xe]
      %v2817 = vsel %vm2815, %v2798, %v2816
      %2818 = vst [vmem:[#allocation2 + $0x8] sm:$0xe] %v2817
      %2819 = vst.msk [vmem:[#allocation2 + $0xc] sm:$0xf] %vm2738, %v2808
      %vm2820 = vcmask 123904
      %vm2821 = vmand %vm2820, %vm2788
      %v2822 = vld [vmem:[#allocation2 + $0x10] sm:$0x3]
      %v2823 = vsel %vm2821, %v2809, %v2822
      %2824 = vst [vmem:[#allocation2 + $0x10] sm:$0x3] %v2823
      %v2826 = vunpack.c.l.b16 %v2709
      %v2827 = vunpack.c.h.b16 %v2709
      %v2828 = vpack.c.b16 %v2826, %v2826
      %v2829 = vpack.c.b16 %v2827, %v2827
      %vm2830 = vsmask.f32 2304
      %vm2831 = vsmask.f32 6416
      %vm2832 = vmor %vm2830, %vm2831
      %v2834 = vshrl.u32 %v2828, 16
      %v2836 = vrot.slane %v2834, 5
      %v2837 = vshll.u32 %v2828, 16
      %v2839 = vrot.slane %v2837, 6
      %v2840 = vor.u32 %v2836, %v2839
      %v2841 = vrot.slane %v2840, 4
      %v2843 = vshrl.u32 %v2829, 16
      %v2845 = vrot.slane %v2843, 5
      %v2846 = vshll.u32 %v2829, 16
      %v2848 = vrot.slane %v2846, 6
      %v2849 = vor.u32 %v2845, %v2848
      %v2850 = vsel %vm2832, %v2841, %v2849
      %v2851 = vrot.slane %v2849, 4
      %vm2855 = vcmask 125954
      %vm2856 = vsmask.f32 7946
      %vm2857 = vmand %vm2855, %vm2856
      %v2858 = vld [vmem:[#allocation2 + $0x10] sm:$0xc]
      %v2859 = vsel %vm2857, %v2840, %v2858
      %2860 = vst [vmem:[#allocation2 + $0x10] sm:$0xc] %v2859
      %2861 = vst.msk [vmem:[#allocation2 + $0x14] sm:$0xf] %vm2738, %v2850
      %vm2862 = vcmask 124928
      %vm2863 = vmand %vm2862, %vm2830
      %v2864 = vld [vmem:[#allocation2 + $0x18] sm:$0x7]
      %v2865 = vsel %vm2863, %v2851, %v2864
      %2866 = vst [vmem:[#allocation2 + $0x18] sm:$0x7] %v2865
      %v2868 = vunpack.c.l.b16 %v2711
      %v2869 = vunpack.c.h.b16 %v2711
      %v2870 = vpack.c.b16 %v2868, %v2868
      %v2871 = vpack.c.b16 %v2869, %v2869
      %vm2872 = vsmask.f32 3328
      %vm2873 = vsmask.f32 7440
      %vm2874 = vmor %vm2872, %vm2873
      %v2876 = vshll.u32 %v2870, 16
      %v2878 = vrot.slane %v2876, 5
      %v2879 = vshrl.u32 %v2870, 16
      %v2881 = vrot.slane %v2879, 4
      %v2882 = vor.u32 %v2881, %v2878
      %v2883 = vrot.slane %v2882, 4
      %v2885 = vshll.u32 %v2871, 16
      %v2887 = vrot.slane %v2885, 5
      %v2888 = vsel %vm2874, %v2883, %v2887
      %v2889 = vshrl.u32 %v2871, 16
      %v2891 = vrot.slane %v2889, 4
      %v2892 = vor.u32 %v2891, %v2887
      %v2893 = vrot.slane %v2892, 4
      %vm2897 = vcmask 125955
      %vm2898 = vsmask.f32 7950
      %vm2899 = vmand %vm2897, %vm2898
      %v2900 = vld [vmem:[#allocation2 + $0x18] sm:$0x8]
      %v2901 = vsel %vm2899, %v2878, %v2900
      %2902 = vst [vmem:[#allocation2 + $0x18] sm:$0x8] %v2901
      %2903 = vst.msk [vmem:[#allocation2 + $0x1c] sm:$0xf] %vm2738, %v2888
      %vm2904 = vcmask 125952
      %vm2905 = vmand %vm2904, %vm2872
      %v2906 = vld [vmem:[#allocation2 + $0x20] sm:$0xf]
      %v2907 = vsel %vm2905, %v2893, %v2906
      %2908 = vst [vmem:[#allocation2 + $0x20] sm:$0xf] %v2907
      %v2910 = vunpack.c.l.b16 %v2713
      %v2911 = vunpack.c.h.b16 %v2713
      %v2912 = vpack.c.b16 %v2910, %v2910
      %v2913 = vpack.c.b16 %v2911, %v2911
      %vm2914 = vsmask.f32 256
      %vm2915 = vsmask.f32 4368
      %vm2916 = vmor %vm2914, %vm2915
      %v2918 = vshrl.u32 %v2912, 16
      %v2920 = vrot.slane %v2918, 7
      %v2921 = vshll.u32 %v2912, 16
      %v2923 = vor.u32 %v2920, %v2921
      %v2924 = vrot.slane %v2920, 4
      %v2926 = vshrl.u32 %v2913, 16
      %v2928 = vrot.slane %v2926, 7
      %v2929 = vshll.u32 %v2913, 16
      %v2931 = vor.u32 %v2928, %v2929
      %v2932 = vsel %vm2916, %v2924, %v2931
      %v2933 = vrot.slane %v2928, 4
      %vm2937 = vsmask.f32 7938
      %vm2938 = vmand %vm2904, %vm2937
      %v2939 = vld [vmem:[#allocation2 + $0x24] sm:$0xf]
      %v2940 = vsel %vm2938, %v2923, %v2939
      %2941 = vst [vmem:[#allocation2 + $0x24] sm:$0xf] %v2940
      %2942 = vst.msk [vmem:[#allocation2 + $0x28] sm:$0xf] %vm2738, %v2932
      %vm2943 = vcmask 122880
      %vm2944 = vmand %vm2943, %vm2914
      %v2945 = vld [vmem:[#allocation2 + $0x2c] sm:$0x1]
      %v2946 = vsel %vm2944, %v2933, %v2945
      %2947 = vst [vmem:[#allocation2 + $0x2c] sm:$0x1] %v2946
      %v2949 = vunpack.c.l.b16 %v2715
      %v2950 = vunpack.c.h.b16 %v2715
      %v2951 = vpack.c.b16 %v2949, %v2949
      %v2952 = vpack.c.b16 %v2950, %v2950
      %v2954 = vshrl.u32 %v2951, 16
      %v2956 = vrot.slane %v2954, 6
      %v2957 = vshll.u32 %v2951, 16
      %v2959 = vrot.slane %v2957, 7
      %v2960 = vor.u32 %v2956, %v2959
      %v2961 = vrot.slane %v2960, 4
      %v2963 = vshrl.u32 %v2952, 16
      %v2965 = vrot.slane %v2963, 6
      %v2966 = vshll.u32 %v2952, 16
      %v2968 = vrot.slane %v2966, 7
      %v2969 = vor.u32 %v2965, %v2968
      %v2970 = vsel %vm2790, %v2961, %v2969
      %v2971 = vrot.slane %v2969, 4
      %v2975 = vld [vmem:[#allocation2 + $0x2c] sm:$0xe]
      %v2976 = vsel %vm2815, %v2960, %v2975
      %2977 = vst [vmem:[#allocation2 + $0x2c] sm:$0xe] %v2976
      %2978 = vst.msk [vmem:[#allocation2 + $0x30] sm:$0xf] %vm2738, %v2970
      %v2979 = vld [vmem:[#allocation2 + $0x34] sm:$0x3]
      %v2980 = vsel %vm2821, %v2971, %v2979
      %2981 = vst [vmem:[#allocation2 + $0x34] sm:$0x3] %v2980
      %v2983 = vunpack.c.l.b16 %v2717
      %v2984 = vunpack.c.h.b16 %v2717
      %v2985 = vpack.c.b16 %v2983, %v2983
      %v2986 = vpack.c.b16 %v2984, %v2984
      %v2988 = vshrl.u32 %v2985, 16
      %v2990 = vrot.slane %v2988, 5
      %v2991 = vshll.u32 %v2985, 16
      %v2993 = vrot.slane %v2991, 6
      %v2994 = vor.u32 %v2990, %v2993
      %v2995 = vrot.slane %v2994, 4
      %v2997 = vshrl.u32 %v2986, 16
      %v2999 = vrot.slane %v2997, 5
      %v3000 = vshll.u32 %v2986, 16
      %v3002 = vrot.slane %v3000, 6
      %v3003 = vor.u32 %v2999, %v3002
      %v3004 = vsel %vm2832, %v2995, %v3003
      %v3005 = vrot.slane %v3003, 4
      %v3009 = vld [vmem:[#allocation2 + $0x34] sm:$0xc]
      %v3010 = vsel %vm2857, %v2994, %v3009
      %3011 = vst [vmem:[#allocation2 + $0x34] sm:$0xc] %v3010
      %3012 = vst.msk [vmem:[#allocation2 + $0x38] sm:$0xf] %vm2738, %v3004
      %v3013 = vld [vmem:[#allocation2 + $0x3c] sm:$0x7]
      %v3014 = vsel %vm2863, %v3005, %v3013
      %3015 = vst [vmem:[#allocation2 + $0x3c] sm:$0x7] %v3014
      %v3017 = vunpack.c.l.b16 %v2719
      %v3018 = vunpack.c.h.b16 %v2719
      %v3019 = vpack.c.b16 %v3017, %v3017
      %v3020 = vpack.c.b16 %v3018, %v3018
      %v3022 = vshll.u32 %v3019, 16
      %v3024 = vrot.slane %v3022, 5
      %v3025 = vshrl.u32 %v3019, 16
      %v3027 = vrot.slane %v3025, 4
      %v3028 = vor.u32 %v3027, %v3024
      %v3029 = vrot.slane %v3028, 4
      %v3031 = vshll.u32 %v3020, 16
      %v3033 = vrot.slane %v3031, 5
      %v3034 = vsel %vm2874, %v3029, %v3033
      %v3035 = vshrl.u32 %v3020, 16
      %v3037 = vrot.slane %v3035, 4
      %v3038 = vor.u32 %v3037, %v3033
      %v3039 = vrot.slane %v3038, 4
      %v3043 = vld [vmem:[#allocation2 + $0x3c] sm:$0x8]
      %v3044 = vsel %vm2899, %v3024, %v3043
      %3045 = vst [vmem:[#allocation2 + $0x3c] sm:$0x8] %v3044
      %3046 = vst.msk [vmem:[#allocation2 + $0x40] sm:$0xf] %vm2738, %v3034
      %v3047 = vld [vmem:[#allocation2 + $0x44] sm:$0xf]
      %v3048 = vsel %vm2905, %v3039, %v3047
      %3049 = vst [vmem:[#allocation2 + $0x44] sm:$0xf] %v3048
      %v3051 = vunpack.c.l.b16 %v2721
      %v3052 = vunpack.c.h.b16 %v2721
      %v3053 = vpack.c.b16 %v3051, %v3051
      %v3054 = vpack.c.b16 %v3052, %v3052
      %v3056 = vshrl.u32 %v3053, 16
      %v3058 = vrot.slane %v3056, 7
      %v3059 = vshll.u32 %v3053, 16
      %v3061 = vor.u32 %v3058, %v3059
      %v3062 = vrot.slane %v3058, 4
      %v3064 = vshrl.u32 %v3054, 16
      %v3066 = vrot.slane %v3064, 7
      %v3067 = vshll.u32 %v3054, 16
      %v3069 = vor.u32 %v3066, %v3067
      %v3070 = vsel %vm2916, %v3062, %v3069
      %v3071 = vrot.slane %v3066, 4
      %v3075 = vld [vmem:[#allocation2 + $0x48] sm:$0xf]
      %v3076 = vsel %vm2938, %v3061, %v3075
      %3077 = vst [vmem:[#allocation2 + $0x48] sm:$0xf] %v3076
      %3078 = vst.msk [vmem:[#allocation2 + $0x4c] sm:$0xf] %vm2738, %v3070
      %v3079 = vld [vmem:[#allocation2 + $0x50] sm:$0x1]
      %v3080 = vsel %vm2944, %v3071, %v3079
      %3081 = vst [vmem:[#allocation2 + $0x50] sm:$0x1] %v3080
      %v3083 = vunpack.c.l.b16 %v2723
      %v3084 = vunpack.c.h.b16 %v2723
      %v3085 = vpack.c.b16 %v3083, %v3083
      %v3086 = vpack.c.b16 %v3084, %v3084
      %v3088 = vshrl.u32 %v3085, 16
      %v3090 = vrot.slane %v3088, 6
      %v3091 = vshll.u32 %v3085, 16
      %v3093 = vrot.slane %v3091, 7
      %v3094 = vor.u32 %v3090, %v3093
      %v3095 = vrot.slane %v3094, 4
      %v3097 = vshrl.u32 %v3086, 16
      %v3099 = vrot.slane %v3097, 6
      %v3100 = vshll.u32 %v3086, 16
      %v3102 = vrot.slane %v3100, 7
      %v3103 = vor.u32 %v3099, %v3102
      %v3104 = vsel %vm2790, %v3095, %v3103
      %v3105 = vrot.slane %v3103, 4
      %v3109 = vld [vmem:[#allocation2 + $0x50] sm:$0xe]
      %v3110 = vsel %vm2815, %v3094, %v3109
      %3111 = vst [vmem:[#allocation2 + $0x50] sm:$0xe] %v3110
      %3112 = vst.msk [vmem:[#allocation2 + $0x54] sm:$0xf] %vm2738, %v3104
      %v3113 = vld [vmem:[#allocation2 + $0x58] sm:$0x3]
      %v3114 = vsel %vm2821, %v3105, %v3113
      %3115 = vst [vmem:[#allocation2 + $0x58] sm:$0x3] %v3114
      %v3117 = vunpack.c.l.b16 %v2725
      %v3118 = vunpack.c.h.b16 %v2725
      %v3119 = vpack.c.b16 %v3117, %v3117
      %v3120 = vpack.c.b16 %v3118, %v3118
      %v3122 = vshrl.u32 %v3119, 16
      %v3124 = vrot.slane %v3122, 5
      %v3125 = vshll.u32 %v3119, 16
      %v3127 = vrot.slane %v3125, 6
      %v3128 = vor.u32 %v3124, %v3127
      %v3129 = vrot.slane %v3128, 4
      %v3131 = vshrl.u32 %v3120, 16
      %v3133 = vrot.slane %v3131, 5
      %v3134 = vshll.u32 %v3120, 16
      %v3136 = vrot.slane %v3134, 6
      %v3137 = vor.u32 %v3133, %v3136
      %v3138 = vsel %vm2832, %v3129, %v3137
      %v3139 = vrot.slane %v3137, 4
      %v3143 = vld [vmem:[#allocation2 + $0x58] sm:$0xc]
      %v3144 = vsel %vm2857, %v3128, %v3143
      %3145 = vst [vmem:[#allocation2 + $0x58] sm:$0xc] %v3144
      %3146 = vst.msk [vmem:[#allocation2 + $0x5c] sm:$0xf] %vm2738, %v3138
      %v3147 = vld [vmem:[#allocation2 + $0x60] sm:$0x7]
      %v3148 = vsel %vm2863, %v3139, %v3147
      %3149 = vst [vmem:[#allocation2 + $0x60] sm:$0x7] %v3148
      %v3151 = vunpack.c.l.b16 %v2727
      %v3152 = vunpack.c.h.b16 %v2727
      %v3153 = vpack.c.b16 %v3151, %v3151
      %v3154 = vpack.c.b16 %v3152, %v3152
      %v3156 = vshll.u32 %v3153, 16
      %v3158 = vrot.slane %v3156, 5
      %v3159 = vshrl.u32 %v3153, 16
      %v3161 = vrot.slane %v3159, 4
      %v3162 = vor.u32 %v3161, %v3158
      %v3163 = vrot.slane %v3162, 4
      %v3165 = vshll.u32 %v3154, 16
      %v3167 = vrot.slane %v3165, 5
      %v3168 = vsel %vm2874, %v3163, %v3167
      %v3169 = vshrl.u32 %v3154, 16
      %v3171 = vrot.slane %v3169, 4
      %v3172 = vor.u32 %v3171, %v3167
      %v3173 = vrot.slane %v3172, 4
      %v3177 = vld [vmem:[#allocation2 + $0x60] sm:$0x8]
      %v3178 = vsel %vm2899, %v3158, %v3177
      %3179 = vst [vmem:[#allocation2 + $0x60] sm:$0x8] %v3178
      %3180 = vst.msk [vmem:[#allocation2 + $0x64] sm:$0xf] %vm2738, %v3168
      %v3181 = vld [vmem:[#allocation2 + $0x68] sm:$0xf]
      %v3182 = vsel %vm2905, %v3173, %v3181
      %3183 = vst [vmem:[#allocation2 + $0x68] sm:$0xf] %v3182
      %v3185 = vunpack.c.l.b16 %v2729
      %v3186 = vunpack.c.h.b16 %v2729
      %v3187 = vpack.c.b16 %v3185, %v3185
      %v3188 = vpack.c.b16 %v3186, %v3186
      %v3190 = vshrl.u32 %v3187, 16
      %v3192 = vrot.slane %v3190, 7
      %v3193 = vshll.u32 %v3187, 16
      %v3195 = vor.u32 %v3192, %v3193
      %v3196 = vrot.slane %v3192, 4
      %v3198 = vshrl.u32 %v3188, 16
      %v3200 = vrot.slane %v3198, 7
      %v3201 = vshll.u32 %v3188, 16
      %v3203 = vor.u32 %v3200, %v3201
      %v3204 = vsel %vm2916, %v3196, %v3203
      %v3205 = vrot.slane %v3200, 4
      %v3209 = vld [vmem:[#allocation2 + $0x6c] sm:$0xf]
      %v3210 = vsel %vm2938, %v3195, %v3209
      %3211 = vst [vmem:[#allocation2 + $0x6c] sm:$0xf] %v3210
      %3212 = vst.msk [vmem:[#allocation2 + $0x70] sm:$0xf] %vm2738, %v3204
      %v3213 = vld [vmem:[#allocation2 + $0x74] sm:$0x1]
      %v3214 = vsel %vm2944, %v3205, %v3213
      %3215 = vst [vmem:[#allocation2 + $0x74] sm:$0x1] %v3214
      %v3217 = vunpack.c.l.b16 %v2731
      %v3218 = vunpack.c.h.b16 %v2731
      %v3219 = vpack.c.b16 %v3217, %v3217
      %v3220 = vpack.c.b16 %v3218, %v3218
      %v3222 = vshrl.u32 %v3219, 16
      %v3224 = vrot.slane %v3222, 6
      %v3225 = vshll.u32 %v3219, 16
      %v3227 = vrot.slane %v3225, 7
      %v3228 = vor.u32 %v3224, %v3227
      %v3229 = vrot.slane %v3228, 4
      %v3231 = vshrl.u32 %v3220, 16
      %v3233 = vrot.slane %v3231, 6
      %v3234 = vshll.u32 %v3220, 16
      %v3236 = vrot.slane %v3234, 7
      %v3237 = vor.u32 %v3233, %v3236
      %v3238 = vsel %vm2790, %v3229, %v3237
      %v3239 = vrot.slane %v3237, 4
      %v3243 = vld [vmem:[#allocation2 + $0x74] sm:$0xe]
      %v3244 = vsel %vm2815, %v3228, %v3243
      %3245 = vst [vmem:[#allocation2 + $0x74] sm:$0xe] %v3244
      %3246 = vst.msk [vmem:[#allocation2 + $0x78] sm:$0xf] %vm2738, %v3238
      %v3247 = vld [vmem:[#allocation2 + $0x7c] sm:$0x3]
      %v3248 = vsel %vm2821, %v3239, %v3247
      %3249 = vst [vmem:[#allocation2 + $0x7c] sm:$0x3] %v3248
      %v3251 = vunpack.c.l.b16 %v2733
      %v3252 = vunpack.c.h.b16 %v2733
      %v3253 = vpack.c.b16 %v3251, %v3251
      %v3254 = vpack.c.b16 %v3252, %v3252
      %v3256 = vshrl.u32 %v3253, 16
      %v3258 = vrot.slane %v3256, 5
      %v3259 = vshll.u32 %v3253, 16
      %v3261 = vrot.slane %v3259, 6
      %v3262 = vor.u32 %v3258, %v3261
      %v3263 = vrot.slane %v3262, 4
      %v3265 = vshrl.u32 %v3254, 16
      %v3267 = vrot.slane %v3265, 5
      %v3268 = vshll.u32 %v3254, 16
      %v3270 = vrot.slane %v3268, 6
      %v3271 = vor.u32 %v3267, %v3270
      %v3272 = vsel %vm2832, %v3263, %v3271
      %v3273 = vrot.slane %v3271, 4
      %v3277 = vld [vmem:[#allocation2 + $0x7c] sm:$0xc]
      %v3278 = vsel %vm2857, %v3262, %v3277
      %3279 = vst [vmem:[#allocation2 + $0x7c] sm:$0xc] %v3278
      %3280 = vst.msk [vmem:[#allocation2 + $0x80] sm:$0xf] %vm2738, %v3272
      %v3281 = vld [vmem:[#allocation2 + $0x84] sm:$0x7]
      %v3282 = vsel %vm2863, %v3273, %v3281
      %3283 = vst [vmem:[#allocation2 + $0x84] sm:$0x7] %v3282
      %v3285 = vunpack.c.l.b16 %v2735
      %v3286 = vunpack.c.h.b16 %v2735
      %v3287 = vpack.c.b16 %v3285, %v3285
      %v3288 = vpack.c.b16 %v3286, %v3286
      %v3290 = vshll.u32 %v3287, 16
      %v3292 = vrot.slane %v3290, 5
      %v3293 = vshrl.u32 %v3287, 16
      %v3295 = vrot.slane %v3293, 4
      %v3296 = vor.u32 %v3295, %v3292
      %v3297 = vrot.slane %v3296, 4
      %v3299 = vshll.u32 %v3288, 16
      %v3301 = vrot.slane %v3299, 5
      %v3302 = vsel %vm2874, %v3297, %v3301
      %v3303 = vshrl.u32 %v3288, 16
      %v3305 = vrot.slane %v3303, 4
      %v3306 = vor.u32 %v3305, %v3301
      %v3307 = vrot.slane %v3306, 4
      %v3311 = vld [vmem:[#allocation2 + $0x84] sm:$0x8]
      %v3312 = vsel %vm2899, %v3292, %v3311
      %3313 = vst [vmem:[#allocation2 + $0x84] sm:$0x8] %v3312
      %3314 = vst.msk [vmem:[#allocation2 + $0x88] sm:$0xf] %vm2738, %v3302
      %v3315 = vld [vmem:[#allocation2 + $0x8c] sm:$0xf]
      %v3316 = vsel %vm2905, %v3307, %v3315
      %3317 = vst [vmem:[#allocation2 + $0x8c] sm:$0xf] %v3316
      %v3319 = vunpack.c.l.b16 %v2737
      %v3320 = vunpack.c.h.b16 %v2737
      %v3321 = vpack.c.b16 %v3319, %v3319
      %v3322 = vpack.c.b16 %v3320, %v3320
      %v3324 = vshrl.u32 %v3321, 16
      %v3326 = vrot.slane %v3324, 7
      %v3327 = vshll.u32 %v3321, 16
      %v3329 = vor.u32 %v3326, %v3327
      %v3330 = vrot.slane %v3326, 4
      %v3332 = vshrl.u32 %v3322, 16
      %v3334 = vrot.slane %v3332, 7
      %v3335 = vshll.u32 %v3322, 16
      %v3337 = vor.u32 %v3334, %v3335
      %v3338 = vsel %vm2916, %v3330, %v3337
      %v3339 = vrot.slane %v3334, 4
      %v3343 = vld [vmem:[#allocation2 + $0x90] sm:$0xf]
      %v3344 = vsel %vm2938, %v3329, %v3343
      %3345 = vst [vmem:[#allocation2 + $0x90] sm:$0xf] %v3344
      %3346 = vst.msk [vmem:[#allocation2 + $0x94] sm:$0xf] %vm2738, %v3338
      %v3347 = vld [vmem:[#allocation2 + $0x98] sm:$0x1]
      %v3348 = vsel %vm2944, %v3339, %v3347
      %3349 = vst [vmem:[#allocation2 + $0x98] sm:$0x1] %v3348
      %v3350 = vld [vmem:[#allocation2] sm:$0xf]
      %v3351 = vld [vmem:[#allocation2 + $0x4] sm:$0xf]
      %v3352 = vld [vmem:[#allocation2 + $0x8] sm:$0xf]
      %v3353 = vld [vmem:[#allocation2 + $0xc] sm:$0xf]
      %v3354 = vld [vmem:[#allocation2 + $0x10] sm:$0xf]
      %v3355 = vld [vmem:[#allocation2 + $0x14] sm:$0xf]
      %v3356 = vld [vmem:[#allocation2 + $0x18] sm:$0xf]
      %v3357 = vld [vmem:[#allocation2 + $0x1c] sm:$0xf]
      %v3358 = vld [vmem:[#allocation2 + $0x20] sm:$0xf]
      %v3359 = vld [vmem:[#allocation2 + $0x24] sm:$0xf]
      %v3360 = vld [vmem:[#allocation2 + $0x28] sm:$0xf]
      %v3361 = vld [vmem:[#allocation2 + $0x2c] sm:$0xf]
      %v3362 = vld [vmem:[#allocation2 + $0x30] sm:$0xf]
      %v3363 = vld [vmem:[#allocation2 + $0x34] sm:$0xf]
      %v3364 = vld [vmem:[#allocation2 + $0x38] sm:$0xf]
      %v3365 = vld [vmem:[#allocation2 + $0x3c] sm:$0xf]
      %v3366 = vld [vmem:[#allocation2 + $0x40] sm:$0xf]
      %v3367 = vld [vmem:[#allocation2 + $0x44] sm:$0xf]
      %v3368 = vld [vmem:[#allocation2 + $0x48] sm:$0xf]
      %v3369 = vld [vmem:[#allocation2 + $0x4c] sm:$0xf]
      %v3370 = vld [vmem:[#allocation2 + $0x50] sm:$0xf]
      %v3371 = vld [vmem:[#allocation2 + $0x54] sm:$0xf]
      %v3372 = vld [vmem:[#allocation2 + $0x58] sm:$0xf]
      %v3373 = vld [vmem:[#allocation2 + $0x5c] sm:$0xf]
      %v3374 = vld [vmem:[#allocation2 + $0x60] sm:$0xf]
      %v3375 = vld [vmem:[#allocation2 + $0x64] sm:$0xf]
      %v3376 = vld [vmem:[#allocation2 + $0x68] sm:$0xf]
      %v3377 = vld [vmem:[#allocation2 + $0x6c] sm:$0xf]
      %v3378 = vld [vmem:[#allocation2 + $0x70] sm:$0xf]
      %v3379 = vld [vmem:[#allocation2 + $0x74] sm:$0xf]
      %v3380 = vld [vmem:[#allocation2 + $0x78] sm:$0xf]
      %v3381 = vld [vmem:[#allocation2 + $0x7c] sm:$0xf]
      %v3382 = vld [vmem:[#allocation2 + $0x80] sm:$0xf]
      %v3383 = vld [vmem:[#allocation2 + $0x84] sm:$0xf]
      %v3384 = vld [vmem:[#allocation2 + $0x88] sm:$0xf]
      %v3385 = vld [vmem:[#allocation2 + $0x8c] sm:$0xf]
      %v3386 = vld [vmem:[%s6] sm:$0xf]
      %v3387 = vld [vmem:[%s6 + $0x4] sm:$0xf]
      %v3388 = vld [vmem:[#allocation2 + $0x90] sm:$0x1]
      %s3389 = scalar_lea.vmem %s6, 8
      %v3390 = vld [vmem:[%s3389] sm:$0xf]
      %v3391 = vld [vmem:[%s3389 + $0x4] sm:$0xf]
      %v3429 = vunpack.c.l.b16 %v3350
      %v3430 = vunpack.c.l.b16 %v3351
      %v3431 = vunpack.c.l.b16 %v3352
      %v3432 = vunpack.c.l.b16 %v3353
      %v3433 = vunpack.c.l.b16 %v3354
      %v3434 = vunpack.c.l.b16 %v3355
      %v3435 = vunpack.c.l.b16 %v3356
      %v3436 = vunpack.c.l.b16 %v3357
      %v3437 = vunpack.c.l.b16 %v3358
      %v3438 = vunpack.c.l.b16 %v3359
      %v3439 = vunpack.c.l.b16 %v3360
      %v3440 = vunpack.c.l.b16 %v3361
      %v3441 = vunpack.c.l.b16 %v3362
      %v3442 = vunpack.c.l.b16 %v3363
      %v3443 = vunpack.c.l.b16 %v3364
      %v3444 = vunpack.c.l.b16 %v3365
      %v3445 = vunpack.c.l.b16 %v3366
      %v3446 = vunpack.c.l.b16 %v3367
      %v3447 = vunpack.c.l.b16 %v3368
      %v3448 = vunpack.c.l.b16 %v3369
      %v3449 = vunpack.c.l.b16 %v3370
      %v3450 = vunpack.c.l.b16 %v3371
      %v3451 = vunpack.c.l.b16 %v3372
      %v3452 = vunpack.c.l.b16 %v3373
      %v3453 = vunpack.c.l.b16 %v3374
      %v3454 = vunpack.c.l.b16 %v3375
      %v3455 = vunpack.c.l.b16 %v3376
      %v3456 = vunpack.c.l.b16 %v3377
      %v3457 = vunpack.c.l.b16 %v3378
      %v3458 = vunpack.c.l.b16 %v3379
      %v3459 = vunpack.c.l.b16 %v3380
      %v3460 = vunpack.c.l.b16 %v3381
      %v3461 = vunpack.c.l.b16 %v3382
      %v3462 = vunpack.c.l.b16 %v3383
      %v3463 = vunpack.c.l.b16 %v3384
      %v3464 = vunpack.c.l.b16 %v3385
      %v3465 = vunpack.c.l.b16 %v3388
      %v3466 = vpack.c.b16 %v3430, %v3429
      %v3467 = vpack.c.b16 %v3432, %v3431
      %v3468 = vpack.c.b16 %v3434, %v3433
      %v3469 = vpack.c.b16 %v3436, %v3435
      %v3470 = vpack.c.b16 %v3438, %v3437
      %v3471 = vpack.c.b16 %v3440, %v3439
      %v3472 = vpack.c.b16 %v3442, %v3441
      %v3473 = vpack.c.b16 %v3444, %v3443
      %v3474 = vpack.c.b16 %v3446, %v3445
      %v3475 = vpack.c.b16 %v3448, %v3447
      %v3476 = vpack.c.b16 %v3450, %v3449
      %v3477 = vpack.c.b16 %v3452, %v3451
      %v3478 = vpack.c.b16 %v3454, %v3453
      %v3479 = vpack.c.b16 %v3456, %v3455
      %v3480 = vpack.c.b16 %v3458, %v3457
      %v3481 = vpack.c.b16 %v3460, %v3459
      %v3482 = vpack.c.b16 %v3462, %v3461
      %v3483 = vpack.c.b16 %v3464, %v3463
      %v3484 = vpack.c.b16 %v3465, %v3465
      %vm3485 = vsmask.f32 7424
      %v3487 = vshrl.u32 %v3466, 16
      %v3489 = vshll.u32 %v3466, 16
      %v3491 = vrot.slane %v3489, 1
      %v3492 = vor.u32 %v3487, %v3491
      %v3494 = vshll.u32 %v3467, 16
      %v3496 = vrot.slane %v3494, 1
      %v3497 = vsel %vm3485, %v3492, %v3496
      %v3498 = vshrl.u32 %v3467, 16
      %v3500 = vor.u32 %v3498, %v3496
      %v3502 = vshll.u32 %v3468, 16
      %v3504 = vrot.slane %v3502, 1
      %v3505 = vsel %vm3485, %v3500, %v3504
      %v3506 = vshrl.u32 %v3468, 16
      %v3508 = vor.u32 %v3506, %v3504
      %v3510 = vshll.u32 %v3469, 16
      %v3512 = vrot.slane %v3510, 1
      %v3513 = vsel %vm3485, %v3508, %v3512
      %v3514 = vshrl.u32 %v3469, 16
      %v3516 = vor.u32 %v3514, %v3512
      %v3518 = vshll.u32 %v3470, 16
      %v3520 = vrot.slane %v3518, 1
      %v3521 = vsel %vm3485, %v3516, %v3520
      %v3522 = vshrl.u32 %v3470, 16
      %v3524 = vor.u32 %v3522, %v3520
      %v3526 = vshll.u32 %v3471, 16
      %v3528 = vrot.slane %v3526, 1
      %v3529 = vsel %vm3485, %v3524, %v3528
      %v3530 = vshrl.u32 %v3471, 16
      %v3532 = vor.u32 %v3530, %v3528
      %v3534 = vshll.u32 %v3472, 16
      %v3536 = vrot.slane %v3534, 1
      %v3537 = vsel %vm3485, %v3532, %v3536
      %v3538 = vshrl.u32 %v3472, 16
      %v3540 = vor.u32 %v3538, %v3536
      %v3542 = vshll.u32 %v3473, 16
      %v3544 = vrot.slane %v3542, 1
      %v3545 = vsel %vm3485, %v3540, %v3544
      %v3546 = vshrl.u32 %v3473, 16
      %v3548 = vor.u32 %v3546, %v3544
      %v3550 = vshll.u32 %v3474, 16
      %v3552 = vrot.slane %v3550, 1
      %v3553 = vsel %vm3485, %v3548, %v3552
      %v3554 = vshrl.u32 %v3474, 16
      %v3556 = vor.u32 %v3554, %v3552
      %v3558 = vshll.u32 %v3475, 16
      %v3560 = vrot.slane %v3558, 1
      %v3561 = vsel %vm3485, %v3556, %v3560
      %v3562 = vshrl.u32 %v3475, 16
      %v3564 = vor.u32 %v3562, %v3560
      %v3566 = vshll.u32 %v3476, 16
      %v3568 = vrot.slane %v3566, 1
      %v3569 = vsel %vm3485, %v3564, %v3568
      %v3570 = vshrl.u32 %v3476, 16
      %v3572 = vor.u32 %v3570, %v3568
      %v3574 = vshll.u32 %v3477, 16
      %v3576 = vrot.slane %v3574, 1
      %v3577 = vsel %vm3485, %v3572, %v3576
      %v3578 = vshrl.u32 %v3477, 16
      %v3580 = vor.u32 %v3578, %v3576
      %v3582 = vshll.u32 %v3478, 16
      %v3584 = vrot.slane %v3582, 1
      %v3585 = vsel %vm3485, %v3580, %v3584
      %v3586 = vshrl.u32 %v3478, 16
      %v3588 = vor.u32 %v3586, %v3584
      %v3590 = vshll.u32 %v3479, 16
      %v3592 = vrot.slane %v3590, 1
      %v3593 = vsel %vm3485, %v3588, %v3592
      %v3594 = vshrl.u32 %v3479, 16
      %v3596 = vor.u32 %v3594, %v3592
      %v3598 = vshll.u32 %v3480, 16
      %v3600 = vrot.slane %v3598, 1
      %v3601 = vsel %vm3485, %v3596, %v3600
      %v3602 = vshrl.u32 %v3480, 16
      %v3604 = vor.u32 %v3602, %v3600
      %v3606 = vshll.u32 %v3481, 16
      %v3608 = vrot.slane %v3606, 1
      %v3609 = vsel %vm3485, %v3604, %v3608
      %v3610 = vshrl.u32 %v3481, 16
      %v3612 = vor.u32 %v3610, %v3608
      %v3614 = vshll.u32 %v3482, 16
      %v3616 = vrot.slane %v3614, 1
      %v3617 = vsel %vm3485, %v3612, %v3616
      %v3618 = vshrl.u32 %v3482, 16
      %v3620 = vor.u32 %v3618, %v3616
      %v3622 = vshll.u32 %v3483, 16
      %v3624 = vrot.slane %v3622, 1
      %v3625 = vsel %vm3485, %v3620, %v3624
      %v3626 = vshrl.u32 %v3483, 16
      %v3628 = vor.u32 %v3626, %v3624
      %v3630 = vshll.u32 %v3484, 16
      %v3632 = vrot.slane %v3630, 1
      %v3633 = vsel %vm3485, %v3628, %v3632
      %v3636 = vunpack.c.l.b16 %v3390
      %v3637 = vunpack.c.l.b16 %v3391
      %v3638 = vpack.c.b16 %v3637, %v3636
      %vm3640 = vcmask 130048
      %v3642 = vsel %vm3640, %v3497, 0
      %v3645 = vsel %vm3640, %v3505, 0
      %v3648 = vsel %vm3640, %v3513, 0
      %v3651 = vsel %vm3640, %v3521, 0
      %v3654 = vsel %vm3640, %v3529, 0
      %v3657 = vsel %vm3640, %v3537, 0
      %v3660 = vsel %vm3640, %v3545, 0
      %v3663 = vsel %vm3640, %v3553, 0
      %v3666 = vsel %vm3640, %v3561, 0
      %v3669 = vsel %vm3640, %v3569, 0
      %v3672 = vsel %vm3640, %v3577, 0
      %v3675 = vsel %vm3640, %v3585, 0
      %v3678 = vsel %vm3640, %v3593, 0
      %v3681 = vsel %vm3640, %v3601, 0
      %v3684 = vsel %vm3640, %v3609, 0
      %v3687 = vsel %vm3640, %v3617, 0
      %v3690 = vsel %vm3640, %v3625, 0
      %v3693 = vsel %vm3640, %v3633, 0
      %3695 = vmatpush.bf16.msra.mxu0 0
      %3696 = vmatpush.bf16.msra.mxu0 0
      %3697 = vmatpush.bf16.msra.mxu0 0
      %3698 = vmatpush.bf16.msra.mxu0 0
      %3699 = vmatpush.bf16.msra.mxu0 0
      %3700 = vmatpush.bf16.msra.mxu0 0
      %3701 = vmatpush.bf16.msra.mxu0 0
      %3702 = vmatpush.bf16.msra.mxu0 %v3638
      %3703 = vmatmul.bf16.gmra.mxu0 %v3642
      %v3704 = vpop.f32.mrf.mxu0
      %v3705 = vadd.f32 0.0, %v3704
      %v3706 = vpop.f32.mrf.mxu0
      %v3707 = vadd.f32 0.0, %v3706
      %3708 = vmatmul.bf16.gmra.mxu0 %v3645
      %v3709 = vpop.f32.mrf.mxu0
      %v3710 = vadd.f32 0.0, %v3709
      %v3711 = vpop.f32.mrf.mxu0
      %v3712 = vadd.f32 0.0, %v3711
      %3713 = vmatmul.bf16.gmra.mxu0 %v3648
      %v3714 = vpop.f32.mrf.mxu0
      %v3715 = vadd.f32 0.0, %v3714
      %v3716 = vpop.f32.mrf.mxu0
      %v3717 = vadd.f32 0.0, %v3716
      %3718 = vmatmul.bf16.gmra.mxu0 %v3651
      %v3719 = vpop.f32.mrf.mxu0
      %v3720 = vadd.f32 0.0, %v3719
      %v3721 = vpop.f32.mrf.mxu0
      %v3722 = vadd.f32 0.0, %v3721
      %3723 = vmatmul.bf16.gmra.mxu0 %v3654
      %v3724 = vpop.f32.mrf.mxu0
      %v3725 = vadd.f32 0.0, %v3724
      %v3726 = vpop.f32.mrf.mxu0
      %v3727 = vadd.f32 0.0, %v3726
      %3728 = vmatmul.bf16.gmra.mxu0 %v3657
      %v3729 = vpop.f32.mrf.mxu0
      %v3730 = vadd.f32 0.0, %v3729
      %v3731 = vpop.f32.mrf.mxu0
      %v3732 = vadd.f32 0.0, %v3731
      %3733 = vmatmul.bf16.gmra.mxu0 %v3660
      %v3734 = vpop.f32.mrf.mxu0
      %v3735 = vadd.f32 0.0, %v3734
      %v3736 = vpop.f32.mrf.mxu0
      %v3737 = vadd.f32 0.0, %v3736
      %3738 = vmatmul.bf16.gmra.mxu0 %v3663
      %v3739 = vpop.f32.mrf.mxu0
      %v3740 = vadd.f32 0.0, %v3739
      %v3741 = vpop.f32.mrf.mxu0
      %v3742 = vadd.f32 0.0, %v3741
      %3743 = vmatmul.bf16.gmra.mxu0 %v3666
      %v3744 = vpop.f32.mrf.mxu0
      %v3745 = vadd.f32 0.0, %v3744
      %v3746 = vpop.f32.mrf.mxu0
      %v3747 = vadd.f32 0.0, %v3746
      %3748 = vmatmul.bf16.gmra.mxu0 %v3669
      %v3749 = vpop.f32.mrf.mxu0
      %v3750 = vadd.f32 0.0, %v3749
      %v3751 = vpop.f32.mrf.mxu0
      %v3752 = vadd.f32 0.0, %v3751
      %3753 = vmatmul.bf16.gmra.mxu0 %v3672
      %v3754 = vpop.f32.mrf.mxu0
      %v3755 = vadd.f32 0.0, %v3754
      %v3756 = vpop.f32.mrf.mxu0
      %v3757 = vadd.f32 0.0, %v3756
      %3758 = vmatmul.bf16.gmra.mxu0 %v3675
      %v3759 = vpop.f32.mrf.mxu0
      %v3760 = vadd.f32 0.0, %v3759
      %v3761 = vpop.f32.mrf.mxu0
      %v3762 = vadd.f32 0.0, %v3761
      %3763 = vmatmul.bf16.gmra.mxu0 %v3678
      %v3764 = vpop.f32.mrf.mxu0
      %v3765 = vadd.f32 0.0, %v3764
      %v3766 = vpop.f32.mrf.mxu0
      %v3767 = vadd.f32 0.0, %v3766
      %3768 = vmatmul.bf16.gmra.mxu0 %v3681
      %v3769 = vpop.f32.mrf.mxu0
      %v3770 = vadd.f32 0.0, %v3769
      %v3771 = vpop.f32.mrf.mxu0
      %v3772 = vadd.f32 0.0, %v3771
      %3773 = vmatmul.bf16.gmra.mxu0 %v3684
      %v3774 = vpop.f32.mrf.mxu0
      %v3775 = vadd.f32 0.0, %v3774
      %v3776 = vpop.f32.mrf.mxu0
      %v3777 = vadd.f32 0.0, %v3776
      %3778 = vmatmul.bf16.gmra.mxu0 %v3687
      %v3779 = vpop.f32.mrf.mxu0
      %v3780 = vadd.f32 0.0, %v3779
      %v3781 = vpop.f32.mrf.mxu0
      %v3782 = vadd.f32 0.0, %v3781
      %3783 = vmatmul.bf16.gmra.mxu0 %v3690
      %v3784 = vpop.f32.mrf.mxu0
      %v3785 = vadd.f32 0.0, %v3784
      %v3786 = vpop.f32.mrf.mxu0
      %v3787 = vadd.f32 0.0, %v3786
      %3788 = vmatmul.bf16.gmra.mxu0 %v3693
      %v3789 = vpop.f32.mrf.mxu0
      %v3790 = vadd.f32 0.0, %v3789
      %v3791 = vpop.f32.mrf.mxu0
      %v3792 = vadd.f32 0.0, %v3791
      %3793 = vdwg.mxu0
      %v3796 = vunpack.c.l.b16 %v3386
      %v3797 = vunpack.c.l.b16 %v3387
      %v3798 = vpack.c.b16 %v3797, %v3796
      %v3800 = vsel %vm3640, %v3466, 0
      %v3802 = vsel %vm3640, %v3467, 0
      %v3804 = vsel %vm3640, %v3468, 0
      %v3806 = vsel %vm3640, %v3469, 0
      %v3808 = vsel %vm3640, %v3470, 0
      %v3810 = vsel %vm3640, %v3471, 0
      %v3812 = vsel %vm3640, %v3472, 0
      %v3814 = vsel %vm3640, %v3473, 0
      %v3816 = vsel %vm3640, %v3474, 0
      %v3818 = vsel %vm3640, %v3475, 0
      %v3820 = vsel %vm3640, %v3476, 0
      %v3822 = vsel %vm3640, %v3477, 0
      %v3824 = vsel %vm3640, %v3478, 0
      %v3826 = vsel %vm3640, %v3479, 0
      %v3828 = vsel %vm3640, %v3480, 0
      %v3830 = vsel %vm3640, %v3481, 0
      %v3832 = vsel %vm3640, %v3482, 0
      %v3834 = vsel %vm3640, %v3483, 0
      %3836 = vmatpush.bf16.msra.mxu0 0
      %3837 = vmatpush.bf16.msra.mxu0 0
      %3838 = vmatpush.bf16.msra.mxu0 0
      %3839 = vmatpush.bf16.msra.mxu0 0
      %3840 = vmatpush.bf16.msra.mxu0 0
      %3841 = vmatpush.bf16.msra.mxu0 0
      %3842 = vmatpush.bf16.msra.mxu0 0
      %3843 = vmatpush.bf16.msra.mxu0 %v3798
      %3844 = vmatmul.bf16.gmra.mxu0 %v3800
      %v3845 = vpop.f32.mrf.mxu0
      %v3846 = vadd.f32 %v3705, %v3845
      %v3847 = vpop.f32.mrf.mxu0
      %v3848 = vadd.f32 %v3707, %v3847
      %3849 = vmatmul.bf16.gmra.mxu0 %v3802
      %v3850 = vpop.f32.mrf.mxu0
      %v3851 = vadd.f32 %v3710, %v3850
      %v3852 = vpop.f32.mrf.mxu0
      %v3853 = vadd.f32 %v3712, %v3852
      %3854 = vmatmul.bf16.gmra.mxu0 %v3804
      %v3855 = vpop.f32.mrf.mxu0
      %v3856 = vadd.f32 %v3715, %v3855
      %v3857 = vpop.f32.mrf.mxu0
      %v3858 = vadd.f32 %v3717, %v3857
      %3859 = vmatmul.bf16.gmra.mxu0 %v3806
      %v3860 = vpop.f32.mrf.mxu0
      %v3861 = vadd.f32 %v3720, %v3860
      %v3862 = vpop.f32.mrf.mxu0
      %v3863 = vadd.f32 %v3722, %v3862
      %3864 = vmatmul.bf16.gmra.mxu0 %v3808
      %v3865 = vpop.f32.mrf.mxu0
      %v3866 = vadd.f32 %v3725, %v3865
      %v3867 = vpop.f32.mrf.mxu0
      %v3868 = vadd.f32 %v3727, %v3867
      %3869 = vmatmul.bf16.gmra.mxu0 %v3810
      %v3870 = vpop.f32.mrf.mxu0
      %v3871 = vadd.f32 %v3730, %v3870
      %v3872 = vpop.f32.mrf.mxu0
      %v3873 = vadd.f32 %v3732, %v3872
      %3874 = vmatmul.bf16.gmra.mxu0 %v3812
      %v3875 = vpop.f32.mrf.mxu0
      %v3876 = vadd.f32 %v3735, %v3875
      %v3877 = vpop.f32.mrf.mxu0
      %v3878 = vadd.f32 %v3737, %v3877
      %3879 = vmatmul.bf16.gmra.mxu0 %v3814
      %v3880 = vpop.f32.mrf.mxu0
      %v3881 = vadd.f32 %v3740, %v3880
      %v3882 = vpop.f32.mrf.mxu0
      %v3883 = vadd.f32 %v3742, %v3882
      %3884 = vmatmul.bf16.gmra.mxu0 %v3816
      %v3885 = vpop.f32.mrf.mxu0
      %v3886 = vadd.f32 %v3745, %v3885
      %v3887 = vpop.f32.mrf.mxu0
      %v3888 = vadd.f32 %v3747, %v3887
      %3889 = vmatmul.bf16.gmra.mxu0 %v3818
      %v3890 = vpop.f32.mrf.mxu0
      %v3891 = vadd.f32 %v3750, %v3890
      %v3892 = vpop.f32.mrf.mxu0
      %v3893 = vadd.f32 %v3752, %v3892
      %3894 = vmatmul.bf16.gmra.mxu0 %v3820
      %v3895 = vpop.f32.mrf.mxu0
      %v3896 = vadd.f32 %v3755, %v3895
      %v3897 = vpop.f32.mrf.mxu0
      %v3898 = vadd.f32 %v3757, %v3897
      %3899 = vmatmul.bf16.gmra.mxu0 %v3822
      %v3900 = vpop.f32.mrf.mxu0
      %v3901 = vadd.f32 %v3760, %v3900
      %v3902 = vpop.f32.mrf.mxu0
      %v3903 = vadd.f32 %v3762, %v3902
      %3904 = vmatmul.bf16.gmra.mxu0 %v3824
      %v3905 = vpop.f32.mrf.mxu0
      %v3906 = vadd.f32 %v3765, %v3905
      %v3907 = vpop.f32.mrf.mxu0
      %v3908 = vadd.f32 %v3767, %v3907
      %3909 = vmatmul.bf16.gmra.mxu0 %v3826
      %v3910 = vpop.f32.mrf.mxu0
      %v3911 = vadd.f32 %v3770, %v3910
      %v3912 = vpop.f32.mrf.mxu0
      %v3913 = vadd.f32 %v3772, %v3912
      %3914 = vmatmul.bf16.gmra.mxu0 %v3828
      %v3915 = vpop.f32.mrf.mxu0
      %v3916 = vadd.f32 %v3775, %v3915
      %v3917 = vpop.f32.mrf.mxu0
      %v3918 = vadd.f32 %v3777, %v3917
      %3919 = vmatmul.bf16.gmra.mxu0 %v3830
      %v3920 = vpop.f32.mrf.mxu0
      %v3921 = vadd.f32 %v3780, %v3920
      %v3922 = vpop.f32.mrf.mxu0
      %v3923 = vadd.f32 %v3782, %v3922
      %3924 = vmatmul.bf16.gmra.mxu0 %v3832
      %v3925 = vpop.f32.mrf.mxu0
      %v3926 = vadd.f32 %v3785, %v3925
      %v3927 = vpop.f32.mrf.mxu0
      %v3928 = vadd.f32 %v3787, %v3927
      %3929 = vmatmul.bf16.gmra.mxu0 %v3834
      %v3930 = vpop.f32.mrf.mxu0
      %v3931 = vadd.f32 %v3790, %v3930
      %v3932 = vpop.f32.mrf.mxu0
      %v3933 = vadd.f32 %v3792, %v3932
      %3934 = vdwg.mxu0
      %v3935 = vld [vmem:[#allocation2] sm:$0xe]
      %s3936 = scalar_lea.vmem %s6, 16
      %v3937 = vld [vmem:[%s3936] sm:$0xf]
      %v3938 = vld [vmem:[%s3936 + $0x4] sm:$0xf]
      %v3940 = vunpack.c.l.b16 %v3935
      %v3941 = vpack.c.b16 %v3430, %v3940
      %vm3942 = vcmask 1046528
      %v3943 = vrot.slane %v3941, 1
      %v3944 = vrot.slane %v3467, 1
      %v3945 = vsel %vm3942, %v3943, %v3944
      %v3946 = vrot.slane %v3468, 1
      %v3947 = vsel %vm3942, %v3944, %v3946
      %v3948 = vrot.slane %v3469, 1
      %v3949 = vsel %vm3942, %v3946, %v3948
      %v3950 = vrot.slane %v3470, 1
      %v3951 = vsel %vm3942, %v3948, %v3950
      %v3952 = vrot.slane %v3471, 1
      %v3953 = vsel %vm3942, %v3950, %v3952
      %v3954 = vrot.slane %v3472, 1
      %v3955 = vsel %vm3942, %v3952, %v3954
      %v3956 = vrot.slane %v3473, 1
      %v3957 = vsel %vm3942, %v3954, %v3956
      %v3958 = vrot.slane %v3474, 1
      %v3959 = vsel %vm3942, %v3956, %v3958
      %v3960 = vrot.slane %v3475, 1
      %v3961 = vsel %vm3942, %v3958, %v3960
      %v3962 = vrot.slane %v3476, 1
      %v3963 = vsel %vm3942, %v3960, %v3962
      %v3964 = vrot.slane %v3477, 1
      %v3965 = vsel %vm3942, %v3962, %v3964
      %v3966 = vrot.slane %v3478, 1
      %v3967 = vsel %vm3942, %v3964, %v3966
      %v3968 = vrot.slane %v3479, 1
      %v3969 = vsel %vm3942, %v3966, %v3968
      %v3970 = vrot.slane %v3480, 1
      %v3971 = vsel %vm3942, %v3968, %v3970
      %v3972 = vrot.slane %v3481, 1
      %v3973 = vsel %vm3942, %v3970, %v3972
      %v3974 = vrot.slane %v3482, 1
      %v3975 = vsel %vm3942, %v3972, %v3974
      %v3976 = vrot.slane %v3483, 1
      %v3977 = vsel %vm3942, %v3974, %v3976
      %v3978 = vrot.slane %v3484, 1
      %v3979 = vsel %vm3942, %v3976, %v3978
      %v3982 = vunpack.c.l.b16 %v3937
      %v3983 = vunpack.c.l.b16 %v3938
      %v3984 = vpack.c.b16 %v3983, %v3982
      %v3987 = vsel %vm3640, %v3945, 0
      %v3990 = vsel %vm3640, %v3947, 0
      %v3993 = vsel %vm3640, %v3949, 0
      %v3996 = vsel %vm3640, %v3951, 0
      %v3999 = vsel %vm3640, %v3953, 0
      %v4002 = vsel %vm3640, %v3955, 0
      %v4005 = vsel %vm3640, %v3957, 0
      %v4008 = vsel %vm3640, %v3959, 0
      %v4011 = vsel %vm3640, %v3961, 0
      %v4014 = vsel %vm3640, %v3963, 0
      %v4017 = vsel %vm3640, %v3965, 0
      %v4020 = vsel %vm3640, %v3967, 0
      %v4023 = vsel %vm3640, %v3969, 0
      %v4026 = vsel %vm3640, %v3971, 0
      %v4029 = vsel %vm3640, %v3973, 0
      %v4032 = vsel %vm3640, %v3975, 0
      %v4035 = vsel %vm3640, %v3977, 0
      %v4038 = vsel %vm3640, %v3979, 0
      %4040 = vmatpush.bf16.msra.mxu0 0
      %4041 = vmatpush.bf16.msra.mxu0 0
      %4042 = vmatpush.bf16.msra.mxu0 0
      %4043 = vmatpush.bf16.msra.mxu0 0
      %4044 = vmatpush.bf16.msra.mxu0 0
      %4045 = vmatpush.bf16.msra.mxu0 0
      %4046 = vmatpush.bf16.msra.mxu0 0
      %4047 = vmatpush.bf16.msra.mxu0 %v3984
      %4048 = vmatmul.bf16.gmra.mxu0 %v3987
      %v4049 = vpop.f32.mrf.mxu0
      %v4050 = vadd.f32 0.0, %v4049
      %v4051 = vpop.f32.mrf.mxu0
      %v4052 = vadd.f32 0.0, %v4051
      %4053 = vmatmul.bf16.gmra.mxu0 %v3990
      %v4054 = vpop.f32.mrf.mxu0
      %v4055 = vadd.f32 0.0, %v4054
      %v4056 = vpop.f32.mrf.mxu0
      %v4057 = vadd.f32 0.0, %v4056
      %4058 = vmatmul.bf16.gmra.mxu0 %v3993
      %v4059 = vpop.f32.mrf.mxu0
      %v4060 = vadd.f32 0.0, %v4059
      %v4061 = vpop.f32.mrf.mxu0
      %v4062 = vadd.f32 0.0, %v4061
      %4063 = vmatmul.bf16.gmra.mxu0 %v3996
      %v4064 = vpop.f32.mrf.mxu0
      %v4065 = vadd.f32 0.0, %v4064
      %v4066 = vpop.f32.mrf.mxu0
      %v4067 = vadd.f32 0.0, %v4066
      %4068 = vmatmul.bf16.gmra.mxu0 %v3999
      %v4069 = vpop.f32.mrf.mxu0
      %v4070 = vadd.f32 0.0, %v4069
      %v4071 = vpop.f32.mrf.mxu0
      %v4072 = vadd.f32 0.0, %v4071
      %4073 = vmatmul.bf16.gmra.mxu0 %v4002
      %v4074 = vpop.f32.mrf.mxu0
      %v4075 = vadd.f32 0.0, %v4074
      %v4076 = vpop.f32.mrf.mxu0
      %v4077 = vadd.f32 0.0, %v4076
      %4078 = vmatmul.bf16.gmra.mxu0 %v4005
      %v4079 = vpop.f32.mrf.mxu0
      %v4080 = vadd.f32 0.0, %v4079
      %v4081 = vpop.f32.mrf.mxu0
      %v4082 = vadd.f32 0.0, %v4081
      %4083 = vmatmul.bf16.gmra.mxu0 %v4008
      %v4084 = vpop.f32.mrf.mxu0
      %v4085 = vadd.f32 0.0, %v4084
      %v4086 = vpop.f32.mrf.mxu0
      %v4087 = vadd.f32 0.0, %v4086
      %4088 = vmatmul.bf16.gmra.mxu0 %v4011
      %v4089 = vpop.f32.mrf.mxu0
      %v4090 = vadd.f32 0.0, %v4089
      %v4091 = vpop.f32.mrf.mxu0
      %v4092 = vadd.f32 0.0, %v4091
      %4093 = vmatmul.bf16.gmra.mxu0 %v4014
      %v4094 = vpop.f32.mrf.mxu0
      %v4095 = vadd.f32 0.0, %v4094
      %v4096 = vpop.f32.mrf.mxu0
      %v4097 = vadd.f32 0.0, %v4096
      %4098 = vmatmul.bf16.gmra.mxu0 %v4017
      %v4099 = vpop.f32.mrf.mxu0
      %v4100 = vadd.f32 0.0, %v4099
      %v4101 = vpop.f32.mrf.mxu0
      %v4102 = vadd.f32 0.0, %v4101
      %4103 = vmatmul.bf16.gmra.mxu0 %v4020
      %v4104 = vpop.f32.mrf.mxu0
      %v4105 = vadd.f32 0.0, %v4104
      %v4106 = vpop.f32.mrf.mxu0
      %v4107 = vadd.f32 0.0, %v4106
      %4108 = vmatmul.bf16.gmra.mxu0 %v4023
      %v4109 = vpop.f32.mrf.mxu0
      %v4110 = vadd.f32 0.0, %v4109
      %v4111 = vpop.f32.mrf.mxu0
      %v4112 = vadd.f32 0.0, %v4111
      %4113 = vmatmul.bf16.gmra.mxu0 %v4026
      %v4114 = vpop.f32.mrf.mxu0
      %v4115 = vadd.f32 0.0, %v4114
      %v4116 = vpop.f32.mrf.mxu0
      %v4117 = vadd.f32 0.0, %v4116
      %4118 = vmatmul.bf16.gmra.mxu0 %v4029
      %v4119 = vpop.f32.mrf.mxu0
      %v4120 = vadd.f32 0.0, %v4119
      %v4121 = vpop.f32.mrf.mxu0
      %v4122 = vadd.f32 0.0, %v4121
      %4123 = vmatmul.bf16.gmra.mxu0 %v4032
      %v4124 = vpop.f32.mrf.mxu0
      %v4125 = vadd.f32 0.0, %v4124
      %v4126 = vpop.f32.mrf.mxu0
      %v4127 = vadd.f32 0.0, %v4126
      %4128 = vmatmul.bf16.gmra.mxu0 %v4035
      %v4129 = vpop.f32.mrf.mxu0
      %v4130 = vadd.f32 0.0, %v4129
      %v4131 = vpop.f32.mrf.mxu0
      %v4132 = vadd.f32 0.0, %v4131
      %4133 = vmatmul.bf16.gmra.mxu0 %v4038
      %v4134 = vpop.f32.mrf.mxu0
      %v4135 = vadd.f32 0.0, %v4134
      %v4136 = vpop.f32.mrf.mxu0
      %v4137 = vadd.f32 0.0, %v4136
      %4138 = vdwg.mxu0
      %v4139 = vadd.f32 %v3846, %v4050
      %v4140 = vadd.f32 %v3848, %v4052
      %v4141 = vadd.f32 %v3851, %v4055
      %v4142 = vadd.f32 %v3853, %v4057
      %v4143 = vadd.f32 %v3856, %v4060
      %v4144 = vadd.f32 %v3858, %v4062
      %v4145 = vadd.f32 %v3861, %v4065
      %v4146 = vadd.f32 %v3863, %v4067
      %v4147 = vadd.f32 %v3866, %v4070
      %v4148 = vadd.f32 %v3868, %v4072
      %v4149 = vadd.f32 %v3871, %v4075
      %v4150 = vadd.f32 %v3873, %v4077
      %v4151 = vadd.f32 %v3876, %v4080
      %v4152 = vadd.f32 %v3878, %v4082
      %v4153 = vadd.f32 %v3881, %v4085
      %v4154 = vadd.f32 %v3883, %v4087
      %v4155 = vadd.f32 %v3886, %v4090
      %v4156 = vadd.f32 %v3888, %v4092
      %v4157 = vadd.f32 %v3891, %v4095
      %v4158 = vadd.f32 %v3893, %v4097
      %v4159 = vadd.f32 %v3896, %v4100
      %v4160 = vadd.f32 %v3898, %v4102
      %v4161 = vadd.f32 %v3901, %v4105
      %v4162 = vadd.f32 %v3903, %v4107
      %v4163 = vadd.f32 %v3906, %v4110
      %v4164 = vadd.f32 %v3908, %v4112
      %v4165 = vadd.f32 %v3911, %v4115
      %v4166 = vadd.f32 %v3913, %v4117
      %v4167 = vadd.f32 %v3916, %v4120
      %v4168 = vadd.f32 %v3918, %v4122
      %v4169 = vadd.f32 %v3921, %v4125
      %v4170 = vadd.f32 %v3923, %v4127
      %v4171 = vadd.f32 %v3926, %v4130
      %v4172 = vadd.f32 %v3928, %v4132
      %v4173 = vadd.f32 %v3931, %v4135
      %v4174 = vadd.f32 %v3933, %v4137
      %v4175 = vld [vmem:[#allocation2 + $0x8] sm:$0xe]
      %v4176 = vld [vmem:[#allocation2 + $0xc] sm:$0xf]
      %v4177 = vld [vmem:[#allocation2 + $0x10] sm:$0xf]
      %v4178 = vld [vmem:[#allocation2 + $0x14] sm:$0xf]
      %v4179 = vld [vmem:[#allocation2 + $0x18] sm:$0xf]
      %v4180 = vld [vmem:[#allocation2 + $0x1c] sm:$0xf]
      %v4181 = vld [vmem:[#allocation2 + $0x20] sm:$0xf]
      %v4182 = vld [vmem:[#allocation2 + $0x24] sm:$0xf]
      %v4183 = vld [vmem:[#allocation2 + $0x28] sm:$0xf]
      %v4184 = vld [vmem:[#allocation2 + $0x2c] sm:$0xf]
      %v4185 = vld [vmem:[#allocation2 + $0x30] sm:$0xf]
      %v4186 = vld [vmem:[#allocation2 + $0x34] sm:$0xf]
      %v4187 = vld [vmem:[#allocation2 + $0x38] sm:$0xf]
      %v4188 = vld [vmem:[#allocation2 + $0x3c] sm:$0xf]
      %v4189 = vld [vmem:[#allocation2 + $0x40] sm:$0xf]
      %v4190 = vld [vmem:[#allocation2 + $0x44] sm:$0xf]
      %v4191 = vld [vmem:[#allocation2 + $0x48] sm:$0xf]
      %v4192 = vld [vmem:[#allocation2 + $0x4c] sm:$0xf]
      %v4193 = vld [vmem:[#allocation2 + $0x50] sm:$0xf]
      %v4194 = vld [vmem:[#allocation2 + $0x54] sm:$0xf]
      %v4195 = vld [vmem:[#allocation2 + $0x58] sm:$0xf]
      %v4196 = vld [vmem:[#allocation2 + $0x5c] sm:$0xf]
      %v4197 = vld [vmem:[#allocation2 + $0x60] sm:$0xf]
      %v4198 = vld [vmem:[#allocation2 + $0x64] sm:$0xf]
      %v4199 = vld [vmem:[#allocation2 + $0x68] sm:$0xf]
      %v4200 = vld [vmem:[#allocation2 + $0x6c] sm:$0xf]
      %v4201 = vld [vmem:[#allocation2 + $0x70] sm:$0xf]
      %v4202 = vld [vmem:[#allocation2 + $0x74] sm:$0xf]
      %v4203 = vld [vmem:[#allocation2 + $0x78] sm:$0xf]
      %v4204 = vld [vmem:[#allocation2 + $0x7c] sm:$0xf]
      %v4205 = vld [vmem:[#allocation2 + $0x80] sm:$0xf]
      %v4206 = vld [vmem:[#allocation2 + $0x84] sm:$0xf]
      %v4207 = vld [vmem:[#allocation2 + $0x88] sm:$0xf]
      %v4208 = vld [vmem:[#allocation2 + $0x8c] sm:$0xf]
      %v4209 = vld [vmem:[#allocation2 + $0x90] sm:$0xf]
      %v4210 = vld [vmem:[#allocation2 + $0x94] sm:$0xf]
      %v4211 = vld [vmem:[#allocation2 + $0x98] sm:$0x1]
      %s4212 = scalar_lea.vmem %s6, 24
      %v4213 = vld [vmem:[%s4212] sm:$0xf]
      %v4214 = vld [vmem:[%s4212 + $0x4] sm:$0xf]
      %v4252 = vunpack.c.l.b16 %v4175
      %v4253 = vunpack.c.l.b16 %v4176
      %v4254 = vunpack.c.l.b16 %v4177
      %v4255 = vunpack.c.l.b16 %v4178
      %v4256 = vunpack.c.l.b16 %v4179
      %v4257 = vunpack.c.l.b16 %v4180
      %v4258 = vunpack.c.l.b16 %v4181
      %v4259 = vunpack.c.l.b16 %v4182
      %v4260 = vunpack.c.l.b16 %v4183
      %v4261 = vunpack.c.l.b16 %v4184
      %v4262 = vunpack.c.l.b16 %v4185
      %v4263 = vunpack.c.l.b16 %v4186
      %v4264 = vunpack.c.l.b16 %v4187
      %v4265 = vunpack.c.l.b16 %v4188
      %v4266 = vunpack.c.l.b16 %v4189
      %v4267 = vunpack.c.l.b16 %v4190
      %v4268 = vunpack.c.l.b16 %v4191
      %v4269 = vunpack.c.l.b16 %v4192
      %v4270 = vunpack.c.l.b16 %v4193
      %v4271 = vunpack.c.l.b16 %v4194
      %v4272 = vunpack.c.l.b16 %v4195
      %v4273 = vunpack.c.l.b16 %v4196
      %v4274 = vunpack.c.l.b16 %v4197
      %v4275 = vunpack.c.l.b16 %v4198
      %v4276 = vunpack.c.l.b16 %v4199
      %v4277 = vunpack.c.l.b16 %v4200
      %v4278 = vunpack.c.l.b16 %v4201
      %v4279 = vunpack.c.l.b16 %v4202
      %v4280 = vunpack.c.l.b16 %v4203
      %v4281 = vunpack.c.l.b16 %v4204
      %v4282 = vunpack.c.l.b16 %v4205
      %v4283 = vunpack.c.l.b16 %v4206
      %v4284 = vunpack.c.l.b16 %v4207
      %v4285 = vunpack.c.l.b16 %v4208
      %v4286 = vunpack.c.l.b16 %v4209
      %v4287 = vunpack.c.l.b16 %v4210
      %v4288 = vunpack.c.l.b16 %v4211
      %v4289 = vpack.c.b16 %v4253, %v4252
      %v4290 = vpack.c.b16 %v4255, %v4254
      %v4291 = vpack.c.b16 %v4257, %v4256
      %v4292 = vpack.c.b16 %v4259, %v4258
      %v4293 = vpack.c.b16 %v4261, %v4260
      %v4294 = vpack.c.b16 %v4263, %v4262
      %v4295 = vpack.c.b16 %v4265, %v4264
      %v4296 = vpack.c.b16 %v4267, %v4266
      %v4297 = vpack.c.b16 %v4269, %v4268
      %v4298 = vpack.c.b16 %v4271, %v4270
      %v4299 = vpack.c.b16 %v4273, %v4272
      %v4300 = vpack.c.b16 %v4275, %v4274
      %v4301 = vpack.c.b16 %v4277, %v4276
      %v4302 = vpack.c.b16 %v4279, %v4278
      %v4303 = vpack.c.b16 %v4281, %v4280
      %v4304 = vpack.c.b16 %v4283, %v4282
      %v4305 = vpack.c.b16 %v4285, %v4284
      %v4306 = vpack.c.b16 %v4287, %v4286
      %v4307 = vpack.c.b16 %v4288, %v4288
      %v4308 = vrot.slane %v4289, 1
      %v4309 = vrot.slane %v4290, 1
      %v4310 = vsel %vm3942, %v4308, %v4309
      %v4311 = vrot.slane %v4291, 1
      %v4312 = vsel %vm3942, %v4309, %v4311
      %v4313 = vrot.slane %v4292, 1
      %v4314 = vsel %vm3942, %v4311, %v4313
      %v4315 = vrot.slane %v4293, 1
      %v4316 = vsel %vm3942, %v4313, %v4315
      %v4317 = vrot.slane %v4294, 1
      %v4318 = vsel %vm3942, %v4315, %v4317
      %v4319 = vrot.slane %v4295, 1
      %v4320 = vsel %vm3942, %v4317, %v4319
      %v4321 = vrot.slane %v4296, 1
      %v4322 = vsel %vm3942, %v4319, %v4321
      %v4323 = vrot.slane %v4297, 1
      %v4324 = vsel %vm3942, %v4321, %v4323
      %v4325 = vrot.slane %v4298, 1
      %v4326 = vsel %vm3942, %v4323, %v4325
      %v4327 = vrot.slane %v4299, 1
      %v4328 = vsel %vm3942, %v4325, %v4327
      %v4329 = vrot.slane %v4300, 1
      %v4330 = vsel %vm3942, %v4327, %v4329
      %v4331 = vrot.slane %v4301, 1
      %v4332 = vsel %vm3942, %v4329, %v4331
      %v4333 = vrot.slane %v4302, 1
      %v4334 = vsel %vm3942, %v4331, %v4333
      %v4335 = vrot.slane %v4303, 1
      %v4336 = vsel %vm3942, %v4333, %v4335
      %v4337 = vrot.slane %v4304, 1
      %v4338 = vsel %vm3942, %v4335, %v4337
      %v4339 = vrot.slane %v4305, 1
      %v4340 = vsel %vm3942, %v4337, %v4339
      %v4341 = vrot.slane %v4306, 1
      %v4342 = vsel %vm3942, %v4339, %v4341
      %v4343 = vrot.slane %v4307, 1
      %v4344 = vsel %vm3942, %v4341, %v4343
      %v4347 = vunpack.c.l.b16 %v4213
      %v4348 = vunpack.c.l.b16 %v4214
      %v4349 = vpack.c.b16 %v4348, %v4347
      %v4352 = vsel %vm3640, %v4310, 0
      %v4355 = vsel %vm3640, %v4312, 0
      %v4358 = vsel %vm3640, %v4314, 0
      %v4361 = vsel %vm3640, %v4316, 0
      %v4364 = vsel %vm3640, %v4318, 0
      %v4367 = vsel %vm3640, %v4320, 0
      %v4370 = vsel %vm3640, %v4322, 0
      %v4373 = vsel %vm3640, %v4324, 0
      %v4376 = vsel %vm3640, %v4326, 0
      %v4379 = vsel %vm3640, %v4328, 0
      %v4382 = vsel %vm3640, %v4330, 0
      %v4385 = vsel %vm3640, %v4332, 0
      %v4388 = vsel %vm3640, %v4334, 0
      %v4391 = vsel %vm3640, %v4336, 0
      %v4394 = vsel %vm3640, %v4338, 0
      %v4397 = vsel %vm3640, %v4340, 0
      %v4400 = vsel %vm3640, %v4342, 0
      %v4403 = vsel %vm3640, %v4344, 0
      %4405 = vmatpush.bf16.msra.mxu0 0
      %4406 = vmatpush.bf16.msra.mxu0 0
      %4407 = vmatpush.bf16.msra.mxu0 0
      %4408 = vmatpush.bf16.msra.mxu0 0
      %4409 = vmatpush.bf16.msra.mxu0 0
      %4410 = vmatpush.bf16.msra.mxu0 0
      %4411 = vmatpush.bf16.msra.mxu0 0
      %4412 = vmatpush.bf16.msra.mxu0 %v4349
      %4413 = vmatmul.bf16.gmra.mxu0 %v4352
      %v4414 = vpop.f32.mrf.mxu0
      %v4415 = vadd.f32 0.0, %v4414
      %v4416 = vpop.f32.mrf.mxu0
      %v4417 = vadd.f32 0.0, %v4416
      %4418 = vmatmul.bf16.gmra.mxu0 %v4355
      %v4419 = vpop.f32.mrf.mxu0
      %v4420 = vadd.f32 0.0, %v4419
      %v4421 = vpop.f32.mrf.mxu0
      %v4422 = vadd.f32 0.0, %v4421
      %4423 = vmatmul.bf16.gmra.mxu0 %v4358
      %v4424 = vpop.f32.mrf.mxu0
      %v4425 = vadd.f32 0.0, %v4424
      %v4426 = vpop.f32.mrf.mxu0
      %v4427 = vadd.f32 0.0, %v4426
      %4428 = vmatmul.bf16.gmra.mxu0 %v4361
      %v4429 = vpop.f32.mrf.mxu0
      %v4430 = vadd.f32 0.0, %v4429
      %v4431 = vpop.f32.mrf.mxu0
      %v4432 = vadd.f32 0.0, %v4431
      %4433 = vmatmul.bf16.gmra.mxu0 %v4364
      %v4434 = vpop.f32.mrf.mxu0
      %v4435 = vadd.f32 0.0, %v4434
      %v4436 = vpop.f32.mrf.mxu0
      %v4437 = vadd.f32 0.0, %v4436
      %4438 = vmatmul.bf16.gmra.mxu0 %v4367
      %v4439 = vpop.f32.mrf.mxu0
      %v4440 = vadd.f32 0.0, %v4439
      %v4441 = vpop.f32.mrf.mxu0
      %v4442 = vadd.f32 0.0, %v4441
      %4443 = vmatmul.bf16.gmra.mxu0 %v4370
      %v4444 = vpop.f32.mrf.mxu0
      %v4445 = vadd.f32 0.0, %v4444
      %v4446 = vpop.f32.mrf.mxu0
      %v4447 = vadd.f32 0.0, %v4446
      %4448 = vmatmul.bf16.gmra.mxu0 %v4373
      %v4449 = vpop.f32.mrf.mxu0
      %v4450 = vadd.f32 0.0, %v4449
      %v4451 = vpop.f32.mrf.mxu0
      %v4452 = vadd.f32 0.0, %v4451
      %4453 = vmatmul.bf16.gmra.mxu0 %v4376
      %v4454 = vpop.f32.mrf.mxu0
      %v4455 = vadd.f32 0.0, %v4454
      %v4456 = vpop.f32.mrf.mxu0
      %v4457 = vadd.f32 0.0, %v4456
      %4458 = vmatmul.bf16.gmra.mxu0 %v4379
      %v4459 = vpop.f32.mrf.mxu0
      %v4460 = vadd.f32 0.0, %v4459
      %v4461 = vpop.f32.mrf.mxu0
      %v4462 = vadd.f32 0.0, %v4461
      %4463 = vmatmul.bf16.gmra.mxu0 %v4382
      %v4464 = vpop.f32.mrf.mxu0
      %v4465 = vadd.f32 0.0, %v4464
      %v4466 = vpop.f32.mrf.mxu0
      %v4467 = vadd.f32 0.0, %v4466
      %4468 = vmatmul.bf16.gmra.mxu0 %v4385
      %v4469 = vpop.f32.mrf.mxu0
      %v4470 = vadd.f32 0.0, %v4469
      %v4471 = vpop.f32.mrf.mxu0
      %v4472 = vadd.f32 0.0, %v4471
      %4473 = vmatmul.bf16.gmra.mxu0 %v4388
      %v4474 = vpop.f32.mrf.mxu0
      %v4475 = vadd.f32 0.0, %v4474
      %v4476 = vpop.f32.mrf.mxu0
      %v4477 = vadd.f32 0.0, %v4476
      %4478 = vmatmul.bf16.gmra.mxu0 %v4391
      %v4479 = vpop.f32.mrf.mxu0
      %v4480 = vadd.f32 0.0, %v4479
      %v4481 = vpop.f32.mrf.mxu0
      %v4482 = vadd.f32 0.0, %v4481
      %4483 = vmatmul.bf16.gmra.mxu0 %v4394
      %v4484 = vpop.f32.mrf.mxu0
      %v4485 = vadd.f32 0.0, %v4484
      %v4486 = vpop.f32.mrf.mxu0
      %v4487 = vadd.f32 0.0, %v4486
      %4488 = vmatmul.bf16.gmra.mxu0 %v4397
      %v4489 = vpop.f32.mrf.mxu0
      %v4490 = vadd.f32 0.0, %v4489
      %v4491 = vpop.f32.mrf.mxu0
      %v4492 = vadd.f32 0.0, %v4491
      %4493 = vmatmul.bf16.gmra.mxu0 %v4400
      %v4494 = vpop.f32.mrf.mxu0
      %v4495 = vadd.f32 0.0, %v4494
      %v4496 = vpop.f32.mrf.mxu0
      %v4497 = vadd.f32 0.0, %v4496
      %4498 = vmatmul.bf16.gmra.mxu0 %v4403
      %v4499 = vpop.f32.mrf.mxu0
      %v4500 = vadd.f32 0.0, %v4499
      %v4501 = vpop.f32.mrf.mxu0
      %v4502 = vadd.f32 0.0, %v4501
      %4503 = vdwg.mxu0
      %v4504 = vadd.f32 %v4139, %v4415
      %v4505 = vadd.f32 %v4140, %v4417
      %v4506 = vadd.f32 %v4141, %v4420
      %v4507 = vadd.f32 %v4142, %v4422
      %v4508 = vadd.f32 %v4143, %v4425
      %v4509 = vadd.f32 %v4144, %v4427
      %v4510 = vadd.f32 %v4145, %v4430
      %v4511 = vadd.f32 %v4146, %v4432
      %v4512 = vadd.f32 %v4147, %v4435
      %v4513 = vadd.f32 %v4148, %v4437
      %v4514 = vadd.f32 %v4149, %v4440
      %v4515 = vadd.f32 %v4150, %v4442
      %v4516 = vadd.f32 %v4151, %v4445
      %v4517 = vadd.f32 %v4152, %v4447
      %v4518 = vadd.f32 %v4153, %v4450
      %v4519 = vadd.f32 %v4154, %v4452
      %v4520 = vadd.f32 %v4155, %v4455
      %v4521 = vadd.f32 %v4156, %v4457
      %v4522 = vadd.f32 %v4157, %v4460
      %v4523 = vadd.f32 %v4158, %v4462
      %v4524 = vadd.f32 %v4159, %v4465
      %v4525 = vadd.f32 %v4160, %v4467
      %v4526 = vadd.f32 %v4161, %v4470
      %v4527 = vadd.f32 %v4162, %v4472
      %v4528 = vadd.f32 %v4163, %v4475
      %v4529 = vadd.f32 %v4164, %v4477
      %v4530 = vadd.f32 %v4165, %v4480
      %v4531 = vadd.f32 %v4166, %v4482
      %v4532 = vadd.f32 %v4167, %v4485
      %v4533 = vadd.f32 %v4168, %v4487
      %v4534 = vadd.f32 %v4169, %v4490
      %v4535 = vadd.f32 %v4170, %v4492
      %v4536 = vadd.f32 %v4171, %v4495
      %v4537 = vadd.f32 %v4172, %v4497
      %v4538 = vadd.f32 %v4173, %v4500
      %v4539 = vadd.f32 %v4174, %v4502
      %v4540 = vld [vmem:[#allocation2 + $0x98] sm:$0x3]
      %s4541 = scalar_lea.vmem %s6, 32
      %v4542 = vld [vmem:[%s4541] sm:$0xf]
      %v4543 = vld [vmem:[%s4541 + $0x4] sm:$0xf]
      %v4545 = vunpack.c.l.b16 %v4540
      %v4546 = vpack.c.b16 %v4545, %v4545
      %vm4547 = vsmask.f32 6400
      %v4549 = vshrl.u32 %v4289, 16
      %v4551 = vrot.slane %v4549, 1
      %v4552 = vshll.u32 %v4289, 16
      %v4554 = vrot.slane %v4552, 2
      %v4555 = vor.u32 %v4551, %v4554
      %v4557 = vshrl.u32 %v4290, 16
      %v4559 = vrot.slane %v4557, 1
      %v4560 = vshll.u32 %v4290, 16
      %v4562 = vrot.slane %v4560, 2
      %v4563 = vor.u32 %v4559, %v4562
      %v4564 = vsel %vm4547, %v4555, %v4563
      %v4566 = vshrl.u32 %v4291, 16
      %v4568 = vrot.slane %v4566, 1
      %v4569 = vshll.u32 %v4291, 16
      %v4571 = vrot.slane %v4569, 2
      %v4572 = vor.u32 %v4568, %v4571
      %v4573 = vsel %vm4547, %v4563, %v4572
      %v4575 = vshrl.u32 %v4292, 16
      %v4577 = vrot.slane %v4575, 1
      %v4578 = vshll.u32 %v4292, 16
      %v4580 = vrot.slane %v4578, 2
      %v4581 = vor.u32 %v4577, %v4580
      %v4582 = vsel %vm4547, %v4572, %v4581
      %v4584 = vshrl.u32 %v4293, 16
      %v4586 = vrot.slane %v4584, 1
      %v4587 = vshll.u32 %v4293, 16
      %v4589 = vrot.slane %v4587, 2
      %v4590 = vor.u32 %v4586, %v4589
      %v4591 = vsel %vm4547, %v4581, %v4590
      %v4593 = vshrl.u32 %v4294, 16
      %v4595 = vrot.slane %v4593, 1
      %v4596 = vshll.u32 %v4294, 16
      %v4598 = vrot.slane %v4596, 2
      %v4599 = vor.u32 %v4595, %v4598
      %v4600 = vsel %vm4547, %v4590, %v4599
      %v4602 = vshrl.u32 %v4295, 16
      %v4604 = vrot.slane %v4602, 1
      %v4605 = vshll.u32 %v4295, 16
      %v4607 = vrot.slane %v4605, 2
      %v4608 = vor.u32 %v4604, %v4607
      %v4609 = vsel %vm4547, %v4599, %v4608
      %v4611 = vshrl.u32 %v4296, 16
      %v4613 = vrot.slane %v4611, 1
      %v4614 = vshll.u32 %v4296, 16
      %v4616 = vrot.slane %v4614, 2
      %v4617 = vor.u32 %v4613, %v4616
      %v4618 = vsel %vm4547, %v4608, %v4617
      %v4620 = vshrl.u32 %v4297, 16
      %v4622 = vrot.slane %v4620, 1
      %v4623 = vshll.u32 %v4297, 16
      %v4625 = vrot.slane %v4623, 2
      %v4626 = vor.u32 %v4622, %v4625
      %v4627 = vsel %vm4547, %v4617, %v4626
      %v4629 = vshrl.u32 %v4298, 16
      %v4631 = vrot.slane %v4629, 1
      %v4632 = vshll.u32 %v4298, 16
      %v4634 = vrot.slane %v4632, 2
      %v4635 = vor.u32 %v4631, %v4634
      %v4636 = vsel %vm4547, %v4626, %v4635
      %v4638 = vshrl.u32 %v4299, 16
      %v4640 = vrot.slane %v4638, 1
      %v4641 = vshll.u32 %v4299, 16
      %v4643 = vrot.slane %v4641, 2
      %v4644 = vor.u32 %v4640, %v4643
      %v4645 = vsel %vm4547, %v4635, %v4644
      %v4647 = vshrl.u32 %v4300, 16
      %v4649 = vrot.slane %v4647, 1
      %v4650 = vshll.u32 %v4300, 16
      %v4652 = vrot.slane %v4650, 2
      %v4653 = vor.u32 %v4649, %v4652
      %v4654 = vsel %vm4547, %v4644, %v4653
      %v4656 = vshrl.u32 %v4301, 16
      %v4658 = vrot.slane %v4656, 1
      %v4659 = vshll.u32 %v4301, 16
      %v4661 = vrot.slane %v4659, 2
      %v4662 = vor.u32 %v4658, %v4661
      %v4663 = vsel %vm4547, %v4653, %v4662
      %v4665 = vshrl.u32 %v4302, 16
      %v4667 = vrot.slane %v4665, 1
      %v4668 = vshll.u32 %v4302, 16
      %v4670 = vrot.slane %v4668, 2
      %v4671 = vor.u32 %v4667, %v4670
      %v4672 = vsel %vm4547, %v4662, %v4671
      %v4674 = vshrl.u32 %v4303, 16
      %v4676 = vrot.slane %v4674, 1
      %v4677 = vshll.u32 %v4303, 16
      %v4679 = vrot.slane %v4677, 2
      %v4680 = vor.u32 %v4676, %v4679
      %v4681 = vsel %vm4547, %v4671, %v4680
      %v4683 = vshrl.u32 %v4304, 16
      %v4685 = vrot.slane %v4683, 1
      %v4686 = vshll.u32 %v4304, 16
      %v4688 = vrot.slane %v4686, 2
      %v4689 = vor.u32 %v4685, %v4688
      %v4690 = vsel %vm4547, %v4680, %v4689
      %v4692 = vshrl.u32 %v4305, 16
      %v4694 = vrot.slane %v4692, 1
      %v4695 = vshll.u32 %v4305, 16
      %v4697 = vrot.slane %v4695, 2
      %v4698 = vor.u32 %v4694, %v4697
      %v4699 = vsel %vm4547, %v4689, %v4698
      %v4701 = vshrl.u32 %v4306, 16
      %v4703 = vrot.slane %v4701, 1
      %v4704 = vshll.u32 %v4306, 16
      %v4706 = vrot.slane %v4704, 2
      %v4707 = vor.u32 %v4703, %v4706
      %v4708 = vsel %vm4547, %v4698, %v4707
      %v4710 = vshrl.u32 %v4546, 16
      %v4712 = vrot.slane %v4710, 1
      %v4713 = vshll.u32 %v4546, 16
      %v4715 = vrot.slane %v4713, 2
      %v4716 = vor.u32 %v4712, %v4715
      %v4717 = vsel %vm4547, %v4707, %v4716
      %v4720 = vunpack.c.l.b16 %v4542
      %v4721 = vunpack.c.l.b16 %v4543
      %v4722 = vpack.c.b16 %v4721, %v4720
      %v4725 = vsel %vm3640, %v4564, 0
      %v4728 = vsel %vm3640, %v4573, 0
      %v4731 = vsel %vm3640, %v4582, 0
      %v4734 = vsel %vm3640, %v4591, 0
      %v4737 = vsel %vm3640, %v4600, 0
      %v4740 = vsel %vm3640, %v4609, 0
      %v4743 = vsel %vm3640, %v4618, 0
      %v4746 = vsel %vm3640, %v4627, 0
      %v4749 = vsel %vm3640, %v4636, 0
      %v4752 = vsel %vm3640, %v4645, 0
      %v4755 = vsel %vm3640, %v4654, 0
      %v4758 = vsel %vm3640, %v4663, 0
      %v4761 = vsel %vm3640, %v4672, 0
      %v4764 = vsel %vm3640, %v4681, 0
      %v4767 = vsel %vm3640, %v4690, 0
      %v4770 = vsel %vm3640, %v4699, 0
      %v4773 = vsel %vm3640, %v4708, 0
      %v4776 = vsel %vm3640, %v4717, 0
      %4778 = vmatpush.bf16.msra.mxu0 0
      %4779 = vmatpush.bf16.msra.mxu0 0
      %4780 = vmatpush.bf16.msra.mxu0 0
      %4781 = vmatpush.bf16.msra.mxu0 0
      %4782 = vmatpush.bf16.msra.mxu0 0
      %4783 = vmatpush.bf16.msra.mxu0 0
      %4784 = vmatpush.bf16.msra.mxu0 0
      %4785 = vmatpush.bf16.msra.mxu0 %v4722
      %4786 = vmatmul.bf16.gmra.mxu0 %v4725
      %v4787 = vpop.f32.mrf.mxu0
      %v4788 = vadd.f32 0.0, %v4787
      %v4789 = vpop.f32.mrf.mxu0
      %v4790 = vadd.f32 0.0, %v4789
      %4791 = vmatmul.bf16.gmra.mxu0 %v4728
      %v4792 = vpop.f32.mrf.mxu0
      %v4793 = vadd.f32 0.0, %v4792
      %v4794 = vpop.f32.mrf.mxu0
      %v4795 = vadd.f32 0.0, %v4794
      %4796 = vmatmul.bf16.gmra.mxu0 %v4731
      %v4797 = vpop.f32.mrf.mxu0
      %v4798 = vadd.f32 0.0, %v4797
      %v4799 = vpop.f32.mrf.mxu0
      %v4800 = vadd.f32 0.0, %v4799
      %4801 = vmatmul.bf16.gmra.mxu0 %v4734
      %v4802 = vpop.f32.mrf.mxu0
      %v4803 = vadd.f32 0.0, %v4802
      %v4804 = vpop.f32.mrf.mxu0
      %v4805 = vadd.f32 0.0, %v4804
      %4806 = vmatmul.bf16.gmra.mxu0 %v4737
      %v4807 = vpop.f32.mrf.mxu0
      %v4808 = vadd.f32 0.0, %v4807
      %v4809 = vpop.f32.mrf.mxu0
      %v4810 = vadd.f32 0.0, %v4809
      %4811 = vmatmul.bf16.gmra.mxu0 %v4740
      %v4812 = vpop.f32.mrf.mxu0
      %v4813 = vadd.f32 0.0, %v4812
      %v4814 = vpop.f32.mrf.mxu0
      %v4815 = vadd.f32 0.0, %v4814
      %4816 = vmatmul.bf16.gmra.mxu0 %v4743
      %v4817 = vpop.f32.mrf.mxu0
      %v4818 = vadd.f32 0.0, %v4817
      %v4819 = vpop.f32.mrf.mxu0
      %v4820 = vadd.f32 0.0, %v4819
      %4821 = vmatmul.bf16.gmra.mxu0 %v4746
      %v4822 = vpop.f32.mrf.mxu0
      %v4823 = vadd.f32 0.0, %v4822
      %v4824 = vpop.f32.mrf.mxu0
      %v4825 = vadd.f32 0.0, %v4824
      %4826 = vmatmul.bf16.gmra.mxu0 %v4749
      %v4827 = vpop.f32.mrf.mxu0
      %v4828 = vadd.f32 0.0, %v4827
      %v4829 = vpop.f32.mrf.mxu0
      %v4830 = vadd.f32 0.0, %v4829
      %4831 = vmatmul.bf16.gmra.mxu0 %v4752
      %v4832 = vpop.f32.mrf.mxu0
      %v4833 = vadd.f32 0.0, %v4832
      %v4834 = vpop.f32.mrf.mxu0
      %v4835 = vadd.f32 0.0, %v4834
      %4836 = vmatmul.bf16.gmra.mxu0 %v4755
      %v4837 = vpop.f32.mrf.mxu0
      %v4838 = vadd.f32 0.0, %v4837
      %v4839 = vpop.f32.mrf.mxu0
      %v4840 = vadd.f32 0.0, %v4839
      %4841 = vmatmul.bf16.gmra.mxu0 %v4758
      %v4842 = vpop.f32.mrf.mxu0
      %v4843 = vadd.f32 0.0, %v4842
      %v4844 = vpop.f32.mrf.mxu0
      %v4845 = vadd.f32 0.0, %v4844
      %4846 = vmatmul.bf16.gmra.mxu0 %v4761
      %v4847 = vpop.f32.mrf.mxu0
      %v4848 = vadd.f32 0.0, %v4847
      %v4849 = vpop.f32.mrf.mxu0
      %v4850 = vadd.f32 0.0, %v4849
      %4851 = vmatmul.bf16.gmra.mxu0 %v4764
      %v4852 = vpop.f32.mrf.mxu0
      %v4853 = vadd.f32 0.0, %v4852
      %v4854 = vpop.f32.mrf.mxu0
      %v4855 = vadd.f32 0.0, %v4854
      %4856 = vmatmul.bf16.gmra.mxu0 %v4767
      %v4857 = vpop.f32.mrf.mxu0
      %v4858 = vadd.f32 0.0, %v4857
      %v4859 = vpop.f32.mrf.mxu0
      %v4860 = vadd.f32 0.0, %v4859
      %4861 = vmatmul.bf16.gmra.mxu0 %v4770
      %v4862 = vpop.f32.mrf.mxu0
      %v4863 = vadd.f32 0.0, %v4862
      %v4864 = vpop.f32.mrf.mxu0
      %v4865 = vadd.f32 0.0, %v4864
      %4866 = vmatmul.bf16.gmra.mxu0 %v4773
      %v4867 = vpop.f32.mrf.mxu0
      %v4868 = vadd.f32 0.0, %v4867
      %v4869 = vpop.f32.mrf.mxu0
      %v4870 = vadd.f32 0.0, %v4869
      %4871 = vmatmul.bf16.gmra.mxu0 %v4776
      %v4872 = vpop.f32.mrf.mxu0
      %v4873 = vadd.f32 0.0, %v4872
      %v4874 = vpop.f32.mrf.mxu0
      %v4875 = vadd.f32 0.0, %v4874
      %4876 = vdwg.mxu0
      %v4877 = vadd.f32 %v4504, %v4788
      %v4878 = vadd.f32 %v4505, %v4790
      %v4879 = vadd.f32 %v4506, %v4793
      %v4880 = vadd.f32 %v4507, %v4795
      %v4881 = vadd.f32 %v4508, %v4798
      %v4882 = vadd.f32 %v4509, %v4800
      %v4883 = vadd.f32 %v4510, %v4803
      %v4884 = vadd.f32 %v4511, %v4805
      %v4885 = vadd.f32 %v4512, %v4808
      %v4886 = vadd.f32 %v4513, %v4810
      %v4887 = vadd.f32 %v4514, %v4813
      %v4888 = vadd.f32 %v4515, %v4815
      %v4889 = vadd.f32 %v4516, %v4818
      %v4890 = vadd.f32 %v4517, %v4820
      %v4891 = vadd.f32 %v4518, %v4823
      %v4892 = vadd.f32 %v4519, %v4825
      %v4893 = vadd.f32 %v4520, %v4828
      %v4894 = vadd.f32 %v4521, %v4830
      %v4895 = vadd.f32 %v4522, %v4833
      %v4896 = vadd.f32 %v4523, %v4835
      %v4897 = vadd.f32 %v4524, %v4838
      %v4898 = vadd.f32 %v4525, %v4840
      %v4899 = vadd.f32 %v4526, %v4843
      %v4900 = vadd.f32 %v4527, %v4845
      %v4901 = vadd.f32 %v4528, %v4848
      %v4902 = vadd.f32 %v4529, %v4850
      %v4903 = vadd.f32 %v4530, %v4853
      %v4904 = vadd.f32 %v4531, %v4855
      %v4905 = vadd.f32 %v4532, %v4858
      %v4906 = vadd.f32 %v4533, %v4860
      %v4907 = vadd.f32 %v4534, %v4863
      %v4908 = vadd.f32 %v4535, %v4865
      %v4909 = vadd.f32 %v4536, %v4868
      %v4910 = vadd.f32 %v4537, %v4870
      %v4911 = vadd.f32 %v4538, %v4873
      %v4912 = vadd.f32 %v4539, %v4875
      %v4913 = vld [vmem:[#allocation2 + $0x8] sm:$0xc]
      %s4914 = scalar_lea.vmem %s6, 40
      %v4915 = vld [vmem:[%s4914] sm:$0xf]
      %v4916 = vld [vmem:[%s4914 + $0x4] sm:$0xf]
      %v4918 = vunpack.c.l.b16 %v4913
      %v4919 = vpack.c.b16 %v4253, %v4918
      %vm4920 = vcmask 1045504
      %v4921 = vrot.slane %v4919, 2
      %v4922 = vrot.slane %v4290, 2
      %v4923 = vsel %vm4920, %v4921, %v4922
      %v4924 = vrot.slane %v4291, 2
      %v4925 = vsel %vm4920, %v4922, %v4924
      %v4926 = vrot.slane %v4292, 2
      %v4927 = vsel %vm4920, %v4924, %v4926
      %v4928 = vrot.slane %v4293, 2
      %v4929 = vsel %vm4920, %v4926, %v4928
      %v4930 = vrot.slane %v4294, 2
      %v4931 = vsel %vm4920, %v4928, %v4930
      %v4932 = vrot.slane %v4295, 2
      %v4933 = vsel %vm4920, %v4930, %v4932
      %v4934 = vrot.slane %v4296, 2
      %v4935 = vsel %vm4920, %v4932, %v4934
      %v4936 = vrot.slane %v4297, 2
      %v4937 = vsel %vm4920, %v4934, %v4936
      %v4938 = vrot.slane %v4298, 2
      %v4939 = vsel %vm4920, %v4936, %v4938
      %v4940 = vrot.slane %v4299, 2
      %v4941 = vsel %vm4920, %v4938, %v4940
      %v4942 = vrot.slane %v4300, 2
      %v4943 = vsel %vm4920, %v4940, %v4942
      %v4944 = vrot.slane %v4301, 2
      %v4945 = vsel %vm4920, %v4942, %v4944
      %v4946 = vrot.slane %v4302, 2
      %v4947 = vsel %vm4920, %v4944, %v4946
      %v4948 = vrot.slane %v4303, 2
      %v4949 = vsel %vm4920, %v4946, %v4948
      %v4950 = vrot.slane %v4304, 2
      %v4951 = vsel %vm4920, %v4948, %v4950
      %v4952 = vrot.slane %v4305, 2
      %v4953 = vsel %vm4920, %v4950, %v4952
      %v4954 = vrot.slane %v4306, 2
      %v4955 = vsel %vm4920, %v4952, %v4954
      %v4956 = vrot.slane %v4546, 2
      %v4957 = vsel %vm4920, %v4954, %v4956
      %v4960 = vunpack.c.l.b16 %v4915
      %v4961 = vunpack.c.l.b16 %v4916
      %v4962 = vpack.c.b16 %v4961, %v4960
      %v4965 = vsel %vm3640, %v4923, 0
      %v4968 = vsel %vm3640, %v4925, 0
      %v4971 = vsel %vm3640, %v4927, 0
      %v4974 = vsel %vm3640, %v4929, 0
      %v4977 = vsel %vm3640, %v4931, 0
      %v4980 = vsel %vm3640, %v4933, 0
      %v4983 = vsel %vm3640, %v4935, 0
      %v4986 = vsel %vm3640, %v4937, 0
      %v4989 = vsel %vm3640, %v4939, 0
      %v4992 = vsel %vm3640, %v4941, 0
      %v4995 = vsel %vm3640, %v4943, 0
      %v4998 = vsel %vm3640, %v4945, 0
      %v5001 = vsel %vm3640, %v4947, 0
      %v5004 = vsel %vm3640, %v4949, 0
      %v5007 = vsel %vm3640, %v4951, 0
      %v5010 = vsel %vm3640, %v4953, 0
      %v5013 = vsel %vm3640, %v4955, 0
      %v5016 = vsel %vm3640, %v4957, 0
      %5018 = vmatpush.bf16.msra.mxu0 0
      %5019 = vmatpush.bf16.msra.mxu0 0
      %5020 = vmatpush.bf16.msra.mxu0 0
      %5021 = vmatpush.bf16.msra.mxu0 0
      %5022 = vmatpush.bf16.msra.mxu0 0
      %5023 = vmatpush.bf16.msra.mxu0 0
      %5024 = vmatpush.bf16.msra.mxu0 0
      %5025 = vmatpush.bf16.msra.mxu0 %v4962
      %5026 = vmatmul.bf16.gmra.mxu0 %v4965
      %v5027 = vpop.f32.mrf.mxu0
      %v5028 = vadd.f32 0.0, %v5027
      %v5029 = vpop.f32.mrf.mxu0
      %v5030 = vadd.f32 0.0, %v5029
      %5031 = vmatmul.bf16.gmra.mxu0 %v4968
      %v5032 = vpop.f32.mrf.mxu0
      %v5033 = vadd.f32 0.0, %v5032
      %v5034 = vpop.f32.mrf.mxu0
      %v5035 = vadd.f32 0.0, %v5034
      %5036 = vmatmul.bf16.gmra.mxu0 %v4971
      %v5037 = vpop.f32.mrf.mxu0
      %v5038 = vadd.f32 0.0, %v5037
      %v5039 = vpop.f32.mrf.mxu0
      %v5040 = vadd.f32 0.0, %v5039
      %5041 = vmatmul.bf16.gmra.mxu0 %v4974
      %v5042 = vpop.f32.mrf.mxu0
      %v5043 = vadd.f32 0.0, %v5042
      %v5044 = vpop.f32.mrf.mxu0
      %v5045 = vadd.f32 0.0, %v5044
      %5046 = vmatmul.bf16.gmra.mxu0 %v4977
      %v5047 = vpop.f32.mrf.mxu0
      %v5048 = vadd.f32 0.0, %v5047
      %v5049 = vpop.f32.mrf.mxu0
      %v5050 = vadd.f32 0.0, %v5049
      %5051 = vmatmul.bf16.gmra.mxu0 %v4980
      %v5052 = vpop.f32.mrf.mxu0
      %v5053 = vadd.f32 0.0, %v5052
      %v5054 = vpop.f32.mrf.mxu0
      %v5055 = vadd.f32 0.0, %v5054
      %5056 = vmatmul.bf16.gmra.mxu0 %v4983
      %v5057 = vpop.f32.mrf.mxu0
      %v5058 = vadd.f32 0.0, %v5057
      %v5059 = vpop.f32.mrf.mxu0
      %v5060 = vadd.f32 0.0, %v5059
      %5061 = vmatmul.bf16.gmra.mxu0 %v4986
      %v5062 = vpop.f32.mrf.mxu0
      %v5063 = vadd.f32 0.0, %v5062
      %v5064 = vpop.f32.mrf.mxu0
      %v5065 = vadd.f32 0.0, %v5064
      %5066 = vmatmul.bf16.gmra.mxu0 %v4989
      %v5067 = vpop.f32.mrf.mxu0
      %v5068 = vadd.f32 0.0, %v5067
      %v5069 = vpop.f32.mrf.mxu0
      %v5070 = vadd.f32 0.0, %v5069
      %5071 = vmatmul.bf16.gmra.mxu0 %v4992
      %v5072 = vpop.f32.mrf.mxu0
      %v5073 = vadd.f32 0.0, %v5072
      %v5074 = vpop.f32.mrf.mxu0
      %v5075 = vadd.f32 0.0, %v5074
      %5076 = vmatmul.bf16.gmra.mxu0 %v4995
      %v5077 = vpop.f32.mrf.mxu0
      %v5078 = vadd.f32 0.0, %v5077
      %v5079 = vpop.f32.mrf.mxu0
      %v5080 = vadd.f32 0.0, %v5079
      %5081 = vmatmul.bf16.gmra.mxu0 %v4998
      %v5082 = vpop.f32.mrf.mxu0
      %v5083 = vadd.f32 0.0, %v5082
      %v5084 = vpop.f32.mrf.mxu0
      %v5085 = vadd.f32 0.0, %v5084
      %5086 = vmatmul.bf16.gmra.mxu0 %v5001
      %v5087 = vpop.f32.mrf.mxu0
      %v5088 = vadd.f32 0.0, %v5087
      %v5089 = vpop.f32.mrf.mxu0
      %v5090 = vadd.f32 0.0, %v5089
      %5091 = vmatmul.bf16.gmra.mxu0 %v5004
      %v5092 = vpop.f32.mrf.mxu0
      %v5093 = vadd.f32 0.0, %v5092
      %v5094 = vpop.f32.mrf.mxu0
      %v5095 = vadd.f32 0.0, %v5094
      %5096 = vmatmul.bf16.gmra.mxu0 %v5007
      %v5097 = vpop.f32.mrf.mxu0
      %v5098 = vadd.f32 0.0, %v5097
      %v5099 = vpop.f32.mrf.mxu0
      %v5100 = vadd.f32 0.0, %v5099
      %5101 = vmatmul.bf16.gmra.mxu0 %v5010
      %v5102 = vpop.f32.mrf.mxu0
      %v5103 = vadd.f32 0.0, %v5102
      %v5104 = vpop.f32.mrf.mxu0
      %v5105 = vadd.f32 0.0, %v5104
      %5106 = vmatmul.bf16.gmra.mxu0 %v5013
      %v5107 = vpop.f32.mrf.mxu0
      %v5108 = vadd.f32 0.0, %v5107
      %v5109 = vpop.f32.mrf.mxu0
      %v5110 = vadd.f32 0.0, %v5109
      %5111 = vmatmul.bf16.gmra.mxu0 %v5016
      %v5112 = vpop.f32.mrf.mxu0
      %v5113 = vadd.f32 0.0, %v5112
      %v5114 = vpop.f32.mrf.mxu0
      %v5115 = vadd.f32 0.0, %v5114
      %5116 = vdwg.mxu0
      %v5117 = vadd.f32 %v4877, %v5028
      %v5118 = vadd.f32 %v4878, %v5030
      %v5119 = vadd.f32 %v4879, %v5033
      %v5120 = vadd.f32 %v4880, %v5035
      %v5121 = vadd.f32 %v4881, %v5038
      %v5122 = vadd.f32 %v4882, %v5040
      %v5123 = vadd.f32 %v4883, %v5043
      %v5124 = vadd.f32 %v4884, %v5045
      %v5125 = vadd.f32 %v4885, %v5048
      %v5126 = vadd.f32 %v4886, %v5050
      %v5127 = vadd.f32 %v4887, %v5053
      %v5128 = vadd.f32 %v4888, %v5055
      %v5129 = vadd.f32 %v4889, %v5058
      %v5130 = vadd.f32 %v4890, %v5060
      %v5131 = vadd.f32 %v4891, %v5063
      %v5132 = vadd.f32 %v4892, %v5065
      %v5133 = vadd.f32 %v4893, %v5068
      %v5134 = vadd.f32 %v4894, %v5070
      %v5135 = vadd.f32 %v4895, %v5073
      %v5136 = vadd.f32 %v4896, %v5075
      %v5137 = vadd.f32 %v4897, %v5078
      %v5138 = vadd.f32 %v4898, %v5080
      %v5139 = vadd.f32 %v4899, %v5083
      %v5140 = vadd.f32 %v4900, %v5085
      %v5141 = vadd.f32 %v4901, %v5088
      %v5142 = vadd.f32 %v4902, %v5090
      %v5143 = vadd.f32 %v4903, %v5093
      %v5144 = vadd.f32 %v4904, %v5095
      %v5145 = vadd.f32 %v4905, %v5098
      %v5146 = vadd.f32 %v4906, %v5100
      %v5147 = vadd.f32 %v4907, %v5103
      %v5148 = vadd.f32 %v4908, %v5105
      %v5149 = vadd.f32 %v4909, %v5108
      %v5150 = vadd.f32 %v4910, %v5110
      %v5151 = vadd.f32 %v4911, %v5113
      %v5152 = vadd.f32 %v4912, %v5115
      %v5153 = vld [vmem:[#allocation2 + $0x10] sm:$0xc]
      %v5154 = vld [vmem:[#allocation2 + $0x14] sm:$0xf]
      %v5155 = vld [vmem:[#allocation2 + $0x18] sm:$0xf]
      %v5156 = vld [vmem:[#allocation2 + $0x1c] sm:$0xf]
      %v5157 = vld [vmem:[#allocation2 + $0x20] sm:$0xf]
      %v5158 = vld [vmem:[#allocation2 + $0x24] sm:$0xf]
      %v5159 = vld [vmem:[#allocation2 + $0x28] sm:$0xf]
      %v5160 = vld [vmem:[#allocation2 + $0x2c] sm:$0xf]
      %v5161 = vld [vmem:[#allocation2 + $0x30] sm:$0xf]
      %v5162 = vld [vmem:[#allocation2 + $0x34] sm:$0xf]
      %v5163 = vld [vmem:[#allocation2 + $0x38] sm:$0xf]
      %v5164 = vld [vmem:[#allocation2 + $0x3c] sm:$0xf]
      %v5165 = vld [vmem:[#allocation2 + $0x40] sm:$0xf]
      %v5166 = vld [vmem:[#allocation2 + $0x44] sm:$0xf]
      %v5167 = vld [vmem:[#allocation2 + $0x48] sm:$0xf]
      %v5168 = vld [vmem:[#allocation2 + $0x4c] sm:$0xf]
      %v5169 = vld [vmem:[#allocation2 + $0x50] sm:$0xf]
      %v5170 = vld [vmem:[#allocation2 + $0x54] sm:$0xf]
      %v5171 = vld [vmem:[#allocation2 + $0x58] sm:$0xf]
      %v5172 = vld [vmem:[#allocation2 + $0x5c] sm:$0xf]
      %v5173 = vld [vmem:[#allocation2 + $0x60] sm:$0xf]
      %v5174 = vld [vmem:[#allocation2 + $0x64] sm:$0xf]
      %v5175 = vld [vmem:[#allocation2 + $0x68] sm:$0xf]
      %v5176 = vld [vmem:[#allocation2 + $0x6c] sm:$0xf]
      %v5177 = vld [vmem:[#allocation2 + $0x70] sm:$0xf]
      %v5178 = vld [vmem:[#allocation2 + $0x74] sm:$0xf]
      %v5179 = vld [vmem:[#allocation2 + $0x78] sm:$0xf]
      %v5180 = vld [vmem:[#allocation2 + $0x7c] sm:$0xf]
      %v5181 = vld [vmem:[#allocation2 + $0x80] sm:$0xf]
      %v5182 = vld [vmem:[#allocation2 + $0x84] sm:$0xf]
      %v5183 = vld [vmem:[#allocation2 + $0x88] sm:$0xf]
      %v5184 = vld [vmem:[#allocation2 + $0x8c] sm:$0xf]
      %v5185 = vld [vmem:[#allocation2 + $0x90] sm:$0xf]
      %v5186 = vld [vmem:[#allocation2 + $0x94] sm:$0xf]
      %v5187 = vld [vmem:[#allocation2 + $0x98] sm:$0xf]
      %v5188 = vld [vmem:[#allocation2 + $0x9c] sm:$0xf]
      %v5189 = vld [vmem:[#allocation2 + $0xa0] sm:$0x3]
      %s5190 = scalar_lea.vmem %s6, 48
      %v5191 = vld [vmem:[%s5190] sm:$0xf]
      %v5192 = vld [vmem:[%s5190 + $0x4] sm:$0xf]
      %v5230 = vunpack.c.l.b16 %v5153
      %v5231 = vunpack.c.l.b16 %v5154
      %v5232 = vunpack.c.l.b16 %v5155
      %v5233 = vunpack.c.l.b16 %v5156
      %v5234 = vunpack.c.l.b16 %v5157
      %v5235 = vunpack.c.l.b16 %v5158
      %v5236 = vunpack.c.l.b16 %v5159
      %v5237 = vunpack.c.l.b16 %v5160
      %v5238 = vunpack.c.l.b16 %v5161
      %v5239 = vunpack.c.l.b16 %v5162
      %v5240 = vunpack.c.l.b16 %v5163
      %v5241 = vunpack.c.l.b16 %v5164
      %v5242 = vunpack.c.l.b16 %v5165
      %v5243 = vunpack.c.l.b16 %v5166
      %v5244 = vunpack.c.l.b16 %v5167
      %v5245 = vunpack.c.l.b16 %v5168
      %v5246 = vunpack.c.l.b16 %v5169
      %v5247 = vunpack.c.l.b16 %v5170
      %v5248 = vunpack.c.l.b16 %v5171
      %v5249 = vunpack.c.l.b16 %v5172
      %v5250 = vunpack.c.l.b16 %v5173
      %v5251 = vunpack.c.l.b16 %v5174
      %v5252 = vunpack.c.l.b16 %v5175
      %v5253 = vunpack.c.l.b16 %v5176
      %v5254 = vunpack.c.l.b16 %v5177
      %v5255 = vunpack.c.l.b16 %v5178
      %v5256 = vunpack.c.l.b16 %v5179
      %v5257 = vunpack.c.l.b16 %v5180
      %v5258 = vunpack.c.l.b16 %v5181
      %v5259 = vunpack.c.l.b16 %v5182
      %v5260 = vunpack.c.l.b16 %v5183
      %v5261 = vunpack.c.l.b16 %v5184
      %v5262 = vunpack.c.l.b16 %v5185
      %v5263 = vunpack.c.l.b16 %v5186
      %v5264 = vunpack.c.l.b16 %v5187
      %v5265 = vunpack.c.l.b16 %v5188
      %v5266 = vunpack.c.l.b16 %v5189
      %v5267 = vpack.c.b16 %v5231, %v5230
      %v5268 = vpack.c.b16 %v5233, %v5232
      %v5269 = vpack.c.b16 %v5235, %v5234
      %v5270 = vpack.c.b16 %v5237, %v5236
      %v5271 = vpack.c.b16 %v5239, %v5238
      %v5272 = vpack.c.b16 %v5241, %v5240
      %v5273 = vpack.c.b16 %v5243, %v5242
      %v5274 = vpack.c.b16 %v5245, %v5244
      %v5275 = vpack.c.b16 %v5247, %v5246
      %v5276 = vpack.c.b16 %v5249, %v5248
      %v5277 = vpack.c.b16 %v5251, %v5250
      %v5278 = vpack.c.b16 %v5253, %v5252
      %v5279 = vpack.c.b16 %v5255, %v5254
      %v5280 = vpack.c.b16 %v5257, %v5256
      %v5281 = vpack.c.b16 %v5259, %v5258
      %v5282 = vpack.c.b16 %v5261, %v5260
      %v5283 = vpack.c.b16 %v5263, %v5262
      %v5284 = vpack.c.b16 %v5265, %v5264
      %v5285 = vpack.c.b16 %v5266, %v5266
      %v5286 = vrot.slane %v5267, 2
      %v5287 = vrot.slane %v5268, 2
      %v5288 = vsel %vm4920, %v5286, %v5287
      %v5289 = vrot.slane %v5269, 2
      %v5290 = vsel %vm4920, %v5287, %v5289
      %v5291 = vrot.slane %v5270, 2
      %v5292 = vsel %vm4920, %v5289, %v5291
      %v5293 = vrot.slane %v5271, 2
      %v5294 = vsel %vm4920, %v5291, %v5293
      %v5295 = vrot.slane %v5272, 2
      %v5296 = vsel %vm4920, %v5293, %v5295
      %v5297 = vrot.slane %v5273, 2
      %v5298 = vsel %vm4920, %v5295, %v5297
      %v5299 = vrot.slane %v5274, 2
      %v5300 = vsel %vm4920, %v5297, %v5299
      %v5301 = vrot.slane %v5275, 2
      %v5302 = vsel %vm4920, %v5299, %v5301
      %v5303 = vrot.slane %v5276, 2
      %v5304 = vsel %vm4920, %v5301, %v5303
      %v5305 = vrot.slane %v5277, 2
      %v5306 = vsel %vm4920, %v5303, %v5305
      %v5307 = vrot.slane %v5278, 2
      %v5308 = vsel %vm4920, %v5305, %v5307
      %v5309 = vrot.slane %v5279, 2
      %v5310 = vsel %vm4920, %v5307, %v5309
      %v5311 = vrot.slane %v5280, 2
      %v5312 = vsel %vm4920, %v5309, %v5311
      %v5313 = vrot.slane %v5281, 2
      %v5314 = vsel %vm4920, %v5311, %v5313
      %v5315 = vrot.slane %v5282, 2
      %v5316 = vsel %vm4920, %v5313, %v5315
      %v5317 = vrot.slane %v5283, 2
      %v5318 = vsel %vm4920, %v5315, %v5317
      %v5319 = vrot.slane %v5284, 2
      %v5320 = vsel %vm4920, %v5317, %v5319
      %v5321 = vrot.slane %v5285, 2
      %v5322 = vsel %vm4920, %v5319, %v5321
      %v5325 = vunpack.c.l.b16 %v5191
      %v5326 = vunpack.c.l.b16 %v5192
      %v5327 = vpack.c.b16 %v5326, %v5325
      %v5330 = vsel %vm3640, %v5288, 0
      %v5333 = vsel %vm3640, %v5290, 0
      %v5336 = vsel %vm3640, %v5292, 0
      %v5339 = vsel %vm3640, %v5294, 0
      %v5342 = vsel %vm3640, %v5296, 0
      %v5345 = vsel %vm3640, %v5298, 0
      %v5348 = vsel %vm3640, %v5300, 0
      %v5351 = vsel %vm3640, %v5302, 0
      %v5354 = vsel %vm3640, %v5304, 0
      %v5357 = vsel %vm3640, %v5306, 0
      %v5360 = vsel %vm3640, %v5308, 0
      %v5363 = vsel %vm3640, %v5310, 0
      %v5366 = vsel %vm3640, %v5312, 0
      %v5369 = vsel %vm3640, %v5314, 0
      %v5372 = vsel %vm3640, %v5316, 0
      %v5375 = vsel %vm3640, %v5318, 0
      %v5378 = vsel %vm3640, %v5320, 0
      %v5381 = vsel %vm3640, %v5322, 0
      %5383 = vmatpush.bf16.msra.mxu0 0
      %5384 = vmatpush.bf16.msra.mxu0 0
      %5385 = vmatpush.bf16.msra.mxu0 0
      %5386 = vmatpush.bf16.msra.mxu0 0
      %5387 = vmatpush.bf16.msra.mxu0 0
      %5388 = vmatpush.bf16.msra.mxu0 0
      %5389 = vmatpush.bf16.msra.mxu0 0
      %5390 = vmatpush.bf16.msra.mxu0 %v5327
      %5391 = vmatmul.bf16.gmra.mxu0 %v5330
      %v5392 = vpop.f32.mrf.mxu0
      %v5393 = vadd.f32 0.0, %v5392
      %v5394 = vpop.f32.mrf.mxu0
      %v5395 = vadd.f32 0.0, %v5394
      %5396 = vmatmul.bf16.gmra.mxu0 %v5333
      %v5397 = vpop.f32.mrf.mxu0
      %v5398 = vadd.f32 0.0, %v5397
      %v5399 = vpop.f32.mrf.mxu0
      %v5400 = vadd.f32 0.0, %v5399
      %5401 = vmatmul.bf16.gmra.mxu0 %v5336
      %v5402 = vpop.f32.mrf.mxu0
      %v5403 = vadd.f32 0.0, %v5402
      %v5404 = vpop.f32.mrf.mxu0
      %v5405 = vadd.f32 0.0, %v5404
      %5406 = vmatmul.bf16.gmra.mxu0 %v5339
      %v5407 = vpop.f32.mrf.mxu0
      %v5408 = vadd.f32 0.0, %v5407
      %v5409 = vpop.f32.mrf.mxu0
      %v5410 = vadd.f32 0.0, %v5409
      %5411 = vmatmul.bf16.gmra.mxu0 %v5342
      %v5412 = vpop.f32.mrf.mxu0
      %v5413 = vadd.f32 0.0, %v5412
      %v5414 = vpop.f32.mrf.mxu0
      %v5415 = vadd.f32 0.0, %v5414
      %5416 = vmatmul.bf16.gmra.mxu0 %v5345
      %v5417 = vpop.f32.mrf.mxu0
      %v5418 = vadd.f32 0.0, %v5417
      %v5419 = vpop.f32.mrf.mxu0
      %v5420 = vadd.f32 0.0, %v5419
      %5421 = vmatmul.bf16.gmra.mxu0 %v5348
      %v5422 = vpop.f32.mrf.mxu0
      %v5423 = vadd.f32 0.0, %v5422
      %v5424 = vpop.f32.mrf.mxu0
      %v5425 = vadd.f32 0.0, %v5424
      %5426 = vmatmul.bf16.gmra.mxu0 %v5351
      %v5427 = vpop.f32.mrf.mxu0
      %v5428 = vadd.f32 0.0, %v5427
      %v5429 = vpop.f32.mrf.mxu0
      %v5430 = vadd.f32 0.0, %v5429
      %5431 = vmatmul.bf16.gmra.mxu0 %v5354
      %v5432 = vpop.f32.mrf.mxu0
      %v5433 = vadd.f32 0.0, %v5432
      %v5434 = vpop.f32.mrf.mxu0
      %v5435 = vadd.f32 0.0, %v5434
      %5436 = vmatmul.bf16.gmra.mxu0 %v5357
      %v5437 = vpop.f32.mrf.mxu0
      %v5438 = vadd.f32 0.0, %v5437
      %v5439 = vpop.f32.mrf.mxu0
      %v5440 = vadd.f32 0.0, %v5439
      %5441 = vmatmul.bf16.gmra.mxu0 %v5360
      %v5442 = vpop.f32.mrf.mxu0
      %v5443 = vadd.f32 0.0, %v5442
      %v5444 = vpop.f32.mrf.mxu0
      %v5445 = vadd.f32 0.0, %v5444
      %5446 = vmatmul.bf16.gmra.mxu0 %v5363
      %v5447 = vpop.f32.mrf.mxu0
      %v5448 = vadd.f32 0.0, %v5447
      %v5449 = vpop.f32.mrf.mxu0
      %v5450 = vadd.f32 0.0, %v5449
      %5451 = vmatmul.bf16.gmra.mxu0 %v5366
      %v5452 = vpop.f32.mrf.mxu0
      %v5453 = vadd.f32 0.0, %v5452
      %v5454 = vpop.f32.mrf.mxu0
      %v5455 = vadd.f32 0.0, %v5454
      %5456 = vmatmul.bf16.gmra.mxu0 %v5369
      %v5457 = vpop.f32.mrf.mxu0
      %v5458 = vadd.f32 0.0, %v5457
      %v5459 = vpop.f32.mrf.mxu0
      %v5460 = vadd.f32 0.0, %v5459
      %5461 = vmatmul.bf16.gmra.mxu0 %v5372
      %v5462 = vpop.f32.mrf.mxu0
      %v5463 = vadd.f32 0.0, %v5462
      %v5464 = vpop.f32.mrf.mxu0
      %v5465 = vadd.f32 0.0, %v5464
      %5466 = vmatmul.bf16.gmra.mxu0 %v5375
      %v5467 = vpop.f32.mrf.mxu0
      %v5468 = vadd.f32 0.0, %v5467
      %v5469 = vpop.f32.mrf.mxu0
      %v5470 = vadd.f32 0.0, %v5469
      %5471 = vmatmul.bf16.gmra.mxu0 %v5378
      %v5472 = vpop.f32.mrf.mxu0
      %v5473 = vadd.f32 0.0, %v5472
      %v5474 = vpop.f32.mrf.mxu0
      %v5475 = vadd.f32 0.0, %v5474
      %5476 = vmatmul.bf16.gmra.mxu0 %v5381
      %v5477 = vpop.f32.mrf.mxu0
      %v5478 = vadd.f32 0.0, %v5477
      %v5479 = vpop.f32.mrf.mxu0
      %v5480 = vadd.f32 0.0, %v5479
      %5481 = vdwg.mxu0
      %v5482 = vadd.f32 %v5117, %v5393
      %v5483 = vadd.f32 %v5118, %v5395
      %v5484 = vadd.f32 %v5119, %v5398
      %v5485 = vadd.f32 %v5120, %v5400
      %v5486 = vadd.f32 %v5121, %v5403
      %v5487 = vadd.f32 %v5122, %v5405
      %v5488 = vadd.f32 %v5123, %v5408
      %v5489 = vadd.f32 %v5124, %v5410
      %v5490 = vadd.f32 %v5125, %v5413
      %v5491 = vadd.f32 %v5126, %v5415
      %v5492 = vadd.f32 %v5127, %v5418
      %v5493 = vadd.f32 %v5128, %v5420
      %v5494 = vadd.f32 %v5129, %v5423
      %v5495 = vadd.f32 %v5130, %v5425
      %v5496 = vadd.f32 %v5131, %v5428
      %v5497 = vadd.f32 %v5132, %v5430
      %v5498 = vadd.f32 %v5133, %v5433
      %v5499 = vadd.f32 %v5134, %v5435
      %v5500 = vadd.f32 %v5135, %v5438
      %v5501 = vadd.f32 %v5136, %v5440
      %v5502 = vadd.f32 %v5137, %v5443
      %v5503 = vadd.f32 %v5138, %v5445
      %v5504 = vadd.f32 %v5139, %v5448
      %v5505 = vadd.f32 %v5140, %v5450
      %v5506 = vadd.f32 %v5141, %v5453
      %v5507 = vadd.f32 %v5142, %v5455
      %v5508 = vadd.f32 %v5143, %v5458
      %v5509 = vadd.f32 %v5144, %v5460
      %v5510 = vadd.f32 %v5145, %v5463
      %v5511 = vadd.f32 %v5146, %v5465
      %v5512 = vadd.f32 %v5147, %v5468
      %v5513 = vadd.f32 %v5148, %v5470
      %v5514 = vadd.f32 %v5149, %v5473
      %v5515 = vadd.f32 %v5150, %v5475
      %v5516 = vadd.f32 %v5151, %v5478
      %v5517 = vadd.f32 %v5152, %v5480
      %v5518 = vld [vmem:[#allocation2 + $0xa0] sm:$0x7]
      %s5519 = scalar_lea.vmem %s6, 56
      %v5520 = vld [vmem:[%s5519] sm:$0xf]
      %v5521 = vld [vmem:[%s5519 + $0x4] sm:$0xf]
      %v5523 = vunpack.c.l.b16 %v5518
      %v5524 = vpack.c.b16 %v5523, %v5523
      %vm5525 = vsmask.f32 5376
      %v5527 = vshrl.u32 %v5267, 16
      %v5529 = vrot.slane %v5527, 2
      %v5530 = vshll.u32 %v5267, 16
      %v5532 = vrot.slane %v5530, 3
      %v5533 = vor.u32 %v5529, %v5532
      %v5535 = vshrl.u32 %v5268, 16
      %v5537 = vrot.slane %v5535, 2
      %v5538 = vshll.u32 %v5268, 16
      %v5540 = vrot.slane %v5538, 3
      %v5541 = vor.u32 %v5537, %v5540
      %v5542 = vsel %vm5525, %v5533, %v5541
      %v5544 = vshrl.u32 %v5269, 16
      %v5546 = vrot.slane %v5544, 2
      %v5547 = vshll.u32 %v5269, 16
      %v5549 = vrot.slane %v5547, 3
      %v5550 = vor.u32 %v5546, %v5549
      %v5551 = vsel %vm5525, %v5541, %v5550
      %v5553 = vshrl.u32 %v5270, 16
      %v5555 = vrot.slane %v5553, 2
      %v5556 = vshll.u32 %v5270, 16
      %v5558 = vrot.slane %v5556, 3
      %v5559 = vor.u32 %v5555, %v5558
      %v5560 = vsel %vm5525, %v5550, %v5559
      %v5562 = vshrl.u32 %v5271, 16
      %v5564 = vrot.slane %v5562, 2
      %v5565 = vshll.u32 %v5271, 16
      %v5567 = vrot.slane %v5565, 3
      %v5568 = vor.u32 %v5564, %v5567
      %v5569 = vsel %vm5525, %v5559, %v5568
      %v5571 = vshrl.u32 %v5272, 16
      %v5573 = vrot.slane %v5571, 2
      %v5574 = vshll.u32 %v5272, 16
      %v5576 = vrot.slane %v5574, 3
      %v5577 = vor.u32 %v5573, %v5576
      %v5578 = vsel %vm5525, %v5568, %v5577
      %v5580 = vshrl.u32 %v5273, 16
      %v5582 = vrot.slane %v5580, 2
      %v5583 = vshll.u32 %v5273, 16
      %v5585 = vrot.slane %v5583, 3
      %v5586 = vor.u32 %v5582, %v5585
      %v5587 = vsel %vm5525, %v5577, %v5586
      %v5589 = vshrl.u32 %v5274, 16
      %v5591 = vrot.slane %v5589, 2
      %v5592 = vshll.u32 %v5274, 16
      %v5594 = vrot.slane %v5592, 3
      %v5595 = vor.u32 %v5591, %v5594
      %v5596 = vsel %vm5525, %v5586, %v5595
      %v5598 = vshrl.u32 %v5275, 16
      %v5600 = vrot.slane %v5598, 2
      %v5601 = vshll.u32 %v5275, 16
      %v5603 = vrot.slane %v5601, 3
      %v5604 = vor.u32 %v5600, %v5603
      %v5605 = vsel %vm5525, %v5595, %v5604
      %v5607 = vshrl.u32 %v5276, 16
      %v5609 = vrot.slane %v5607, 2
      %v5610 = vshll.u32 %v5276, 16
      %v5612 = vrot.slane %v5610, 3
      %v5613 = vor.u32 %v5609, %v5612
      %v5614 = vsel %vm5525, %v5604, %v5613
      %v5616 = vshrl.u32 %v5277, 16
      %v5618 = vrot.slane %v5616, 2
      %v5619 = vshll.u32 %v5277, 16
      %v5621 = vrot.slane %v5619, 3
      %v5622 = vor.u32 %v5618, %v5621
      %v5623 = vsel %vm5525, %v5613, %v5622
      %v5625 = vshrl.u32 %v5278, 16
      %v5627 = vrot.slane %v5625, 2
      %v5628 = vshll.u32 %v5278, 16
      %v5630 = vrot.slane %v5628, 3
      %v5631 = vor.u32 %v5627, %v5630
      %v5632 = vsel %vm5525, %v5622, %v5631
      %v5634 = vshrl.u32 %v5279, 16
      %v5636 = vrot.slane %v5634, 2
      %v5637 = vshll.u32 %v5279, 16
      %v5639 = vrot.slane %v5637, 3
      %v5640 = vor.u32 %v5636, %v5639
      %v5641 = vsel %vm5525, %v5631, %v5640
      %v5643 = vshrl.u32 %v5280, 16
      %v5645 = vrot.slane %v5643, 2
      %v5646 = vshll.u32 %v5280, 16
      %v5648 = vrot.slane %v5646, 3
      %v5649 = vor.u32 %v5645, %v5648
      %v5650 = vsel %vm5525, %v5640, %v5649
      %v5652 = vshrl.u32 %v5281, 16
      %v5654 = vrot.slane %v5652, 2
      %v5655 = vshll.u32 %v5281, 16
      %v5657 = vrot.slane %v5655, 3
      %v5658 = vor.u32 %v5654, %v5657
      %v5659 = vsel %vm5525, %v5649, %v5658
      %v5661 = vshrl.u32 %v5282, 16
      %v5663 = vrot.slane %v5661, 2
      %v5664 = vshll.u32 %v5282, 16
      %v5666 = vrot.slane %v5664, 3
      %v5667 = vor.u32 %v5663, %v5666
      %v5668 = vsel %vm5525, %v5658, %v5667
      %v5670 = vshrl.u32 %v5283, 16
      %v5672 = vrot.slane %v5670, 2
      %v5673 = vshll.u32 %v5283, 16
      %v5675 = vrot.slane %v5673, 3
      %v5676 = vor.u32 %v5672, %v5675
      %v5677 = vsel %vm5525, %v5667, %v5676
      %v5679 = vshrl.u32 %v5284, 16
      %v5681 = vrot.slane %v5679, 2
      %v5682 = vshll.u32 %v5284, 16
      %v5684 = vrot.slane %v5682, 3
      %v5685 = vor.u32 %v5681, %v5684
      %v5686 = vsel %vm5525, %v5676, %v5685
      %v5688 = vshrl.u32 %v5524, 16
      %v5690 = vrot.slane %v5688, 2
      %v5691 = vshll.u32 %v5524, 16
      %v5693 = vrot.slane %v5691, 3
      %v5694 = vor.u32 %v5690, %v5693
      %v5695 = vsel %vm5525, %v5685, %v5694
      %v5698 = vunpack.c.l.b16 %v5520
      %v5699 = vunpack.c.l.b16 %v5521
      %v5700 = vpack.c.b16 %v5699, %v5698
      %v5703 = vsel %vm3640, %v5542, 0
      %v5706 = vsel %vm3640, %v5551, 0
      %v5709 = vsel %vm3640, %v5560, 0
      %v5712 = vsel %vm3640, %v5569, 0
      %v5715 = vsel %vm3640, %v5578, 0
      %v5718 = vsel %vm3640, %v5587, 0
      %v5721 = vsel %vm3640, %v5596, 0
      %v5724 = vsel %vm3640, %v5605, 0
      %v5727 = vsel %vm3640, %v5614, 0
      %v5730 = vsel %vm3640, %v5623, 0
      %v5733 = vsel %vm3640, %v5632, 0
      %v5736 = vsel %vm3640, %v5641, 0
      %v5739 = vsel %vm3640, %v5650, 0
      %v5742 = vsel %vm3640, %v5659, 0
      %v5745 = vsel %vm3640, %v5668, 0
      %v5748 = vsel %vm3640, %v5677, 0
      %v5751 = vsel %vm3640, %v5686, 0
      %v5754 = vsel %vm3640, %v5695, 0
      %5756 = vmatpush.bf16.msra.mxu0 0
      %5757 = vmatpush.bf16.msra.mxu0 0
      %5758 = vmatpush.bf16.msra.mxu0 0
      %5759 = vmatpush.bf16.msra.mxu0 0
      %5760 = vmatpush.bf16.msra.mxu0 0
      %5761 = vmatpush.bf16.msra.mxu0 0
      %5762 = vmatpush.bf16.msra.mxu0 0
      %5763 = vmatpush.bf16.msra.mxu0 %v5700
      %5764 = vmatmul.bf16.gmra.mxu0 %v5703
      %v5765 = vpop.f32.mrf.mxu0
      %v5766 = vadd.f32 0.0, %v5765
      %v5767 = vpop.f32.mrf.mxu0
      %v5768 = vadd.f32 0.0, %v5767
      %5769 = vmatmul.bf16.gmra.mxu0 %v5706
      %v5770 = vpop.f32.mrf.mxu0
      %v5771 = vadd.f32 0.0, %v5770
      %v5772 = vpop.f32.mrf.mxu0
      %v5773 = vadd.f32 0.0, %v5772
      %5774 = vmatmul.bf16.gmra.mxu0 %v5709
      %v5775 = vpop.f32.mrf.mxu0
      %v5776 = vadd.f32 0.0, %v5775
      %v5777 = vpop.f32.mrf.mxu0
      %v5778 = vadd.f32 0.0, %v5777
      %5779 = vmatmul.bf16.gmra.mxu0 %v5712
      %v5780 = vpop.f32.mrf.mxu0
      %v5781 = vadd.f32 0.0, %v5780
      %v5782 = vpop.f32.mrf.mxu0
      %v5783 = vadd.f32 0.0, %v5782
      %5784 = vmatmul.bf16.gmra.mxu0 %v5715
      %v5785 = vpop.f32.mrf.mxu0
      %v5786 = vadd.f32 0.0, %v5785
      %v5787 = vpop.f32.mrf.mxu0
      %v5788 = vadd.f32 0.0, %v5787
      %5789 = vmatmul.bf16.gmra.mxu0 %v5718
      %v5790 = vpop.f32.mrf.mxu0
      %v5791 = vadd.f32 0.0, %v5790
      %v5792 = vpop.f32.mrf.mxu0
      %v5793 = vadd.f32 0.0, %v5792
      %5794 = vmatmul.bf16.gmra.mxu0 %v5721
      %v5795 = vpop.f32.mrf.mxu0
      %v5796 = vadd.f32 0.0, %v5795
      %v5797 = vpop.f32.mrf.mxu0
      %v5798 = vadd.f32 0.0, %v5797
      %5799 = vmatmul.bf16.gmra.mxu0 %v5724
      %v5800 = vpop.f32.mrf.mxu0
      %v5801 = vadd.f32 0.0, %v5800
      %v5802 = vpop.f32.mrf.mxu0
      %v5803 = vadd.f32 0.0, %v5802
      %5804 = vmatmul.bf16.gmra.mxu0 %v5727
      %v5805 = vpop.f32.mrf.mxu0
      %v5806 = vadd.f32 0.0, %v5805
      %v5807 = vpop.f32.mrf.mxu0
      %v5808 = vadd.f32 0.0, %v5807
      %5809 = vmatmul.bf16.gmra.mxu0 %v5730
      %v5810 = vpop.f32.mrf.mxu0
      %v5811 = vadd.f32 0.0, %v5810
      %v5812 = vpop.f32.mrf.mxu0
      %v5813 = vadd.f32 0.0, %v5812
      %5814 = vmatmul.bf16.gmra.mxu0 %v5733
      %v5815 = vpop.f32.mrf.mxu0
      %v5816 = vadd.f32 0.0, %v5815
      %v5817 = vpop.f32.mrf.mxu0
      %v5818 = vadd.f32 0.0, %v5817
      %5819 = vmatmul.bf16.gmra.mxu0 %v5736
      %v5820 = vpop.f32.mrf.mxu0
      %v5821 = vadd.f32 0.0, %v5820
      %v5822 = vpop.f32.mrf.mxu0
      %v5823 = vadd.f32 0.0, %v5822
      %5824 = vmatmul.bf16.gmra.mxu0 %v5739
      %v5825 = vpop.f32.mrf.mxu0
      %v5826 = vadd.f32 0.0, %v5825
      %v5827 = vpop.f32.mrf.mxu0
      %v5828 = vadd.f32 0.0, %v5827
      %5829 = vmatmul.bf16.gmra.mxu0 %v5742
      %v5830 = vpop.f32.mrf.mxu0
      %v5831 = vadd.f32 0.0, %v5830
      %v5832 = vpop.f32.mrf.mxu0
      %v5833 = vadd.f32 0.0, %v5832
      %5834 = vmatmul.bf16.gmra.mxu0 %v5745
      %v5835 = vpop.f32.mrf.mxu0
      %v5836 = vadd.f32 0.0, %v5835
      %v5837 = vpop.f32.mrf.mxu0
      %v5838 = vadd.f32 0.0, %v5837
      %5839 = vmatmul.bf16.gmra.mxu0 %v5748
      %v5840 = vpop.f32.mrf.mxu0
      %v5841 = vadd.f32 0.0, %v5840
      %v5842 = vpop.f32.mrf.mxu0
      %v5843 = vadd.f32 0.0, %v5842
      %5844 = vmatmul.bf16.gmra.mxu0 %v5751
      %v5845 = vpop.f32.mrf.mxu0
      %v5846 = vadd.f32 0.0, %v5845
      %v5847 = vpop.f32.mrf.mxu0
      %v5848 = vadd.f32 0.0, %v5847
      %5849 = vmatmul.bf16.gmra.mxu0 %v5754
      %v5850 = vpop.f32.mrf.mxu0
      %v5851 = vadd.f32 0.0, %v5850
      %v5852 = vpop.f32.mrf.mxu0
      %v5853 = vadd.f32 0.0, %v5852
      %5854 = vdwg.mxu0
      %v5855 = vadd.f32 %v5482, %v5766
      %v5856 = vadd.f32 %v5483, %v5768
      %v5857 = vadd.f32 %v5484, %v5771
      %v5858 = vadd.f32 %v5485, %v5773
      %v5859 = vadd.f32 %v5486, %v5776
      %v5860 = vadd.f32 %v5487, %v5778
      %v5861 = vadd.f32 %v5488, %v5781
      %v5862 = vadd.f32 %v5489, %v5783
      %v5863 = vadd.f32 %v5490, %v5786
      %v5864 = vadd.f32 %v5491, %v5788
      %v5865 = vadd.f32 %v5492, %v5791
      %v5866 = vadd.f32 %v5493, %v5793
      %v5867 = vadd.f32 %v5494, %v5796
      %v5868 = vadd.f32 %v5495, %v5798
      %v5869 = vadd.f32 %v5496, %v5801
      %v5870 = vadd.f32 %v5497, %v5803
      %v5871 = vadd.f32 %v5498, %v5806
      %v5872 = vadd.f32 %v5499, %v5808
      %v5873 = vadd.f32 %v5500, %v5811
      %v5874 = vadd.f32 %v5501, %v5813
      %v5875 = vadd.f32 %v5502, %v5816
      %v5876 = vadd.f32 %v5503, %v5818
      %v5877 = vadd.f32 %v5504, %v5821
      %v5878 = vadd.f32 %v5505, %v5823
      %v5879 = vadd.f32 %v5506, %v5826
      %v5880 = vadd.f32 %v5507, %v5828
      %v5881 = vadd.f32 %v5508, %v5831
      %v5882 = vadd.f32 %v5509, %v5833
      %v5883 = vadd.f32 %v5510, %v5836
      %v5884 = vadd.f32 %v5511, %v5838
      %v5885 = vadd.f32 %v5512, %v5841
      %v5886 = vadd.f32 %v5513, %v5843
      %v5887 = vadd.f32 %v5514, %v5846
      %v5888 = vadd.f32 %v5515, %v5848
      %v5889 = vadd.f32 %v5516, %v5851
      %v5890 = vadd.f32 %v5517, %v5853
      %v5891 = vld [vmem:[#allocation2 + $0x10] sm:$0x8]
      %s5892 = scalar_lea.vmem %s6, 64
      %v5893 = vld [vmem:[%s5892] sm:$0xf]
      %v5894 = vld [vmem:[%s5892 + $0x4] sm:$0xf]
      %v5896 = vunpack.c.l.b16 %v5891
      %v5897 = vpack.c.b16 %v5231, %v5896
      %vm5898 = vcmask 1044480
      %v5899 = vrot.slane %v5897, 3
      %v5900 = vrot.slane %v5268, 3
      %v5901 = vsel %vm5898, %v5899, %v5900
      %v5902 = vrot.slane %v5269, 3
      %v5903 = vsel %vm5898, %v5900, %v5902
      %v5904 = vrot.slane %v5270, 3
      %v5905 = vsel %vm5898, %v5902, %v5904
      %v5906 = vrot.slane %v5271, 3
      %v5907 = vsel %vm5898, %v5904, %v5906
      %v5908 = vrot.slane %v5272, 3
      %v5909 = vsel %vm5898, %v5906, %v5908
      %v5910 = vrot.slane %v5273, 3
      %v5911 = vsel %vm5898, %v5908, %v5910
      %v5912 = vrot.slane %v5274, 3
      %v5913 = vsel %vm5898, %v5910, %v5912
      %v5914 = vrot.slane %v5275, 3
      %v5915 = vsel %vm5898, %v5912, %v5914
      %v5916 = vrot.slane %v5276, 3
      %v5917 = vsel %vm5898, %v5914, %v5916
      %v5918 = vrot.slane %v5277, 3
      %v5919 = vsel %vm5898, %v5916, %v5918
      %v5920 = vrot.slane %v5278, 3
      %v5921 = vsel %vm5898, %v5918, %v5920
      %v5922 = vrot.slane %v5279, 3
      %v5923 = vsel %vm5898, %v5920, %v5922
      %v5924 = vrot.slane %v5280, 3
      %v5925 = vsel %vm5898, %v5922, %v5924
      %v5926 = vrot.slane %v5281, 3
      %v5927 = vsel %vm5898, %v5924, %v5926
      %v5928 = vrot.slane %v5282, 3
      %v5929 = vsel %vm5898, %v5926, %v5928
      %v5930 = vrot.slane %v5283, 3
      %v5931 = vsel %vm5898, %v5928, %v5930
      %v5932 = vrot.slane %v5284, 3
      %v5933 = vsel %vm5898, %v5930, %v5932
      %v5934 = vrot.slane %v5524, 3
      %v5935 = vsel %vm5898, %v5932, %v5934
      %v5938 = vunpack.c.l.b16 %v5893
      %v5939 = vunpack.c.l.b16 %v5894
      %v5940 = vpack.c.b16 %v5939, %v5938
      %v5943 = vsel %vm3640, %v5901, 0
      %v5946 = vsel %vm3640, %v5903, 0
      %v5949 = vsel %vm3640, %v5905, 0
      %v5952 = vsel %vm3640, %v5907, 0
      %v5955 = vsel %vm3640, %v5909, 0
      %v5958 = vsel %vm3640, %v5911, 0
      %v5961 = vsel %vm3640, %v5913, 0
      %v5964 = vsel %vm3640, %v5915, 0
      %v5967 = vsel %vm3640, %v5917, 0
      %v5970 = vsel %vm3640, %v5919, 0
      %v5973 = vsel %vm3640, %v5921, 0
      %v5976 = vsel %vm3640, %v5923, 0
      %v5979 = vsel %vm3640, %v5925, 0
      %v5982 = vsel %vm3640, %v5927, 0
      %v5985 = vsel %vm3640, %v5929, 0
      %v5988 = vsel %vm3640, %v5931, 0
      %v5991 = vsel %vm3640, %v5933, 0
      %v5994 = vsel %vm3640, %v5935, 0
      %5996 = vmatpush.bf16.msra.mxu0 0
      %5997 = vmatpush.bf16.msra.mxu0 0
      %5998 = vmatpush.bf16.msra.mxu0 0
      %5999 = vmatpush.bf16.msra.mxu0 0
      %6000 = vmatpush.bf16.msra.mxu0 0
      %6001 = vmatpush.bf16.msra.mxu0 0
      %6002 = vmatpush.bf16.msra.mxu0 0
      %6003 = vmatpush.bf16.msra.mxu0 %v5940
      %6004 = vmatmul.bf16.gmra.mxu0 %v5943
      %v6005 = vpop.f32.mrf.mxu0
      %v6006 = vadd.f32 0.0, %v6005
      %v6007 = vpop.f32.mrf.mxu0
      %v6008 = vadd.f32 0.0, %v6007
      %6009 = vmatmul.bf16.gmra.mxu0 %v5946
      %v6010 = vpop.f32.mrf.mxu0
      %v6011 = vadd.f32 0.0, %v6010
      %v6012 = vpop.f32.mrf.mxu0
      %v6013 = vadd.f32 0.0, %v6012
      %6014 = vmatmul.bf16.gmra.mxu0 %v5949
      %v6015 = vpop.f32.mrf.mxu0
      %v6016 = vadd.f32 0.0, %v6015
      %v6017 = vpop.f32.mrf.mxu0
      %v6018 = vadd.f32 0.0, %v6017
      %6019 = vmatmul.bf16.gmra.mxu0 %v5952
      %v6020 = vpop.f32.mrf.mxu0
      %v6021 = vadd.f32 0.0, %v6020
      %v6022 = vpop.f32.mrf.mxu0
      %v6023 = vadd.f32 0.0, %v6022
      %6024 = vmatmul.bf16.gmra.mxu0 %v5955
      %v6025 = vpop.f32.mrf.mxu0
      %v6026 = vadd.f32 0.0, %v6025
      %v6027 = vpop.f32.mrf.mxu0
      %v6028 = vadd.f32 0.0, %v6027
      %6029 = vmatmul.bf16.gmra.mxu0 %v5958
      %v6030 = vpop.f32.mrf.mxu0
      %v6031 = vadd.f32 0.0, %v6030
      %v6032 = vpop.f32.mrf.mxu0
      %v6033 = vadd.f32 0.0, %v6032
      %6034 = vmatmul.bf16.gmra.mxu0 %v5961
      %v6035 = vpop.f32.mrf.mxu0
      %v6036 = vadd.f32 0.0, %v6035
      %v6037 = vpop.f32.mrf.mxu0
      %v6038 = vadd.f32 0.0, %v6037
      %6039 = vmatmul.bf16.gmra.mxu0 %v5964
      %v6040 = vpop.f32.mrf.mxu0
      %v6041 = vadd.f32 0.0, %v6040
      %v6042 = vpop.f32.mrf.mxu0
      %v6043 = vadd.f32 0.0, %v6042
      %6044 = vmatmul.bf16.gmra.mxu0 %v5967
      %v6045 = vpop.f32.mrf.mxu0
      %v6046 = vadd.f32 0.0, %v6045
      %v6047 = vpop.f32.mrf.mxu0
      %v6048 = vadd.f32 0.0, %v6047
      %6049 = vmatmul.bf16.gmra.mxu0 %v5970
      %v6050 = vpop.f32.mrf.mxu0
      %v6051 = vadd.f32 0.0, %v6050
      %v6052 = vpop.f32.mrf.mxu0
      %v6053 = vadd.f32 0.0, %v6052
      %6054 = vmatmul.bf16.gmra.mxu0 %v5973
      %v6055 = vpop.f32.mrf.mxu0
      %v6056 = vadd.f32 0.0, %v6055
      %v6057 = vpop.f32.mrf.mxu0
      %v6058 = vadd.f32 0.0, %v6057
      %6059 = vmatmul.bf16.gmra.mxu0 %v5976
      %v6060 = vpop.f32.mrf.mxu0
      %v6061 = vadd.f32 0.0, %v6060
      %v6062 = vpop.f32.mrf.mxu0
      %v6063 = vadd.f32 0.0, %v6062
      %6064 = vmatmul.bf16.gmra.mxu0 %v5979
      %v6065 = vpop.f32.mrf.mxu0
      %v6066 = vadd.f32 0.0, %v6065
      %v6067 = vpop.f32.mrf.mxu0
      %v6068 = vadd.f32 0.0, %v6067
      %6069 = vmatmul.bf16.gmra.mxu0 %v5982
      %v6070 = vpop.f32.mrf.mxu0
      %v6071 = vadd.f32 0.0, %v6070
      %v6072 = vpop.f32.mrf.mxu0
      %v6073 = vadd.f32 0.0, %v6072
      %6074 = vmatmul.bf16.gmra.mxu0 %v5985
      %v6075 = vpop.f32.mrf.mxu0
      %v6076 = vadd.f32 0.0, %v6075
      %v6077 = vpop.f32.mrf.mxu0
      %v6078 = vadd.f32 0.0, %v6077
      %6079 = vmatmul.bf16.gmra.mxu0 %v5988
      %v6080 = vpop.f32.mrf.mxu0
      %v6081 = vadd.f32 0.0, %v6080
      %v6082 = vpop.f32.mrf.mxu0
      %v6083 = vadd.f32 0.0, %v6082
      %6084 = vmatmul.bf16.gmra.mxu0 %v5991
      %v6085 = vpop.f32.mrf.mxu0
      %v6086 = vadd.f32 0.0, %v6085
      %v6087 = vpop.f32.mrf.mxu0
      %v6088 = vadd.f32 0.0, %v6087
      %6089 = vmatmul.bf16.gmra.mxu0 %v5994
      %v6090 = vpop.f32.mrf.mxu0
      %v6091 = vadd.f32 0.0, %v6090
      %v6092 = vpop.f32.mrf.mxu0
      %v6093 = vadd.f32 0.0, %v6092
      %6094 = vdwg.mxu0
      %v6095 = vadd.f32 %v5855, %v6006
      %v6096 = vadd.f32 %v5856, %v6008
      %v6097 = vadd.f32 %v5857, %v6011
      %v6098 = vadd.f32 %v5858, %v6013
      %v6099 = vadd.f32 %v5859, %v6016
      %v6100 = vadd.f32 %v5860, %v6018
      %v6101 = vadd.f32 %v5861, %v6021
      %v6102 = vadd.f32 %v5862, %v6023
      %v6103 = vadd.f32 %v5863, %v6026
      %v6104 = vadd.f32 %v5864, %v6028
      %v6105 = vadd.f32 %v5865, %v6031
      %v6106 = vadd.f32 %v5866, %v6033
      %v6107 = vadd.f32 %v5867, %v6036
      %v6108 = vadd.f32 %v5868, %v6038
      %v6109 = vadd.f32 %v5869, %v6041
      %v6110 = vadd.f32 %v5870, %v6043
      %v6111 = vadd.f32 %v5871, %v6046
      %v6112 = vadd.f32 %v5872, %v6048
      %v6113 = vadd.f32 %v5873, %v6051
      %v6114 = vadd.f32 %v5874, %v6053
      %v6115 = vadd.f32 %v5875, %v6056
      %v6116 = vadd.f32 %v5876, %v6058
      %v6117 = vadd.f32 %v5877, %v6061
      %v6118 = vadd.f32 %v5878, %v6063
      %v6119 = vadd.f32 %v5879, %v6066
      %v6120 = vadd.f32 %v5880, %v6068
      %v6121 = vadd.f32 %v5881, %v6071
      %v6122 = vadd.f32 %v5882, %v6073
      %v6123 = vadd.f32 %v5883, %v6076
      %v6124 = vadd.f32 %v5884, %v6078
      %v6125 = vadd.f32 %v5885, %v6081
      %v6126 = vadd.f32 %v5886, %v6083
      %v6127 = vadd.f32 %v5887, %v6086
      %v6128 = vadd.f32 %v5888, %v6088
      %v6129 = vadd.f32 %v5889, %v6091
      %v6130 = vadd.f32 %v5890, %v6093
      %v6131 = vld [vmem:[%s7] sm:$0x1]
      %v6133 = vperm.slane %v6131, 0
      %v6135 = vmul.f32 %v6095, %v6133
      %v6136 = vmul.f32 %v6096, %v6133
      %v6137 = vmul.f32 %v6097, %v6133
      %v6138 = vmul.f32 %v6098, %v6133
      %v6139 = vmul.f32 %v6099, %v6133
      %v6140 = vmul.f32 %v6100, %v6133
      %v6141 = vmul.f32 %v6101, %v6133
      %v6142 = vmul.f32 %v6102, %v6133
      %v6143 = vmul.f32 %v6103, %v6133
      %v6144 = vmul.f32 %v6104, %v6133
      %v6145 = vmul.f32 %v6105, %v6133
      %v6146 = vmul.f32 %v6106, %v6133
      %v6147 = vmul.f32 %v6107, %v6133
      %v6148 = vmul.f32 %v6108, %v6133
      %v6149 = vmul.f32 %v6109, %v6133
      %v6150 = vmul.f32 %v6110, %v6133
      %v6151 = vmul.f32 %v6111, %v6133
      %v6152 = vmul.f32 %v6112, %v6133
      %v6153 = vmul.f32 %v6113, %v6133
      %v6154 = vmul.f32 %v6114, %v6133
      %v6155 = vmul.f32 %v6115, %v6133
      %v6156 = vmul.f32 %v6116, %v6133
      %v6157 = vmul.f32 %v6117, %v6133
      %v6158 = vmul.f32 %v6118, %v6133
      %v6159 = vmul.f32 %v6119, %v6133
      %v6160 = vmul.f32 %v6120, %v6133
      %v6161 = vmul.f32 %v6121, %v6133
      %v6162 = vmul.f32 %v6122, %v6133
      %v6163 = vmul.f32 %v6123, %v6133
      %v6164 = vmul.f32 %v6124, %v6133
      %v6165 = vmul.f32 %v6125, %v6133
      %v6166 = vmul.f32 %v6126, %v6133
      %v6167 = vmul.f32 %v6127, %v6133
      %v6168 = vmul.f32 %v6128, %v6133
      %v6169 = vmul.f32 %v6129, %v6133
      %v6170 = vmul.f32 %v6130, %v6133
      %v6171 = vld [vmem:[%s8] sm:$0x1]
      %v6173 = vperm.slane %v6171, 0
      %v6175 = vadd.f32 %v6135, %v6173
      %v6176 = vadd.f32 %v6136, %v6173
      %v6177 = vadd.f32 %v6137, %v6173
      %v6178 = vadd.f32 %v6138, %v6173
      %v6179 = vadd.f32 %v6139, %v6173
      %v6180 = vadd.f32 %v6140, %v6173
      %v6181 = vadd.f32 %v6141, %v6173
      %v6182 = vadd.f32 %v6142, %v6173
      %v6183 = vadd.f32 %v6143, %v6173
      %v6184 = vadd.f32 %v6144, %v6173
      %v6185 = vadd.f32 %v6145, %v6173
      %v6186 = vadd.f32 %v6146, %v6173
      %v6187 = vadd.f32 %v6147, %v6173
      %v6188 = vadd.f32 %v6148, %v6173
      %v6189 = vadd.f32 %v6149, %v6173
      %v6190 = vadd.f32 %v6150, %v6173
      %v6191 = vadd.f32 %v6151, %v6173
      %v6192 = vadd.f32 %v6152, %v6173
      %v6193 = vadd.f32 %v6153, %v6173
      %v6194 = vadd.f32 %v6154, %v6173
      %v6195 = vadd.f32 %v6155, %v6173
      %v6196 = vadd.f32 %v6156, %v6173
      %v6197 = vadd.f32 %v6157, %v6173
      %v6198 = vadd.f32 %v6158, %v6173
      %v6199 = vadd.f32 %v6159, %v6173
      %v6200 = vadd.f32 %v6160, %v6173
      %v6201 = vadd.f32 %v6161, %v6173
      %v6202 = vadd.f32 %v6162, %v6173
      %v6203 = vadd.f32 %v6163, %v6173
      %v6204 = vadd.f32 %v6164, %v6173
      %v6205 = vadd.f32 %v6165, %v6173
      %v6206 = vadd.f32 %v6166, %v6173
      %v6207 = vadd.f32 %v6167, %v6173
      %v6208 = vadd.f32 %v6168, %v6173
      %v6209 = vadd.f32 %v6169, %v6173
      %v6210 = vadd.f32 %v6170, %v6173
      %v6211 = vmax.f32 %v6175, 0.0
      %v6212 = vmax.f32 %v6176, 0.0
      %v6213 = vmax.f32 %v6177, 0.0
      %v6214 = vmax.f32 %v6178, 0.0
      %v6215 = vmax.f32 %v6179, 0.0
      %v6216 = vmax.f32 %v6180, 0.0
      %v6217 = vmax.f32 %v6181, 0.0
      %v6218 = vmax.f32 %v6182, 0.0
      %v6219 = vmax.f32 %v6183, 0.0
      %v6220 = vmax.f32 %v6184, 0.0
      %v6221 = vmax.f32 %v6185, 0.0
      %v6222 = vmax.f32 %v6186, 0.0
      %v6223 = vmax.f32 %v6187, 0.0
      %v6224 = vmax.f32 %v6188, 0.0
      %v6225 = vmax.f32 %v6189, 0.0
      %v6226 = vmax.f32 %v6190, 0.0
      %v6227 = vmax.f32 %v6191, 0.0
      %v6228 = vmax.f32 %v6192, 0.0
      %v6229 = vmax.f32 %v6193, 0.0
      %v6230 = vmax.f32 %v6194, 0.0
      %v6231 = vmax.f32 %v6195, 0.0
      %v6232 = vmax.f32 %v6196, 0.0
      %v6233 = vmax.f32 %v6197, 0.0
      %v6234 = vmax.f32 %v6198, 0.0
      %v6235 = vmax.f32 %v6199, 0.0
      %v6236 = vmax.f32 %v6200, 0.0
      %v6237 = vmax.f32 %v6201, 0.0
      %v6238 = vmax.f32 %v6202, 0.0
      %v6239 = vmax.f32 %v6203, 0.0
      %v6240 = vmax.f32 %v6204, 0.0
      %v6241 = vmax.f32 %v6205, 0.0
      %v6242 = vmax.f32 %v6206, 0.0
      %v6243 = vmax.f32 %v6207, 0.0
      %v6244 = vmax.f32 %v6208, 0.0
      %v6245 = vmax.f32 %v6209, 0.0
      %v6246 = vmax.f32 %v6210, 0.0
      %v6283 = vrot.slane %v6211, 2
      %v6284 = vrot.slane %v6211, 4
      %v6285 = vrot.slane %v6211, 6
      %v6286 = vrot.slane %v6212, 2
      %v6287 = vrot.slane %v6212, 4
      %v6288 = vrot.slane %v6212, 6
      %v6289 = vrot.slane %v6213, 2
      %v6290 = vrot.slane %v6213, 4
      %v6291 = vrot.slane %v6213, 6
      %v6292 = vrot.slane %v6214, 2
      %v6293 = vrot.slane %v6214, 4
      %v6294 = vrot.slane %v6214, 6
      %v6295 = vrot.slane %v6215, 4
      %v6296 = vrot.slane %v6215, 6
      %v6297 = vrot.slane %v6216, 2
      %v6298 = vrot.slane %v6216, 4
      %v6299 = vrot.slane %v6216, 6
      %v6300 = vrot.slane %v6217, 2
      %v6301 = vrot.slane %v6217, 6
      %v6302 = vrot.slane %v6218, 2
      %v6303 = vrot.slane %v6218, 4
      %v6304 = vrot.slane %v6218, 6
      %v6305 = vrot.slane %v6219, 2
      %v6306 = vrot.slane %v6219, 4
      %v6307 = vrot.slane %v6220, 2
      %v6308 = vrot.slane %v6220, 4
      %v6309 = vrot.slane %v6220, 6
      %v6310 = vrot.slane %v6221, 2
      %v6311 = vrot.slane %v6221, 4
      %v6312 = vrot.slane %v6221, 6
      %v6313 = vrot.slane %v6222, 2
      %v6314 = vrot.slane %v6222, 4
      %v6315 = vrot.slane %v6222, 6
      %v6316 = vrot.slane %v6223, 2
      %v6317 = vrot.slane %v6223, 4
      %v6318 = vrot.slane %v6223, 6
      %v6319 = vrot.slane %v6224, 4
      %v6320 = vrot.slane %v6224, 6
      %v6321 = vrot.slane %v6225, 2
      %v6322 = vrot.slane %v6225, 4
      %v6323 = vrot.slane %v6225, 6
      %v6324 = vrot.slane %v6226, 2
      %v6325 = vrot.slane %v6226, 6
      %v6326 = vrot.slane %v6227, 2
      %v6327 = vrot.slane %v6227, 4
      %v6328 = vrot.slane %v6227, 6
      %v6329 = vrot.slane %v6228, 2
      %v6330 = vrot.slane %v6228, 4
      %v6331 = vrot.slane %v6229, 2
      %v6332 = vrot.slane %v6229, 4
      %v6333 = vrot.slane %v6229, 6
      %v6334 = vrot.slane %v6230, 2
      %v6335 = vrot.slane %v6230, 4
      %v6336 = vrot.slane %v6230, 6
      %v6337 = vrot.slane %v6231, 2
      %v6338 = vrot.slane %v6231, 4
      %v6339 = vrot.slane %v6231, 6
      %v6340 = vrot.slane %v6232, 2
      %v6341 = vrot.slane %v6232, 4
      %v6342 = vrot.slane %v6232, 6
      %v6343 = vrot.slane %v6233, 4
      %v6344 = vrot.slane %v6233, 6
      %v6345 = vrot.slane %v6234, 2
      %v6346 = vrot.slane %v6234, 4
      %v6347 = vrot.slane %v6234, 6
      %v6348 = vrot.slane %v6235, 2
      %v6349 = vrot.slane %v6235, 6
      %v6350 = vrot.slane %v6236, 2
      %v6351 = vrot.slane %v6236, 4
      %v6352 = vrot.slane %v6236, 6
      %v6353 = vrot.slane %v6237, 2
      %v6354 = vrot.slane %v6237, 4
      %v6355 = vrot.slane %v6238, 2
      %v6356 = vrot.slane %v6238, 4
      %v6357 = vrot.slane %v6238, 6
      %v6358 = vrot.slane %v6239, 2
      %v6359 = vrot.slane %v6239, 4
      %v6360 = vrot.slane %v6239, 6
      %v6361 = vrot.slane %v6240, 2
      %v6362 = vrot.slane %v6240, 4
      %v6363 = vrot.slane %v6240, 6
      %v6364 = vrot.slane %v6241, 2
      %v6365 = vrot.slane %v6241, 4
      %v6366 = vrot.slane %v6241, 6
      %v6367 = vrot.slane %v6242, 4
      %v6368 = vrot.slane %v6242, 6
      %v6369 = vrot.slane %v6243, 2
      %v6370 = vrot.slane %v6243, 4
      %v6371 = vrot.slane %v6243, 6
      %v6372 = vrot.slane %v6244, 2
      %v6373 = vrot.slane %v6244, 6
      %v6374 = vrot.slane %v6245, 2
      %v6375 = vrot.slane %v6245, 4
      %v6376 = vrot.slane %v6245, 6
      %v6377 = vrot.slane %v6246, 2
      %v6378 = vrot.slane %v6246, 4
      %6379 = vst [vmem:[#allocation1] ss:$4 sm:$0xff] %v6211
      %s6380 = scalar_lea.vmem [#allocation1], 1
      %6381 = vst [vmem:[%s6380] ss:$4 sm:$0xff] %v6283
      %s6382 = scalar_lea.vmem [#allocation1], 2
      %6383 = vst [vmem:[%s6382] ss:$4 sm:$0xff] %v6284
      %s6384 = scalar_lea.vmem [#allocation1], 3
      %6385 = vst [vmem:[%s6384] ss:$4 sm:$0xff] %v6285
      %s6386 = scalar_lea.vmem [#allocation1], 32
      %6387 = vst [vmem:[%s6386] ss:$4 sm:$0xff] %v6212
      %s6388 = scalar_lea.vmem [#allocation1], 33
      %6389 = vst [vmem:[%s6388] ss:$4 sm:$0xff] %v6286
      %s6390 = scalar_lea.vmem [#allocation1], 34
      %6391 = vst [vmem:[%s6390] ss:$4 sm:$0xff] %v6287
      %s6392 = scalar_lea.vmem [#allocation1], 35
      %6393 = vst [vmem:[%s6392] ss:$4 sm:$0xff] %v6288
      %v6394 = vld.sshfl [vmem:[#allocation1] sm:$0xff pattern:$0x73625140]
      %v6395 = vld.sshfl [vmem:[#allocation1 + $0x20] sm:$0xff pattern:$0x73625140]
      %6396 = vst [vmem:[#allocation1] ss:$4 sm:$0xff] %v6289
      %6397 = vst [vmem:[%s6380] ss:$4 sm:$0xff] %v6290
      %6398 = vst [vmem:[%s6382] ss:$4 sm:$0xff] %v6291
      %6399 = vst [vmem:[%s6384] ss:$4 sm:$0xff] %v6214
      %6400 = vst [vmem:[%s6386] ss:$4 sm:$0xff] %v6292
      %6401 = vst [vmem:[%s6388] ss:$4 sm:$0xff] %v6293
      %6402 = vst [vmem:[%s6390] ss:$4 sm:$0xff] %v6294
      %6403 = vst [vmem:[%s6392] ss:$4 sm:$0xff] %v6215
      %v6404 = vld.sshfl [vmem:[#allocation1] sm:$0xff pattern:$0x73625140]
      %v6405 = vld.sshfl [vmem:[#allocation1 + $0x20] sm:$0xff pattern:$0x73625140]
      %6406 = vst [vmem:[#allocation1] ss:$4 sm:$0xff] %v6295
      %6407 = vst [vmem:[%s6380] ss:$4 sm:$0xff] %v6296
      %6408 = vst [vmem:[%s6382] ss:$4 sm:$0xff] %v6216
      %6409 = vst [vmem:[%s6384] ss:$4 sm:$0xff] %v6297
      %6410 = vst [vmem:[%s6386] ss:$4 sm:$0xff] %v6298
      %6411 = vst [vmem:[%s6388] ss:$4 sm:$0xff] %v6299
      %6412 = vst [vmem:[%s6390] ss:$4 sm:$0xff] %v6217
      %6413 = vst [vmem:[%s6392] ss:$4 sm:$0xff] %v6300
      %v6414 = vld.sshfl [vmem:[#allocation1] sm:$0xff pattern:$0x73625140]
      %v6415 = vld.sshfl [vmem:[#allocation1 + $0x20] sm:$0xff pattern:$0x73625140]
      %6416 = vst [vmem:[#allocation1] ss:$4 sm:$0xff] %v6301
      %6417 = vst [vmem:[%s6380] ss:$4 sm:$0xff] %v6218
      %6418 = vst [vmem:[%s6382] ss:$4 sm:$0xff] %v6302
      %6419 = vst [vmem:[%s6384] ss:$4 sm:$0xff] %v6303
      %6420 = vst [vmem:[%s6386] ss:$4 sm:$0xff] %v6304
      %6421 = vst [vmem:[%s6388] ss:$4 sm:$0xff] %v6219
      %6422 = vst [vmem:[%s6390] ss:$4 sm:$0xff] %v6305
      %6423 = vst [vmem:[%s6392] ss:$4 sm:$0xff] %v6306
      %v6424 = vld.sshfl [vmem:[#allocation1] sm:$0xff pattern:$0x73625140]
      %v6425 = vld.sshfl [vmem:[#allocation1 + $0x20] sm:$0xff pattern:$0x73625140]
      %6426 = vst [vmem:[#allocation1] ss:$4 sm:$0xff] %v6220
      %6427 = vst [vmem:[%s6380] ss:$4 sm:$0xff] %v6307
      %6428 = vst [vmem:[%s6382] ss:$4 sm:$0xff] %v6308
      %6429 = vst [vmem:[%s6384] ss:$4 sm:$0xff] %v6309
      %6430 = vst [vmem:[%s6386] ss:$4 sm:$0xff] %v6221
      %6431 = vst [vmem:[%s6388] ss:$4 sm:$0xff] %v6310
      %6432 = vst [vmem:[%s6390] ss:$4 sm:$0xff] %v6311
      %6433 = vst [vmem:[%s6392] ss:$4 sm:$0xff] %v6312
      %v6434 = vld.sshfl [vmem:[#allocation1] sm:$0xff pattern:$0x73625140]
      %v6435 = vld.sshfl [vmem:[#allocation1 + $0x20] sm:$0xff pattern:$0x73625140]
      %6436 = vst [vmem:[#allocation1] ss:$4 sm:$0xff] %v6313
      %6437 = vst [vmem:[%s6380] ss:$4 sm:$0xff] %v6314
      %6438 = vst [vmem:[%s6382] ss:$4 sm:$0xff] %v6315
      %6439 = vst [vmem:[%s6384] ss:$4 sm:$0xff] %v6223
      %6440 = vst [vmem:[%s6386] ss:$4 sm:$0xff] %v6316
      %6441 = vst [vmem:[%s6388] ss:$4 sm:$0xff] %v6317
      %6442 = vst [vmem:[%s6390] ss:$4 sm:$0xff] %v6318
      %6443 = vst [vmem:[%s6392] ss:$4 sm:$0xff] %v6224
      %v6444 = vld.sshfl [vmem:[#allocation1] sm:$0xff pattern:$0x73625140]
      %v6445 = vld.sshfl [vmem:[#allocation1 + $0x20] sm:$0xff pattern:$0x73625140]
      %6446 = vst [vmem:[#allocation1] ss:$4 sm:$0xff] %v6319
      %6447 = vst [vmem:[%s6380] ss:$4 sm:$0xff] %v6320
      %6448 = vst [vmem:[%s6382] ss:$4 sm:$0xff] %v6225
      %6449 = vst [vmem:[%s6384] ss:$4 sm:$0xff] %v6321
      %6450 = vst [vmem:[%s6386] ss:$4 sm:$0xff] %v6322
      %6451 = vst [vmem:[%s6388] ss:$4 sm:$0xff] %v6323
      %6452 = vst [vmem:[%s6390] ss:$4 sm:$0xff] %v6226
      %6453 = vst [vmem:[%s6392] ss:$4 sm:$0xff] %v6324
      %v6454 = vld.sshfl [vmem:[#allocation1] sm:$0xff pattern:$0x73625140]
      %v6455 = vld.sshfl [vmem:[#allocation1 + $0x20] sm:$0xff pattern:$0x73625140]
      %6456 = vst [vmem:[#allocation1] ss:$4 sm:$0xff] %v6325
      %6457 = vst [vmem:[%s6380] ss:$4 sm:$0xff] %v6227
      %6458 = vst [vmem:[%s6382] ss:$4 sm:$0xff] %v6326
      %6459 = vst [vmem:[%s6384] ss:$4 sm:$0xff] %v6327
      %6460 = vst [vmem:[%s6386] ss:$4 sm:$0xff] %v6328
      %6461 = vst [vmem:[%s6388] ss:$4 sm:$0xff] %v6228
      %6462 = vst [vmem:[%s6390] ss:$4 sm:$0xff] %v6329
      %6463 = vst [vmem:[%s6392] ss:$4 sm:$0xff] %v6330
      %v6464 = vld.sshfl [vmem:[#allocation1] sm:$0xff pattern:$0x73625140]
      %v6465 = vld.sshfl [vmem:[#allocation1 + $0x20] sm:$0xff pattern:$0x73625140]
      %6466 = vst [vmem:[#allocation1] ss:$4 sm:$0xff] %v6229
      %6467 = vst [vmem:[%s6380] ss:$4 sm:$0xff] %v6331
      %6468 = vst [vmem:[%s6382] ss:$4 sm:$0xff] %v6332
      %6469 = vst [vmem:[%s6384] ss:$4 sm:$0xff] %v6333
      %6470 = vst [vmem:[%s6386] ss:$4 sm:$0xff] %v6230
      %6471 = vst [vmem:[%s6388] ss:$4 sm:$0xff] %v6334
      %6472 = vst [vmem:[%s6390] ss:$4 sm:$0xff] %v6335
      %6473 = vst [vmem:[%s6392] ss:$4 sm:$0xff] %v6336
      %v6474 = vld.sshfl [vmem:[#allocation1] sm:$0xff pattern:$0x73625140]
      %v6475 = vld.sshfl [vmem:[#allocation1 + $0x20] sm:$0xff pattern:$0x73625140]
      %6476 = vst [vmem:[#allocation1] ss:$4 sm:$0xff] %v6337
      %6477 = vst [vmem:[%s6380] ss:$4 sm:$0xff] %v6338
      %6478 = vst [vmem:[%s6382] ss:$4 sm:$0xff] %v6339
      %6479 = vst [vmem:[%s6384] ss:$4 sm:$0xff] %v6232
      %6480 = vst [vmem:[%s6386] ss:$4 sm:$0xff] %v6340
      %6481 = vst [vmem:[%s6388] ss:$4 sm:$0xff] %v6341
      %6482 = vst [vmem:[%s6390] ss:$4 sm:$0xff] %v6342
      %6483 = vst [vmem:[%s6392] ss:$4 sm:$0xff] %v6233
      %v6484 = vld.sshfl [vmem:[#allocation1] sm:$0xff pattern:$0x73625140]
      %v6485 = vld.sshfl [vmem:[#allocation1 + $0x20] sm:$0xff pattern:$0x73625140]
      %6486 = vst [vmem:[#allocation1] ss:$4 sm:$0xff] %v6343
      %6487 = vst [vmem:[%s6380] ss:$4 sm:$0xff] %v6344
      %6488 = vst [vmem:[%s6382] ss:$4 sm:$0xff] %v6234
      %6489 = vst [vmem:[%s6384] ss:$4 sm:$0xff] %v6345
      %6490 = vst [vmem:[%s6386] ss:$4 sm:$0xff] %v6346
      %6491 = vst [vmem:[%s6388] ss:$4 sm:$0xff] %v6347
      %6492 = vst [vmem:[%s6390] ss:$4 sm:$0xff] %v6235
      %6493 = vst [vmem:[%s6392] ss:$4 sm:$0xff] %v6348
      %v6494 = vld.sshfl [vmem:[#allocation1] sm:$0xff pattern:$0x73625140]
      %v6495 = vld.sshfl [vmem:[#allocation1 + $0x20] sm:$0xff pattern:$0x73625140]
      %6496 = vst [vmem:[#allocation1] ss:$4 sm:$0xff] %v6349
      %6497 = vst [vmem:[%s6380] ss:$4 sm:$0xff] %v6236
      %6498 = vst [vmem:[%s6382] ss:$4 sm:$0xff] %v6350
      %6499 = vst [vmem:[%s6384] ss:$4 sm:$0xff] %v6351
      %6500 = vst [vmem:[%s6386] ss:$4 sm:$0xff] %v6352
      %6501 = vst [vmem:[%s6388] ss:$4 sm:$0xff] %v6237
      %6502 = vst [vmem:[%s6390] ss:$4 sm:$0xff] %v6353
      %6503 = vst [vmem:[%s6392] ss:$4 sm:$0xff] %v6354
      %v6504 = vld.sshfl [vmem:[#allocation1] sm:$0xff pattern:$0x73625140]
      %v6505 = vld.sshfl [vmem:[#allocation1 + $0x20] sm:$0xff pattern:$0x73625140]
      %6506 = vst [vmem:[#allocation1] ss:$4 sm:$0xff] %v6238
      %6507 = vst [vmem:[%s6380] ss:$4 sm:$0xff] %v6355
      %6508 = vst [vmem:[%s6382] ss:$4 sm:$0xff] %v6356
      %6509 = vst [vmem:[%s6384] ss:$4 sm:$0xff] %v6357
      %6510 = vst [vmem:[%s6386] ss:$4 sm:$0xff] %v6239
      %6511 = vst [vmem:[%s6388] ss:$4 sm:$0xff] %v6358
      %6512 = vst [vmem:[%s6390] ss:$4 sm:$0xff] %v6359
      %6513 = vst [vmem:[%s6392] ss:$4 sm:$0xff] %v6360
      %v6514 = vld.sshfl [vmem:[#allocation1] sm:$0xff pattern:$0x73625140]
      %v6515 = vld.sshfl [vmem:[#allocation1 + $0x20] sm:$0xff pattern:$0x73625140]
      %6516 = vst [vmem:[#allocation1] ss:$4 sm:$0xff] %v6361
      %6517 = vst [vmem:[%s6380] ss:$4 sm:$0xff] %v6362
      %6518 = vst [vmem:[%s6382] ss:$4 sm:$0xff] %v6363
      %6519 = vst [vmem:[%s6384] ss:$4 sm:$0xff] %v6241
      %6520 = vst [vmem:[%s6386] ss:$4 sm:$0xff] %v6364
      %6521 = vst [vmem:[%s6388] ss:$4 sm:$0xff] %v6365
      %6522 = vst [vmem:[%s6390] ss:$4 sm:$0xff] %v6366
      %6523 = vst [vmem:[%s6392] ss:$4 sm:$0xff] %v6242
      %v6524 = vld.sshfl [vmem:[#allocation1] sm:$0xff pattern:$0x73625140]
      %v6525 = vld.sshfl [vmem:[#allocation1 + $0x20] sm:$0xff pattern:$0x73625140]
      %6526 = vst [vmem:[#allocation1] ss:$4 sm:$0xff] %v6367
      %6527 = vst [vmem:[%s6380] ss:$4 sm:$0xff] %v6368
      %6528 = vst [vmem:[%s6382] ss:$4 sm:$0xff] %v6243
      %6529 = vst [vmem:[%s6384] ss:$4 sm:$0xff] %v6369
      %6530 = vst [vmem:[%s6386] ss:$4 sm:$0xff] %v6370
      %6531 = vst [vmem:[%s6388] ss:$4 sm:$0xff] %v6371
      %6532 = vst [vmem:[%s6390] ss:$4 sm:$0xff] %v6244
      %6533 = vst [vmem:[%s6392] ss:$4 sm:$0xff] %v6372
      %v6534 = vld.sshfl [vmem:[#allocation1] sm:$0xff pattern:$0x73625140]
      %v6535 = vld.sshfl [vmem:[#allocation1 + $0x20] sm:$0xff pattern:$0x73625140]
      %6536 = vst [vmem:[#allocation1] ss:$4 sm:$0xff] %v6373
      %6537 = vst [vmem:[%s6380] ss:$4 sm:$0xff] %v6245
      %6538 = vst [vmem:[%s6382] ss:$4 sm:$0xff] %v6374
      %6539 = vst [vmem:[%s6384] ss:$4 sm:$0xff] %v6375
      %6540 = vst [vmem:[%s6386] ss:$4 sm:$0xff] %v6376
      %6541 = vst [vmem:[%s6388] ss:$4 sm:$0xff] %v6246
      %6542 = vst [vmem:[%s6390] ss:$4 sm:$0xff] %v6377
      %6543 = vst [vmem:[%s6392] ss:$4 sm:$0xff] %v6378
      %v6544 = vld.sshfl [vmem:[#allocation1] sm:$0xff pattern:$0x73625140]
      %v6545 = vld.sshfl [vmem:[#allocation1 + $0x20] sm:$0xff pattern:$0x73625140]
      %vm6578 = vcmask 15360
      %6579 = vst.msk [vmem:[%s332] sm:$0xff] %vm6578, %v6394
      %6580 = vst.msk [vmem:[%s332 + $0x8] sm:$0xff] %vm6578, %v6395
      %6581 = vst.msk [vmem:[%s332 + $0x10] sm:$0xff] %vm6578, %v6404
      %6582 = vst.msk [vmem:[%s332 + $0x18] sm:$0xff] %vm6578, %v6405
      %6583 = vst.msk [vmem:[%s332 + $0x20] sm:$0xff] %vm6578, %v6414
      %6584 = vst.msk [vmem:[%s332 + $0x28] sm:$0xff] %vm6578, %v6415
      %6585 = vst.msk [vmem:[%s332 + $0x30] sm:$0xff] %vm6578, %v6424
      %6586 = vst.msk [vmem:[%s332 + $0x38] sm:$0xff] %vm6578, %v6425
      %6587 = vst.msk [vmem:[%s332 + $0x40] sm:$0xff] %vm6578, %v6434
      %6588 = vst.msk [vmem:[%s332 + $0x48] sm:$0xff] %vm6578, %v6435
      %6589 = vst.msk [vmem:[%s332 + $0x50] sm:$0xff] %vm6578, %v6444
      %6590 = vst.msk [vmem:[%s332 + $0x58] sm:$0xff] %vm6578, %v6445
      %6591 = vst.msk [vmem:[%s332 + $0x60] sm:$0xff] %vm6578, %v6454
      %6592 = vst.msk [vmem:[%s332 + $0x68] sm:$0xff] %vm6578, %v6455
      %6593 = vst.msk [vmem:[%s332 + $0x70] sm:$0xff] %vm6578, %v6464
      %6594 = vst.msk [vmem:[%s332 + $0x78] sm:$0xff] %vm6578, %v6465
      %6595 = vst.msk [vmem:[%s332 + $0x80] sm:$0xff] %vm6578, %v6474
      %6596 = vst.msk [vmem:[%s332 + $0x88] sm:$0xff] %vm6578, %v6475
      %6597 = vst.msk [vmem:[%s332 + $0x90] sm:$0xff] %vm6578, %v6484
      %6598 = vst.msk [vmem:[%s332 + $0x98] sm:$0xff] %vm6578, %v6485
      %6599 = vst.msk [vmem:[%s332 + $0xa0] sm:$0xff] %vm6578, %v6494
      %6600 = vst.msk [vmem:[%s332 + $0xa8] sm:$0xff] %vm6578, %v6495
      %6601 = vst.msk [vmem:[%s332 + $0xb0] sm:$0xff] %vm6578, %v6504
      %6602 = vst.msk [vmem:[%s332 + $0xb8] sm:$0xff] %vm6578, %v6505
      %6603 = vst.msk [vmem:[%s332 + $0xc0] sm:$0xff] %vm6578, %v6514
      %6604 = vst.msk [vmem:[%s332 + $0xc8] sm:$0xff] %vm6578, %v6515
      %6605 = vst.msk [vmem:[%s332 + $0xd0] sm:$0xff] %vm6578, %v6524
      %6606 = vst.msk [vmem:[%s332 + $0xd8] sm:$0xff] %vm6578, %v6525
      %6607 = vst.msk [vmem:[%s332 + $0xe0] sm:$0xff] %vm6578, %v6534
      %6608 = vst.msk [vmem:[%s332 + $0xe8] sm:$0xff] %vm6578, %v6535
      %6609 = vst.msk [vmem:[%s332 + $0xf0] sm:$0xff] %vm6578, %v6544
      %6610 = vst.msk [vmem:[%s332 + $0xf8] sm:$0xff] %vm6578, %v6545
      %p6611 = scmp.lt.s32.totalorder %s20, 1
      %s6612 = scalar_select %p6611, %s20, 1
      %s6613 = smul.addr %s6612, 32
      %s6614 = smul.addr %s6613, 8
      %s6615 = scalar_lea.vmem %s9, %s6614
      // Predicated region
      $region57: #{tpu_custom_call.1} parent=55 // pred_check
        %p6616 = pneg %p232
      $region58: #{tpu_custom_call.1} parent=55 // pred_check_branch
        %6618 = sbr.rel (%p6616) target = $region60
      $region59: #{tpu_custom_call.1} parent=55 // pred_region
        _
      $region60: #{tpu_custom_call.1} parent=55 // pred_fallthru
        _
    $region56: #{tpu_custom_call.1} parent=5 // pred_fallthru
      _
    %p6619 = scmp.le.s32.totalorder 2, %s15
    // Predicated region
    $region61: #{tpu_custom_call.1} parent=5 // pred_check
      %p6620 = pneg %p6619
    $region62: #{tpu_custom_call.1} parent=5 // pred_check_branch
      %6622 = sbr.rel (%p6620) target = $region64
    $region63: #{tpu_custom_call.1} parent=5 // pred_region
      %s6623 = ssub.s32 %s15, 2
      // Predicated region
      $region65: #{tpu_custom_call.1} parent=63 // pred_check
        %p6624 = pneg %p238
      $region66: #{tpu_custom_call.1} parent=63 // pred_check_branch
        %6626 = sbr.rel (%p6624) target = $region68
      $region67: #{tpu_custom_call.1} parent=63 // pred_region
        %p6627 = scmp.lt.s32.totalorder %s21, 1
        %s6628 = scalar_select %p6627, %s21, 1
        %s6629 = smul.addr %s6628, 32
        %s6630 = smul.addr %s6629, 8
        %s6631 = scalar_lea.vmem %s9, %s6630
      $region68: #{tpu_custom_call.1} parent=63 // pred_fallthru
        _
    $region64: #{tpu_custom_call.1} parent=5 // pred_fallthru
      _
  $region6: #{tpu_custom_call.1} parent=0 // loop_footer
    %s19 = sadd.s32 1, %s15
  $region7: #{tpu_custom_call.1} parent=0 // loop_footer_branch
    %14 = sbr.rel target = $region3
  $region8: #{tpu_custom_call.1} parent=0 // loop_exit
    _

</llo_original>
